<compile_context>
chip_gen: v6e
topology: v6e:2x2x1
jax: 0.10.0
libtpu: 0.0.40
codegen_flags: <defaults>
</compile_context>

<pallas_src>
import functools

import jax
import jax.numpy as jnp
from jax.experimental import pallas as pl
from jax.experimental.pallas import tpu as pltpu


# ----------------------------------------------------------------------------
# helpers
# ----------------------------------------------------------------------------
def _round_up(x, m):
    return ((x + m - 1) // m) * m


def _hw_max_tile():
    """Lane-tile cap for the pooling kernel.

    v5e's 16 MiB scoped-VMEM default only fits ~512-lane f32 blocks at
    Cin~2048 once double-buffering is counted; v6e/v7x (32 MiB scoped
    default) can take 1024.  Both values are multiples of 128.
    """
    try:
        kind = jax.devices()[0].device_kind.lower()
    except Exception:
        return 512
    if any(v in kind for v in ("v2", "v3", "v4", "v5")):
        return 512
    return 1024


# ----------------------------------------------------------------------------
# Kernel 1: input_proj (1x1 conv) fused with spatial mean, NCHW read, sum-first
# ----------------------------------------------------------------------------
def _input_proj_mean_kernel(x_ref, w_ref, b_ref, out_ref, acc_ref, *, hw, tile_hw):
    # grid = (B, HW_tiles).  acc_ref is a (Cin, 1) VMEM accumulator that lives
    # across the "arbitrary" HW axis; the output block (1, hidden, 1) is only
    # written in the finalize step.
    t = pl.program_id(1)

    @pl.when(t == 0)
    def _init():
        acc_ref[...] = jnp.zeros_like(acc_ref)

    x = x_ref[0]                                              # (Cin, TILE_HW) f32
    if hw % tile_hw != 0:
        # Mask the ragged tail lanes of the final tile (OOB lanes hold stale
        # VMEM data); jnp.where never propagates NaN from the unselected arm.
        lane = jax.lax.broadcasted_iota(jnp.int32, x.shape, 1)
        x = jnp.where(lane < (hw - t * tile_hw), x, 0.0)
    acc_ref[...] += jnp.sum(x, axis=1, keepdims=True)         # (Cin, 1)

    @pl.when(t == pl.num_programs(1) - 1)
    def _finalize():
        # mean(conv1x1(x)) == (mean_hw(x)) @ W + b  (conv is linear in x).
        mean_col = (acc_ref[...] * (1.0 / hw)).astype(jnp.bfloat16)   # (Cin, 1)
        proj = jnp.dot(w_ref[...], mean_col,
                       preferred_element_type=jnp.float32)            # (hidden, 1)
        out_ref[...] = (proj + b_ref[...])[None]                       # (1, hidden, 1)


def pallas_input_proj_mean(src_nchw, w_hc_bf16, bias_col):
    """src_nchw: (B, Cin, H, W) f32; w_hc_bf16: (hidden, Cin) bf16;
    bias_col: (hidden, 1) f32.  Returns the spatial mean of the 1x1-conv
    projection: (B, hidden) f32."""
    b, cin, h, w = src_nchw.shape
    hw = h * w
    hidden = w_hc_bf16.shape[0]

    x = src_nchw.reshape(b, cin, hw)      # layout-preserving view, no transpose
    max_tile = _hw_max_tile()
    tile_hw = hw if hw <= max_tile else max_tile
    n_t = pl.cdiv(hw, tile_hw)

    kernel = functools.partial(_input_proj_mean_kernel, hw=hw, tile_hw=tile_hw)
    pooled = pl.pallas_call(
        kernel,
        grid=(b, n_t),
        out_shape=jax.ShapeDtypeStruct((b, hidden, 1), jnp.float32),
        in_specs=[
            pl.BlockSpec((1, cin, tile_hw), lambda bi, ti: (bi, 0, ti)),
            pl.BlockSpec((hidden, cin), lambda bi, ti: (0, 0)),
            pl.BlockSpec((hidden, 1), lambda bi, ti: (0, 0)),
        ],
        out_specs=pl.BlockSpec((1, hidden, 1), lambda bi, ti: (bi, 0, 0)),
        scratch_shapes=[pltpu.VMEM((cin, 1), jnp.float32)],
        compiler_params=pltpu.CompilerParams(
            dimension_semantics=("parallel", "arbitrary")),
    )(x, w_hc_bf16, bias_col)
    return pooled.reshape(b, hidden)


# ----------------------------------------------------------------------------
# Kernel 2: fused heads (tanh stand-in + fused first/final matmuls, lane-dense)
# ----------------------------------------------------------------------------
def _fused_heads_kernel(*refs, n_mlp3):
    q_ref, mem_ref, w1_ref, b1_ref = refs[:4]
    w2b2 = refs[4:4 + 2 * n_mlp3]
    wf_ref, bias_ref, sig_ref, o_ref = refs[4 + 2 * n_mlp3:]
    hidden = q_ref.shape[1]

    # Transformer stand-in fused in-kernel (EUP tanh is otherwise idle here).
    x = jnp.tanh(q_ref[...] + mem_ref[0])                     # (TILE_Q, hidden) f32
    xb = x.astype(jnp.bfloat16)

    # One wide matmul for every MLP head's first layer, static per-head slices.
    h1 = jnp.dot(xb, w1_ref[...], preferred_element_type=jnp.float32)
    h1 = jnp.maximum(h1 + b1_ref[...], 0.0)

    parts = [xb]
    for j in range(n_mlp3):
        w2_ref, b2_ref = w2b2[2 * j], w2b2[2 * j + 1]
        hj = h1[:, j * hidden:(j + 1) * hidden].astype(jnp.bfloat16)
        h2 = jnp.dot(hj, w2_ref[...], preferred_element_type=jnp.float32)
        h2 = jnp.maximum(h2 + b2_ref[...], 0.0)
        parts.append(h2.astype(jnp.bfloat16))

    # Single final matmul for ALL heads: accumulation stays inside the MXU.
    cat = jnp.concatenate(parts, axis=1)                      # (TILE_Q, (1+n)*hidden)
    y = jnp.dot(cat, wf_ref[...], preferred_element_type=jnp.float32) + bias_ref[...]
    y = jnp.where(sig_ref[...] > 0.0, jax.nn.sigmoid(y), y)
    o_ref[...] = y[None]


def pallas_fused_heads(query_embed, mem, packed):
    """query_embed: (Q, hidden) f32; mem: (B, hidden) f32.
    Returns the (B, Q, padded_out) f32 head-output slab."""
    meta = packed["meta"]
    q, hidden = query_embed.shape
    b = mem.shape[0]
    padded_out = meta["padded_out"]
    n_mlp3 = meta["n_mlp3"]

    tile_q = q if q <= 512 else 512
    nqt = pl.cdiv(q, tile_q)
    mem3 = mem.reshape(b, 1, hidden)       # free reshape -> clean (1,1,hidden) blocks

    args = [query_embed, mem3, packed["w1_cat"], packed["b1_cat"]]
    in_specs = [
        pl.BlockSpec((tile_q, hidden), lambda bi, qi: (qi, 0)),
        pl.BlockSpec((1, 1, hidden), lambda bi, qi: (bi, 0, 0)),
        pl.BlockSpec(packed["w1_cat"].shape, lambda bi, qi: (0, 0)),
        pl.BlockSpec(packed["b1_cat"].shape, lambda bi, qi: (0, 0)),
    ]
    for w2, b2 in packed["w2b2"]:
        args += [w2, b2]
        in_specs += [pl.BlockSpec(w2.shape, lambda bi, qi: (0, 0)),
                     pl.BlockSpec(b2.shape, lambda bi, qi: (0, 0))]
    args += [packed["wf_cat"], packed["bias"], packed["sig_mask"]]
    in_specs += [pl.BlockSpec(packed["wf_cat"].shape, lambda bi, qi: (0, 0)),
                 pl.BlockSpec(packed["bias"].shape, lambda bi, qi: (0, 0)),
                 pl.BlockSpec(packed["sig_mask"].shape, lambda bi, qi: (0, 0))]

    slab = pl.pallas_call(
        functools.partial(_fused_heads_kernel, n_mlp3=n_mlp3),
        grid=(b, nqt),
        out_shape=jax.ShapeDtypeStruct((b, q, padded_out), jnp.float32),
        in_specs=in_specs,
        out_specs=pl.BlockSpec((1, tile_q, padded_out), lambda bi, qi: (bi, qi, 0)),
        compiler_params=pltpu.CompilerParams(
            dimension_semantics=("parallel", "parallel")),
    )(*args)
    return slab


def _split_heads(slab, meta):
    return {name: slab[:, :, off:off + d]
            for name, off, d in zip(meta["names"], meta["offsets"], meta["douts"])}


# ----------------------------------------------------------------------------
# Parameter construction & packing (transpose / bf16-cast / zero-place ONCE)
# ----------------------------------------------------------------------------
def _linear_init(key, din, dout):
    k1, k2 = jax.random.split(key)
    bound = 1.0 / jnp.sqrt(din)
    w = jax.random.uniform(k1, (dout, din), jnp.float32, -bound, bound)
    b = jax.random.uniform(k2, (dout,), jnp.float32, -bound, bound)
    return w, b


def _mlp_init(key, din, dhid, dout, num_layers):
    dims_in = [din] + [dhid] * (num_layers - 1)
    dims_out = [dhid] * (num_layers - 1) + [dout]
    keys = jax.random.split(key, num_layers)
    return [_linear_init(k, n, m) for k, n, m in zip(keys, dims_in, dims_out)]


def _pack_fused_heads(head_defs, hidden):
    """head_defs: list of (name, kind, params, apply_sigmoid); torch layouts.

    Builds: W1_cat (hidden, n*hidden), per-head (W2, b2), WF_cat
    ((1+n)*hidden, padded_out) with zero-placed final weights, bias row and
    sigmoid column mask, all sized to a lane-dense (128-multiple) output."""
    douts = [p[0].shape[0] if kind == "linear" else p[-1][0].shape[0]
             for _, kind, p, _ in head_defs]
    offsets, off = [], 0
    for d in douts:
        offsets.append(off)
        off += d
    padded = max(128, _round_up(off, 128))

    n_mlp3 = sum(1 for _, kind, _, _ in head_defs if kind == "mlp3")
    assert n_mlp3 >= 1

    w1_cat = jnp.zeros((hidden, n_mlp3 * hidden), jnp.float32)
    b1_cat = jnp.zeros((1, n_mlp3 * hidden), jnp.float32)
    wf_cat = jnp.zeros(((1 + n_mlp3) * hidden, padded), jnp.float32)
    bias = jnp.zeros((1, padded), jnp.float32)
    sig = jnp.zeros((1, padded), jnp.float32)
    w2b2, names = [], []

    j = 0
    for (name, kind, p, use_sig), o, d in zip(head_defs, offsets, douts):
        names.append(name)
        if use_sig:
            sig = sig.at[0, o:o + d].set(1.0)
        if kind == "linear":
            w, bv = p
            wf_cat = wf_cat.at[:hidden, o:o + d].set(w.T)
            bias = bias.at[0, o:o + d].set(bv)
        else:  # mlp3: relu(linear), relu(linear), linear
            (w1, b1), (w2, b2), (w3, b3) = p
            w1_cat = w1_cat.at[:, j * hidden:(j + 1) * hidden].set(w1.T)
            b1_cat = b1_cat.at[0, j * hidden:(j + 1) * hidden].set(b1)
            w2b2.append((w2.T.astype(jnp.bfloat16),
                         b2.reshape(1, -1).astype(jnp.float32)))
            wf_cat = wf_cat.at[(1 + j) * hidden:(2 + j) * hidden, o:o + d].set(w3.T)
            bias = bias.at[0, o:o + d].set(b3)
            j += 1

    meta = dict(names=tuple(names), offsets=tuple(offsets), douts=tuple(douts),
                padded_out=padded, n_mlp3=n_mlp3)
    return {"w1_cat": w1_cat.astype(jnp.bfloat16), "b1_cat": b1_cat,
            "w2b2": tuple(w2b2), "wf_cat": wf_cat.astype(jnp.bfloat16),
            "bias": bias, "sig_mask": sig, "meta": meta}


def make_asnet_hoia_params(key, *, backbone_channels, hidden_dim, num_queries,
                           rel_num_queries, num_obj_classes, num_rel_classes,
                           id_emb_dim):
    ks = jax.random.split(key, 10)
    rel_det_class = _linear_init(ks[0], hidden_dim, num_obj_classes + 1)
    rel_det_bbox = _mlp_init(ks[1], hidden_dim, hidden_dim, 4, 3)
    query_embed = jax.random.normal(ks[2], (num_queries, hidden_dim), jnp.float32)
    rel_query_embed = jax.random.normal(ks[3], (rel_num_queries, hidden_dim),
                                        jnp.float32)
    rel_bbox = _mlp_init(ks[4], hidden_dim, hidden_dim, 4, 3)
    rel_class = _linear_init(ks[5], hidden_dim, num_rel_classes)
    kw, kb = jax.random.split(ks[6])
    bound = 1.0 / jnp.sqrt(backbone_channels)
    conv_w = jax.random.uniform(kw, (hidden_dim, backbone_channels, 1, 1),
                                jnp.float32, -bound, bound)
    conv_b = jax.random.uniform(kb, (hidden_dim,), jnp.float32, -bound, bound)
    rel_id = _mlp_init(ks[7], hidden_dim, hidden_dim, id_emb_dim, 3)
    rel_src = _mlp_init(ks[8], hidden_dim, hidden_dim, id_emb_dim, 3)
    rel_dst = _mlp_init(ks[9], hidden_dim, hidden_dim, id_emb_dim, 3)

    hs_defs = [("class", "linear", rel_det_class, False),
               ("bbox", "mlp3", rel_det_bbox, True),
               ("id", "mlp3", rel_id, False)]
    rel_defs = [("class", "linear", rel_class, False),
                ("bbox", "mlp3", rel_bbox, True),
                ("src", "mlp3", rel_src, False),
                ("dst", "mlp3", rel_dst, False)]

    params = {
        "query_embed": query_embed,
        "rel_query_embed": rel_query_embed,
        # input_proj: (hidden, Cin) bf16 weight (conv layout, no transpose),
        # (hidden, 1) f32 bias column.
        "input_proj_w": conv_w.reshape(hidden_dim, backbone_channels)
                              .astype(jnp.bfloat16),
        "input_proj_b": conv_b.reshape(hidden_dim, 1),
        "hs_heads": _pack_fused_heads(hs_defs, hidden_dim),
        "rel_heads": _pack_fused_heads(rel_defs, hidden_dim),
    }
    raw = {"query_embed": query_embed, "rel_query_embed": rel_query_embed,
           "conv_w": conv_w, "conv_b": conv_b,
           "rel_det_class": rel_det_class, "rel_det_bbox": rel_det_bbox,
           "rel_class": rel_class, "rel_bbox": rel_bbox,
           "rel_id": rel_id, "rel_src": rel_src, "rel_dst": rel_dst}
    return params, raw


# ----------------------------------------------------------------------------
# Forward pass (mirrors ASNet_HOIA.forward)
# ----------------------------------------------------------------------------
def asnet_hoia_forward(params, src_nchw):
    """src_nchw plays the role of features[-1] from the backbone (NCHW)."""
    # TODO(synk): backbone and transformer are external submodules with no clean
    # Pallas equivalent; the transformer is a deterministic stand-in that
    # consumes only the pooled mean of the projected feature map -- the
    # tanh(query_embed + mem) step is fused into the heads kernel below.
    mem = pallas_input_proj_mean(src_nchw, params["input_proj_w"],
                                 params["input_proj_b"])          # (B, hidden)

    hs_slab = pallas_fused_heads(params["query_embed"], mem, params["hs_heads"])
    rel_slab = pallas_fused_heads(params["rel_query_embed"], mem,
                                  params["rel_heads"])

    det = _split_heads(hs_slab, params["hs_heads"]["meta"])
    rel = _split_heads(rel_slab, params["rel_heads"]["meta"])

    out = {"pred_logits": det["class"],
           "pred_boxes": det["bbox"],
           "id_emb": det["id"]}
    rel_out = {"pred_logits": rel["class"],
               "pred_boxes": rel["bbox"],
               "src_emb": rel["src"],
               "dst_emb": rel["dst"]}
    return {"pred_det": out, "pred_rel": rel_out}


# ----------------------------------------------------------------------------
# Pure-JAX f32 reference (same math, no Pallas, no bf16) for correctness checks
# ----------------------------------------------------------------------------
def reference_forward(raw, src):
    b, cin, h, w = src.shape
    hidden = raw["conv_w"].shape[0]
    w2d = raw["conv_w"].reshape(hidden, cin)
    proj = jnp.einsum("bchw,oc->bohw", src, w2d) + raw["conv_b"][None, :, None, None]
    mem = proj.mean(axis=(2, 3))                                   # (B, hidden)
    hs = jnp.tanh(raw["query_embed"][None] + mem[:, None, :])
    rel_hs = jnp.tanh(raw["rel_query_embed"][None] + mem[:, None, :])

    def linear(x, p):
        wt, bt = p
        return x @ wt.T + bt

    def mlp3(x, layers):
        for i, (wt, bt) in enumerate(layers):
            x = x @ wt.T + bt
            if i < len(layers) - 1:
                x = jax.nn.relu(x)
        return x

    det = {"pred_logits": linear(hs, raw["rel_det_class"]),
           "pred_boxes": jax.nn.sigmoid(mlp3(hs, raw["rel_det_bbox"])),
           "id_emb": mlp3(hs, raw["rel_id"])}
    rel = {"pred_logits": linear(rel_hs, raw["rel_class"]),
           "pred_boxes": jax.nn.sigmoid(mlp3(rel_hs, raw["rel_bbox"])),
           "src_emb": mlp3(rel_hs, raw["rel_src"]),
           "dst_emb": mlp3(rel_hs, raw["rel_dst"])}
    return {"pred_det": det, "pred_rel": rel}


# ----------------------------------------------------------------------------
if __name__ == "__main__":
    # Small shapes; HW chosen so kernel 1 gets >1 reduction step AND a ragged
    # tail tile (mask path exercised); hidden=128 keeps head fusion lane-aligned.
    B, C_BACKBONE, H, W = 2, 4, 40, 40
    HIDDEN = 128
    NUM_QUERIES, REL_NUM_QUERIES = 8, 4
    NUM_OBJ, NUM_REL, ID_EMB = 10, 6, 8

    key = jax.random.PRNGKey(0)
    k_param, k_src = jax.random.split(key)

    params, raw = make_asnet_hoia_params(
        k_param,
        backbone_channels=C_BACKBONE,
        hidden_dim=HIDDEN,
        num_queries=NUM_QUERIES,
        rel_num_queries=REL_NUM_QUERIES,
        num_obj_classes=NUM_OBJ,
        num_rel_classes=NUM_REL,
        id_emb_dim=ID_EMB,
    )

    # Stand-in for features[-1] from the backbone (NCHW).
    src = jax.random.normal(k_src, (B, C_BACKBONE, H, W), jnp.float32)

    fwd = jax.jit(lambda s: asnet_hoia_forward(params, s))
    output = jax.block_until_ready(fwd(src))
    ref = jax.block_until_ready(reference_forward(raw, src))

    # Shape + range sanity checks.
    assert output["pred_det"]["pred_logits"].shape == (B, NUM_QUERIES, NUM_OBJ + 1)
    assert output["pred_det"]["pred_boxes"].shape == (B, NUM_QUERIES, 4)
    assert output["pred_det"]["id_emb"].shape == (B, NUM_QUERIES, ID_EMB)
    assert output["pred_rel"]["pred_logits"].shape == (B, REL_NUM_QUERIES, NUM_REL)
    assert output["pred_rel"]["pred_boxes"].shape == (B, REL_NUM_QUERIES, 4)
    assert output["pred_rel"]["src_emb"].shape == (B, REL_NUM_QUERIES, ID_EMB)
    assert output["pred_rel"]["dst_emb"].shape == (B, REL_NUM_QUERIES, ID_EMB)
    boxes = output["pred_det"]["pred_boxes"]
    assert bool(jnp.all((boxes >= 0.0) & (boxes <= 1.0)))

    # Numerical check against the pure f32 reference (bf16 weights -> loose tol).
    out_leaves, out_tree = jax.tree_util.tree_flatten(output)
    ref_leaves, ref_tree = jax.tree_util.tree_flatten(ref)
    assert out_tree == ref_tree
    for o, r in zip(out_leaves, ref_leaves):
        assert o.shape == r.shape
        assert bool(jnp.all(jnp.isfinite(o)))
        err = float(jnp.max(jnp.abs(o - r)))
        assert err < 5e-2, f"max abs err {err}"

    print("KERNEL_OK")
</pallas_src>

<mosaic_0001>
module attributes {stable_mosaic.version = 11 : i64} {
  func.func @_fused_heads_kernel(%arg0: i32, %arg1: i32, %arg2: memref<4x128xf32, #tpu.memory_space<vmem>>, %arg3: memref<1x1x128xf32, #tpu.memory_space<vmem>>, %arg4: memref<128x384xbf16, #tpu.memory_space<vmem>>, %arg5: memref<1x384xf32, #tpu.memory_space<vmem>>, %arg6: memref<128x128xbf16, #tpu.memory_space<vmem>>, %arg7: memref<1x128xf32, #tpu.memory_space<vmem>>, %arg8: memref<128x128xbf16, #tpu.memory_space<vmem>>, %arg9: memref<1x128xf32, #tpu.memory_space<vmem>>, %arg10: memref<128x128xbf16, #tpu.memory_space<vmem>>, %arg11: memref<1x128xf32, #tpu.memory_space<vmem>>, %arg12: memref<512x128xbf16, #tpu.memory_space<vmem>>, %arg13: memref<1x128xf32, #tpu.memory_space<vmem>>, %arg14: memref<1x128xf32, #tpu.memory_space<vmem>>, %arg15: memref<1x4x128xf32, #tpu.memory_space<vmem>>) attributes {dimension_semantics = [#tpu.dimension_semantics<parallel>, #tpu.dimension_semantics<parallel>], iteration_bounds = array<i64: 2, 1>, scalar_prefetch = 0 : i64, scratch_operands = 0 : i64, tpu.core_type = #tpu.core_type<tc>, window_params = [{transform_indices = @transform_0, window_bounds = array<i64: 4, 128>}, {transform_indices = @transform_1, window_bounds = array<i64: 1, 1, 128>}, {pipeline_mode = #tpu.pipeline_mode<synchronous>, transform_indices = @transform_2, window_bounds = array<i64: 128, 384>}, {pipeline_mode = #tpu.pipeline_mode<synchronous>, transform_indices = @transform_3, window_bounds = array<i64: 1, 384>}, {pipeline_mode = #tpu.pipeline_mode<synchronous>, transform_indices = @transform_4, window_bounds = array<i64: 128, 128>}, {pipeline_mode = #tpu.pipeline_mode<synchronous>, transform_indices = @transform_5, window_bounds = array<i64: 1, 128>}, {pipeline_mode = #tpu.pipeline_mode<synchronous>, transform_indices = @transform_6, window_bounds = array<i64: 128, 128>}, {pipeline_mode = #tpu.pipeline_mode<synchronous>, transform_indices = @transform_7, window_bounds = array<i64: 1, 128>}, {pipeline_mode = #tpu.pipeline_mode<synchronous>, transform_indices = @transform_8, window_bounds = array<i64: 128, 128>}, {pipeline_mode = #tpu.pipeline_mode<synchronous>, transform_indices = @transform_9, window_bounds = array<i64: 1, 128>}, {pipeline_mode = #tpu.pipeline_mode<synchronous>, transform_indices = @transform_10, window_bounds = array<i64: 512, 128>}, {pipeline_mode = #tpu.pipeline_mode<synchronous>, transform_indices = @transform_11, window_bounds = array<i64: 1, 128>}, {pipeline_mode = #tpu.pipeline_mode<synchronous>, transform_indices = @transform_12, window_bounds = array<i64: 1, 128>}, {transform_indices = @transform_13, window_bounds = array<i64: 1, 4, 128>}]} {
    %c0 = arith.constant 0 : index
    %c0_0 = arith.constant 0 : index
    %0 = vector.load %arg2[%c0, %c0_0] : memref<4x128xf32, #tpu.memory_space<vmem>>, vector<4x128xf32>
    %c0_1 = arith.constant 0 : index
    %c0_2 = arith.constant 0 : index
    %c0_3 = arith.constant 0 : index
    %1 = vector.load %arg3[%c0_1, %c0_2, %c0_3] : memref<1x1x128xf32, #tpu.memory_space<vmem>>, vector<1x1x128xf32>
    %2 = vector.shape_cast %1 : vector<1x1x128xf32> to vector<1x128xf32>
    %3 = vector.broadcast %2 : vector<1x128xf32> to vector<4x128xf32>
    %4 = arith.addf %0, %3 : vector<4x128xf32>
    %5 = math.tanh %4 : vector<4x128xf32>
    %6 = arith.truncf %5 : vector<4x128xf32> to vector<4x128xbf16>
    %c0_4 = arith.constant 0 : index
    %c0_5 = arith.constant 0 : index
    %7 = vector.load %arg4[%c0_4, %c0_5] : memref<128x384xbf16, #tpu.memory_space<vmem>>, vector<128x384xbf16>
    %cst = arith.constant dense<0.000000e+00> : vector<4x384xf32>
    %8 = tpu.matmul %6, %7, %cst {dimension_numbers = #tpu.dot_dimension_numbers<[1], [0], [0], [1], [0, 0, 1, 1], [], []>} : vector<4x128xbf16>, vector<128x384xbf16>, vector<4x384xf32> -> vector<4x384xf32>
    %c0_6 = arith.constant 0 : index
    %c0_7 = arith.constant 0 : index
    %9 = vector.load %arg5[%c0_6, %c0_7] : memref<1x384xf32, #tpu.memory_space<vmem>>, vector<1x384xf32>
    %10 = vector.broadcast %9 : vector<1x384xf32> to vector<4x384xf32>
    %11 = arith.addf %8, %10 : vector<4x384xf32>
    %cst_8 = arith.constant 0.000000e+00 : f32
    %12 = vector.broadcast %cst_8 : f32 to vector<4x384xf32>
    %13 = arith.maximumf %11, %12 : vector<4x384xf32>
    %14 = vector.extract_strided_slice %13 {offsets = [0, 0], sizes = [4, 128], strides = [1, 1]} : vector<4x384xf32> to vector<4x128xf32>
    %15 = arith.truncf %14 : vector<4x128xf32> to vector<4x128xbf16>
    %c0_9 = arith.constant 0 : index
    %c0_10 = arith.constant 0 : index
    %16 = vector.load %arg6[%c0_9, %c0_10] : memref<128x128xbf16, #tpu.memory_space<vmem>>, vector<128x128xbf16>
    %cst_11 = arith.constant dense<0.000000e+00> : vector<4x128xf32>
    %17 = tpu.matmul %15, %16, %cst_11 {dimension_numbers = #tpu.dot_dimension_numbers<[1], [0], [0], [1], [0, 0, 1, 1], [], []>} : vector<4x128xbf16>, vector<128x128xbf16>, vector<4x128xf32> -> vector<4x128xf32>
    %c0_12 = arith.constant 0 : index
    %c0_13 = arith.constant 0 : index
    %18 = vector.load %arg7[%c0_12, %c0_13] : memref<1x128xf32, #tpu.memory_space<vmem>>, vector<1x128xf32>
    %19 = vector.broadcast %18 : vector<1x128xf32> to vector<4x128xf32>
    %20 = arith.addf %17, %19 : vector<4x128xf32>
    %cst_14 = arith.constant 0.000000e+00 : f32
    %21 = vector.broadcast %cst_14 : f32 to vector<4x128xf32>
    %22 = arith.maximumf %20, %21 : vector<4x128xf32>
    %23 = arith.truncf %22 : vector<4x128xf32> to vector<4x128xbf16>
    %24 = vector.extract_strided_slice %13 {offsets = [0, 128], sizes = [4, 128], strides = [1, 1]} : vector<4x384xf32> to vector<4x128xf32>
    %25 = arith.truncf %24 : vector<4x128xf32> to vector<4x128xbf16>
    %c0_15 = arith.constant 0 : index
    %c0_16 = arith.constant 0 : index
    %26 = vector.load %arg8[%c0_15, %c0_16] : memref<128x128xbf16, #tpu.memory_space<vmem>>, vector<128x128xbf16>
    %cst_17 = arith.constant dense<0.000000e+00> : vector<4x128xf32>
    %27 = tpu.matmul %25, %26, %cst_17 {dimension_numbers = #tpu.dot_dimension_numbers<[1], [0], [0], [1], [0, 0, 1, 1], [], []>} : vector<4x128xbf16>, vector<128x128xbf16>, vector<4x128xf32> -> vector<4x128xf32>
    %c0_18 = arith.constant 0 : index
    %c0_19 = arith.constant 0 : index
    %28 = vector.load %arg9[%c0_18, %c0_19] : memref<1x128xf32, #tpu.memory_space<vmem>>, vector<1x128xf32>
    %29 = vector.broadcast %28 : vector<1x128xf32> to vector<4x128xf32>
    %30 = arith.addf %27, %29 : vector<4x128xf32>
    %cst_20 = arith.constant 0.000000e+00 : f32
    %31 = vector.broadcast %cst_20 : f32 to vector<4x128xf32>
    %32 = arith.maximumf %30, %31 : vector<4x128xf32>
    %33 = arith.truncf %32 : vector<4x128xf32> to vector<4x128xbf16>
    %34 = vector.extract_strided_slice %13 {offsets = [0, 256], sizes = [4, 128], strides = [1, 1]} : vector<4x384xf32> to vector<4x128xf32>
    %35 = arith.truncf %34 : vector<4x128xf32> to vector<4x128xbf16>
    %c0_21 = arith.constant 0 : index
    %c0_22 = arith.constant 0 : index
    %36 = vector.load %arg10[%c0_21, %c0_22] : memref<128x128xbf16, #tpu.memory_space<vmem>>, vector<128x128xbf16>
    %cst_23 = arith.constant dense<0.000000e+00> : vector<4x128xf32>
    %37 = tpu.matmul %35, %36, %cst_23 {dimension_numbers = #tpu.dot_dimension_numbers<[1], [0], [0], [1], [0, 0, 1, 1], [], []>} : vector<4x128xbf16>, vector<128x128xbf16>, vector<4x128xf32> -> vector<4x128xf32>
    %c0_24 = arith.constant 0 : index
    %c0_25 = arith.constant 0 : index
    %38 = vector.load %arg11[%c0_24, %c0_25] : memref<1x128xf32, #tpu.memory_space<vmem>>, vector<1x128xf32>
    %39 = vector.broadcast %38 : vector<1x128xf32> to vector<4x128xf32>
    %40 = arith.addf %37, %39 : vector<4x128xf32>
    %cst_26 = arith.constant 0.000000e+00 : f32
    %41 = vector.broadcast %cst_26 : f32 to vector<4x128xf32>
    %42 = arith.maximumf %40, %41 : vector<4x128xf32>
    %43 = arith.truncf %42 : vector<4x128xf32> to vector<4x128xbf16>
    %44 = tpu.concatenate %6, %23, %33, %43 in 1 : vector<4x128xbf16>, vector<4x128xbf16>, vector<4x128xbf16>, vector<4x128xbf16> -> vector<4x512xbf16>
    %c0_27 = arith.constant 0 : index
    %c0_28 = arith.constant 0 : index
    %45 = vector.load %arg12[%c0_27, %c0_28] : memref<512x128xbf16, #tpu.memory_space<vmem>>, vector<512x128xbf16>
    %cst_29 = arith.constant dense<0.000000e+00> : vector<4x128xf32>
    %46 = tpu.matmul %44, %45, %cst_29 {dimension_numbers = #tpu.dot_dimension_numbers<[1], [0], [0], [1], [0, 0, 1, 1], [], []>} : vector<4x512xbf16>, vector<512x128xbf16>, vector<4x128xf32> -> vector<4x128xf32>
    %c0_30 = arith.constant 0 : index
    %c0_31 = arith.constant 0 : index
    %47 = vector.load %arg13[%c0_30, %c0_31] : memref<1x128xf32, #tpu.memory_space<vmem>>, vector<1x128xf32>
    %48 = vector.broadcast %47 : vector<1x128xf32> to vector<4x128xf32>
    %49 = arith.addf %46, %48 : vector<4x128xf32>
    %c0_32 = arith.constant 0 : index
    %c0_33 = arith.constant 0 : index
    %50 = vector.load %arg14[%c0_32, %c0_33] : memref<1x128xf32, #tpu.memory_space<vmem>>, vector<1x128xf32>
    %cst_34 = arith.constant 0.000000e+00 : f32
    %51 = vector.broadcast %cst_34 : f32 to vector<1x128xf32>
    %52 = arith.cmpf ogt, %50, %51 : vector<1x128xf32>
    %53 = arith.negf %49 : vector<4x128xf32>
    %54 = math.exp %53 : vector<4x128xf32>
    %cst_35 = arith.constant 1.000000e+00 : f32
    %55 = vector.broadcast %cst_35 : f32 to vector<4x128xf32>
    %56 = arith.addf %55, %54 : vector<4x128xf32>
    %57 = arith.divf %55, %56 : vector<4x128xf32>
    %58 = vector.shape_cast %52 : vector<1x128xi1> to vector<1x128xi1>
    %59 = vector.broadcast %58 : vector<1x128xi1> to vector<4x128xi1>
    %60 = arith.select %59, %57, %49 : vector<4x128xi1>, vector<4x128xf32>
    %61 = vector.shape_cast %60 : vector<4x128xf32> to vector<1x4x128xf32>
    %c0_36 = arith.constant 0 : index
    %c0_37 = arith.constant 0 : index
    %c0_38 = arith.constant 0 : index
    %62 = vector.load %arg15[%c0_36, %c0_37, %c0_38] : memref<1x4x128xf32, #tpu.memory_space<vmem>>, vector<1x4x128xf32>
    tpu.vector_store %arg15[%c0_36, %c0_37, %c0_38], %61 {strides = array<i32>} : memref<1x4x128xf32, #tpu.memory_space<vmem>>, vector<1x4x128xf32>,
    return
  }
  func.func @transform_0(%arg0: i32, %arg1: i32) -> (i32, i32) {
    %c0_i32 = arith.constant 0 : i32
    %c0_i32_0 = arith.constant 0 : i32
    return %arg1, %c0_i32 : i32, i32
  }
  func.func @transform_1(%arg0: i32, %arg1: i32) -> (i32, i32, i32) {
    %c0_i32 = arith.constant 0 : i32
    %c0_i32_0 = arith.constant 0 : i32
    %c0_i32_1 = arith.constant 0 : i32
    return %arg0, %c0_i32, %c0_i32_0 : i32, i32, i32
  }
  func.func @transform_2(%arg0: i32, %arg1: i32) -> (i32, i32) {
    %c0_i32 = arith.constant 0 : i32
    %c0_i32_0 = arith.constant 0 : i32
    %c0_i32_1 = arith.constant 0 : i32
    return %c0_i32, %c0_i32_0 : i32, i32
  }
  func.func @transform_3(%arg0: i32, %arg1: i32) -> (i32, i32) {
    %c0_i32 = arith.constant 0 : i32
    %c0_i32_0 = arith.constant 0 : i32
    %c0_i32_1 = arith.constant 0 : i32
    return %c0_i32, %c0_i32_0 : i32, i32
  }
  func.func @transform_4(%arg0: i32, %arg1: i32) -> (i32, i32) {
    %c0_i32 = arith.constant 0 : i32
    %c0_i32_0 = arith.constant 0 : i32
    %c0_i32_1 = arith.constant 0 : i32
    return %c0_i32, %c0_i32_0 : i32, i32
  }
  func.func @transform_5(%arg0: i32, %arg1: i32) -> (i32, i32) {
    %c0_i32 = arith.constant 0 : i32
    %c0_i32_0 = arith.constant 0 : i32
    %c0_i32_1 = arith.constant 0 : i32
    return %c0_i32, %c0_i32_0 : i32, i32
  }
  func.func @transform_6(%arg0: i32, %arg1: i32) -> (i32, i32) {
    %c0_i32 = arith.constant 0 : i32
    %c0_i32_0 = arith.constant 0 : i32
    %c0_i32_1 = arith.constant 0 : i32
    return %c0_i32, %c0_i32_0 : i32, i32
  }
  func.func @transform_7(%arg0: i32, %arg1: i32) -> (i32, i32) {
    %c0_i32 = arith.constant 0 : i32
    %c0_i32_0 = arith.constant 0 : i32
    %c0_i32_1 = arith.constant 0 : i32
    return %c0_i32, %c0_i32_0 : i32, i32
  }
  func.func @transform_8(%arg0: i32, %arg1: i32) -> (i32, i32) {
    %c0_i32 = arith.constant 0 : i32
    %c0_i32_0 = arith.constant 0 : i32
    %c0_i32_1 = arith.constant 0 : i32
    return %c0_i32, %c0_i32_0 : i32, i32
  }
  func.func @transform_9(%arg0: i32, %arg1: i32) -> (i32, i32) {
    %c0_i32 = arith.constant 0 : i32
    %c0_i32_0 = arith.constant 0 : i32
    %c0_i32_1 = arith.constant 0 : i32
    return %c0_i32, %c0_i32_0 : i32, i32
  }
  func.func @transform_10(%arg0: i32, %arg1: i32) -> (i32, i32) {
    %c0_i32 = arith.constant 0 : i32
    %c0_i32_0 = arith.constant 0 : i32
    %c0_i32_1 = arith.constant 0 : i32
    return %c0_i32, %c0_i32_0 : i32, i32
  }
  func.func @transform_11(%arg0: i32, %arg1: i32) -> (i32, i32) {
    %c0_i32 = arith.constant 0 : i32
    %c0_i32_0 = arith.constant 0 : i32
    %c0_i32_1 = arith.constant 0 : i32
    return %c0_i32, %c0_i32_0 : i32, i32
  }
  func.func @transform_12(%arg0: i32, %arg1: i32) -> (i32, i32) {
    %c0_i32 = arith.constant 0 : i32
    %c0_i32_0 = arith.constant 0 : i32
    %c0_i32_1 = arith.constant 0 : i32
    return %c0_i32, %c0_i32_0 : i32, i32
  }
  func.func @transform_13(%arg0: i32, %arg1: i32) -> (i32, i32, i32) {
    %c0_i32 = arith.constant 0 : i32
    %c0_i32_0 = arith.constant 0 : i32
    return %arg0, %arg1, %c0_i32 : i32, i32, i32
  }
}

module attributes {stable_mosaic.version = 11 : i64} {
  func.func @_input_proj_mean_kernel(%arg0: i32, %arg1: i32, %arg2: memref<1x4x1024xf32, #tpu.memory_space<vmem>>, %arg3: memref<128x4xbf16, #tpu.memory_space<vmem>>, %arg4: memref<128x1xf32, #tpu.memory_space<vmem>>, %arg5: memref<1x128x1xf32, #tpu.memory_space<vmem>>, %arg6: memref<4x1xf32, #tpu.memory_space<vmem>>) attributes {dimension_semantics = [#tpu.dimension_semantics<parallel>, #tpu.dimension_semantics<arbitrary>], iteration_bounds = array<i64: 2, 2>, scalar_prefetch = 0 : i64, scratch_operands = 1 : i64, tpu.core_type = #tpu.core_type<tc>, window_params = [{transform_indices = @transform_0, window_bounds = array<i64: 1, 4, 1024>}, {pipeline_mode = #tpu.pipeline_mode<synchronous>, transform_indices = @transform_1, window_bounds = array<i64: 128, 4>}, {pipeline_mode = #tpu.pipeline_mode<synchronous>, transform_indices = @transform_2, window_bounds = array<i64: 128, 1>}, {transform_indices = @transform_3, window_bounds = array<i64: 1, 128, 1>}]} {
    %c0_i32 = arith.constant 0 : i32
    %0 = arith.cmpi eq, %arg1, %c0_i32 : i32
    %1 = arith.extui %0 : i1 to i32
    %c0_i32_0 = arith.constant 0 : i32
    %2 = arith.cmpi ne, %1, %c0_i32_0 : i32
    scf.if %2 {
      %cst_9 = arith.constant 0.000000e+00 : f32
      %20 = vector.broadcast %cst_9 : f32 to vector<4x1xf32>
      %c0_10 = arith.constant 0 : index
      %c0_11 = arith.constant 0 : index
      %21 = vector.load %arg6[%c0_10, %c0_11] : memref<4x1xf32, #tpu.memory_space<vmem>>, vector<4x1xf32>
      tpu.vector_store %arg6[%c0_10, %c0_11], %20 {strides = array<i32>} : memref<4x1xf32, #tpu.memory_space<vmem>>, vector<4x1xf32>,
    } else {
    }
    %c0 = arith.constant 0 : index
    %c0_1 = arith.constant 0 : index
    %c0_2 = arith.constant 0 : index
    %3 = vector.load %arg2[%c0, %c0_1, %c0_2] : memref<1x4x1024xf32, #tpu.memory_space<vmem>>, vector<1x4x1024xf32>
    %4 = vector.shape_cast %3 : vector<1x4x1024xf32> to vector<4x1024xf32>
    %5 = tpu.iota {dimensions = array<i32: 1>} : vector<4x1024xi32>
    %c1024_i32 = arith.constant 1024 : i32
    %6 = arith.muli %arg1, %c1024_i32 : i32
    %c1600_i32 = arith.constant 1600 : i32
    %7 = arith.subi %c1600_i32, %6 : i32
    %8 = vector.broadcast %7 : i32 to vector<4x1024xi32>
    %9 = arith.cmpi slt, %5, %8 : vector<4x1024xi32>
    %cst = arith.constant 0.000000e+00 : f32
    %10 = vector.broadcast %cst : f32 to vector<4x1024xf32>
    %11 = arith.select %9, %4, %10 : vector<4x1024xi1>, vector<4x1024xf32>
    %c0_3 = arith.constant 0 : index
    %c0_4 = arith.constant 0 : index
    %12 = vector.load %arg6[%c0_3, %c0_4] : memref<4x1xf32, #tpu.memory_space<vmem>>, vector<4x1xf32>
    %cst_5 = arith.constant dense<0.000000e+00> : vector<4xf32>
    %13 = vector.multi_reduction <add>, %11, %cst_5 [1] : vector<4x1024xf32> to vector<4xf32>
    %14 = vector.shape_cast %13 : vector<4xf32> to vector<4x1xf32>
    %15 = arith.addf %12, %14 : vector<4x1xf32>
    %c0_6 = arith.constant 0 : index
    %c0_7 = arith.constant 0 : index
    %16 = vector.load %arg6[%c0_6, %c0_7] : memref<4x1xf32, #tpu.memory_space<vmem>>, vector<4x1xf32>
    tpu.vector_store %arg6[%c0_6, %c0_7], %15 {strides = array<i32>} : memref<4x1xf32, #tpu.memory_space<vmem>>, vector<4x1xf32>,
    %c1_i32 = arith.constant 1 : i32
    %17 = arith.cmpi eq, %arg1, %c1_i32 : i32
    %18 = arith.extui %17 : i1 to i32
    %c0_i32_8 = arith.constant 0 : i32
    %19 = arith.cmpi ne, %18, %c0_i32_8 : i32
    scf.if %19 {
      %c0_9 = arith.constant 0 : index
      %c0_10 = arith.constant 0 : index
      %20 = vector.load %arg6[%c0_9, %c0_10] : memref<4x1xf32, #tpu.memory_space<vmem>>, vector<4x1xf32>
      %cst_11 = arith.constant 6.250000e-04 : f32
      %21 = vector.broadcast %cst_11 : f32 to vector<4x1xf32>
      %22 = arith.mulf %20, %21 : vector<4x1xf32>
      %23 = arith.truncf %22 : vector<4x1xf32> to vector<4x1xbf16>
      %c0_12 = arith.constant 0 : index
      %c0_13 = arith.constant 0 : index
      %24 = vector.load %arg3[%c0_12, %c0_13] : memref<128x4xbf16, #tpu.memory_space<vmem>>, vector<128x4xbf16>
      %cst_14 = arith.constant dense<0.000000e+00> : vector<128x1xf32>
      %25 = tpu.matmul %24, %23, %cst_14 {dimension_numbers = #tpu.dot_dimension_numbers<[1], [0], [0], [1], [0, 0, 1, 1], [], []>} : vector<128x4xbf16>, vector<4x1xbf16>, vector<128x1xf32> -> vector<128x1xf32>
      %c0_15 = arith.constant 0 : index
      %c0_16 = arith.constant 0 : index
      %26 = vector.load %arg4[%c0_15, %c0_16] : memref<128x1xf32, #tpu.memory_space<vmem>>, vector<128x1xf32>
      %27 = arith.addf %25, %26 : vector<128x1xf32>
      %28 = vector.shape_cast %27 : vector<128x1xf32> to vector<1x128x1xf32>
      %c0_17 = arith.constant 0 : index
      %c0_18 = arith.constant 0 : index
      %c0_19 = arith.constant 0 : index
      %29 = vector.load %arg5[%c0_17, %c0_18, %c0_19] : memref<1x128x1xf32, #tpu.memory_space<vmem>>, vector<1x128x1xf32>
      tpu.vector_store %arg5[%c0_17, %c0_18, %c0_19], %28 {strides = array<i32>} : memref<1x128x1xf32, #tpu.memory_space<vmem>>, vector<1x128x1xf32>,
    } else {
    }
    return
  }
  func.func @transform_0(%arg0: i32, %arg1: i32) -> (i32, i32, i32) {
    %c0_i32 = arith.constant 0 : i32
    %c0_i32_0 = arith.constant 0 : i32
    return %arg0, %c0_i32, %arg1 : i32, i32, i32
  }
  func.func @transform_1(%arg0: i32, %arg1: i32) -> (i32, i32) {
    %c0_i32 = arith.constant 0 : i32
    %c0_i32_0 = arith.constant 0 : i32
    %c0_i32_1 = arith.constant 0 : i32
    return %c0_i32, %c0_i32_0 : i32, i32
  }
  func.func @transform_2(%arg0: i32, %arg1: i32) -> (i32, i32) {
    %c0_i32 = arith.constant 0 : i32
    %c0_i32_0 = arith.constant 0 : i32
    %c0_i32_1 = arith.constant 0 : i32
    return %c0_i32, %c0_i32_0 : i32, i32
  }
  func.func @transform_3(%arg0: i32, %arg1: i32) -> (i32, i32, i32) {
    %c0_i32 = arith.constant 0 : i32
    %c0_i32_0 = arith.constant 0 : i32
    %c0_i32_1 = arith.constant 0 : i32
    return %arg0, %c0_i32, %c0_i32_0 : i32, i32, i32
  }
}

module attributes {stable_mosaic.version = 11 : i64} {
  func.func @_fused_heads_kernel(%arg0: i32, %arg1: i32, %arg2: memref<8x128xf32, #tpu.memory_space<vmem>>, %arg3: memref<1x1x128xf32, #tpu.memory_space<vmem>>, %arg4: memref<128x256xbf16, #tpu.memory_space<vmem>>, %arg5: memref<1x256xf32, #tpu.memory_space<vmem>>, %arg6: memref<128x128xbf16, #tpu.memory_space<vmem>>, %arg7: memref<1x128xf32, #tpu.memory_space<vmem>>, %arg8: memref<128x128xbf16, #tpu.memory_space<vmem>>, %arg9: memref<1x128xf32, #tpu.memory_space<vmem>>, %arg10: memref<384x128xbf16, #tpu.memory_space<vmem>>, %arg11: memref<1x128xf32, #tpu.memory_space<vmem>>, %arg12: memref<1x128xf32, #tpu.memory_space<vmem>>, %arg13: memref<1x8x128xf32, #tpu.memory_space<vmem>>) attributes {dimension_semantics = [#tpu.dimension_semantics<parallel>, #tpu.dimension_semantics<parallel>], iteration_bounds = array<i64: 2, 1>, scalar_prefetch = 0 : i64, scratch_operands = 0 : i64, tpu.core_type = #tpu.core_type<tc>, window_params = [{transform_indices = @transform_0, window_bounds = array<i64: 8, 128>}, {transform_indices = @transform_1, window_bounds = array<i64: 1, 1, 128>}, {pipeline_mode = #tpu.pipeline_mode<synchronous>, transform_indices = @transform_2, window_bounds = array<i64: 128, 256>}, {pipeline_mode = #tpu.pipeline_mode<synchronous>, transform_indices = @transform_3, window_bounds = array<i64: 1, 256>}, {pipeline_mode = #tpu.pipeline_mode<synchronous>, transform_indices = @transform_4, window_bounds = array<i64: 128, 128>}, {pipeline_mode = #tpu.pipeline_mode<synchronous>, transform_indices = @transform_5, window_bounds = array<i64: 1, 128>}, {pipeline_mode = #tpu.pipeline_mode<synchronous>, transform_indices = @transform_6, window_bounds = array<i64: 128, 128>}, {pipeline_mode = #tpu.pipeline_mode<synchronous>, transform_indices = @transform_7, window_bounds = array<i64: 1, 128>}, {pipeline_mode = #tpu.pipeline_mode<synchronous>, transform_indices = @transform_8, window_bounds = array<i64: 384, 128>}, {pipeline_mode = #tpu.pipeline_mode<synchronous>, transform_indices = @transform_9, window_bounds = array<i64: 1, 128>}, {pipeline_mode = #tpu.pipeline_mode<synchronous>, transform_indices = @transform_10, window_bounds = array<i64: 1, 128>}, {transform_indices = @transform_11, window_bounds = array<i64: 1, 8, 128>}]} {
    %c0 = arith.constant 0 : index
    %c0_0 = arith.constant 0 : index
    %0 = vector.load %arg2[%c0, %c0_0] : memref<8x128xf32, #tpu.memory_space<vmem>>, vector<8x128xf32>
    %c0_1 = arith.constant 0 : index
    %c0_2 = arith.constant 0 : index
    %c0_3 = arith.constant 0 : index
    %1 = vector.load %arg3[%c0_1, %c0_2, %c0_3] : memref<1x1x128xf32, #tpu.memory_space<vmem>>, vector<1x1x128xf32>
    %2 = vector.shape_cast %1 : vector<1x1x128xf32> to vector<1x128xf32>
    %3 = vector.broadcast %2 : vector<1x128xf32> to vector<8x128xf32>
    %4 = arith.addf %0, %3 : vector<8x128xf32>
    %5 = math.tanh %4 : vector<8x128xf32>
    %6 = arith.truncf %5 : vector<8x128xf32> to vector<8x128xbf16>
    %c0_4 = arith.constant 0 : index
    %c0_5 = arith.constant 0 : index
    %7 = vector.load %arg4[%c0_4, %c0_5] : memref<128x256xbf16, #tpu.memory_space<vmem>>, vector<128x256xbf16>
    %cst = arith.constant dense<0.000000e+00> : vector<8x256xf32>
    %8 = tpu.matmul %6, %7, %cst {dimension_numbers = #tpu.dot_dimension_numbers<[1], [0], [0], [1], [0, 0, 1, 1], [], []>} : vector<8x128xbf16>, vector<128x256xbf16>, vector<8x256xf32> -> vector<8x256xf32>
    %c0_6 = arith.constant 0 : index
    %c0_7 = arith.constant 0 : index
    %9 = vector.load %arg5[%c0_6, %c0_7] : memref<1x256xf32, #tpu.memory_space<vmem>>, vector<1x256xf32>
    %10 = vector.broadcast %9 : vector<1x256xf32> to vector<8x256xf32>
    %11 = arith.addf %8, %10 : vector<8x256xf32>
    %cst_8 = arith.constant 0.000000e+00 : f32
    %12 = vector.broadcast %cst_8 : f32 to vector<8x256xf32>
    %13 = arith.maximumf %11, %12 : vector<8x256xf32>
    %14 = vector.extract_strided_slice %13 {offsets = [0, 0], sizes = [8, 128], strides = [1, 1]} : vector<8x256xf32> to vector<8x128xf32>
    %15 = arith.truncf %14 : vector<8x128xf32> to vector<8x128xbf16>
    %c0_9 = arith.constant 0 : index
    %c0_10 = arith.constant 0 : index
    %16 = vector.load %arg6[%c0_9, %c0_10] : memref<128x128xbf16, #tpu.memory_space<vmem>>, vector<128x128xbf16>
    %cst_11 = arith.constant dense<0.000000e+00> : vector<8x128xf32>
    %17 = tpu.matmul %15, %16, %cst_11 {dimension_numbers = #tpu.dot_dimension_numbers<[1], [0], [0], [1], [0, 0, 1, 1], [], []>} : vector<8x128xbf16>, vector<128x128xbf16>, vector<8x128xf32> -> vector<8x128xf32>
    %c0_12 = arith.constant 0 : index
    %c0_13 = arith.constant 0 : index
    %18 = vector.load %arg7[%c0_12, %c0_13] : memref<1x128xf32, #tpu.memory_space<vmem>>, vector<1x128xf32>
    %19 = vector.broadcast %18 : vector<1x128xf32> to vector<8x128xf32>
    %20 = arith.addf %17, %19 : vector<8x128xf32>
    %cst_14 = arith.constant 0.000000e+00 : f32
    %21 = vector.broadcast %cst_14 : f32 to vector<8x128xf32>
    %22 = arith.maximumf %20, %21 : vector<8x128xf32>
    %23 = arith.truncf %22 : vector<8x128xf32> to vector<8x128xbf16>
    %24 = vector.extract_strided_slice %13 {offsets = [0, 128], sizes = [8, 128], strides = [1, 1]} : vector<8x256xf32> to vector<8x128xf32>
    %25 = arith.truncf %24 : vector<8x128xf32> to vector<8x128xbf16>
    %c0_15 = arith.constant 0 : index
    %c0_16 = arith.constant 0 : index
    %26 = vector.load %arg8[%c0_15, %c0_16] : memref<128x128xbf16, #tpu.memory_space<vmem>>, vector<128x128xbf16>
    %cst_17 = arith.constant dense<0.000000e+00> : vector<8x128xf32>
    %27 = tpu.matmul %25, %26, %cst_17 {dimension_numbers = #tpu.dot_dimension_numbers<[1], [0], [0], [1], [0, 0, 1, 1], [], []>} : vector<8x128xbf16>, vector<128x128xbf16>, vector<8x128xf32> -> vector<8x128xf32>
    %c0_18 = arith.constant 0 : index
    %c0_19 = arith.constant 0 : index
    %28 = vector.load %arg9[%c0_18, %c0_19] : memref<1x128xf32, #tpu.memory_space<vmem>>, vector<1x128xf32>
    %29 = vector.broadcast %28 : vector<1x128xf32> to vector<8x128xf32>
    %30 = arith.addf %27, %29 : vector<8x128xf32>
    %cst_20 = arith.constant 0.000000e+00 : f32
    %31 = vector.broadcast %cst_20 : f32 to vector<8x128xf32>
    %32 = arith.maximumf %30, %31 : vector<8x128xf32>
    %33 = arith.truncf %32 : vector<8x128xf32> to vector<8x128xbf16>
    %34 = tpu.concatenate %6, %23, %33 in 1 : vector<8x128xbf16>, vector<8x128xbf16>, vector<8x128xbf16> -> vector<8x384xbf16>
    %c0_21 = arith.constant 0 : index
    %c0_22 = arith.constant 0 : index
    %35 = vector.load %arg10[%c0_21, %c0_22] : memref<384x128xbf16, #tpu.memory_space<vmem>>, vector<384x128xbf16>
    %cst_23 = arith.constant dense<0.000000e+00> : vector<8x128xf32>
    %36 = tpu.matmul %34, %35, %cst_23 {dimension_numbers = #tpu.dot_dimension_numbers<[1], [0], [0], [1], [0, 0, 1, 1], [], []>} : vector<8x384xbf16>, vector<384x128xbf16>, vector<8x128xf32> -> vector<8x128xf32>
    %c0_24 = arith.constant 0 : index
    %c0_25 = arith.constant 0 : index
    %37 = vector.load %arg11[%c0_24, %c0_25] : memref<1x128xf32, #tpu.memory_space<vmem>>, vector<1x128xf32>
    %38 = vector.broadcast %37 : vector<1x128xf32> to vector<8x128xf32>
    %39 = arith.addf %36, %38 : vector<8x128xf32>
    %c0_26 = arith.constant 0 : index
    %c0_27 = arith.constant 0 : index
    %40 = vector.load %arg12[%c0_26, %c0_27] : memref<1x128xf32, #tpu.memory_space<vmem>>, vector<1x128xf32>
    %cst_28 = arith.constant 0.000000e+00 : f32
    %41 = vector.broadcast %cst_28 : f32 to vector<1x128xf32>
    %42 = arith.cmpf ogt, %40, %41 : vector<1x128xf32>
    %43 = arith.negf %39 : vector<8x128xf32>
    %44 = math.exp %43 : vector<8x128xf32>
    %cst_29 = arith.constant 1.000000e+00 : f32
    %45 = vector.broadcast %cst_29 : f32 to vector<8x128xf32>
    %46 = arith.addf %45, %44 : vector<8x128xf32>
    %47 = arith.divf %45, %46 : vector<8x128xf32>
    %48 = vector.shape_cast %42 : vector<1x128xi1> to vector<1x128xi1>
    %49 = vector.broadcast %48 : vector<1x128xi1> to vector<8x128xi1>
    %50 = arith.select %49, %47, %39 : vector<8x128xi1>, vector<8x128xf32>
    %51 = vector.shape_cast %50 : vector<8x128xf32> to vector<1x8x128xf32>
    %c0_30 = arith.constant 0 : index
    %c0_31 = arith.constant 0 : index
    %c0_32 = arith.constant 0 : index
    %52 = vector.load %arg13[%c0_30, %c0_31, %c0_32] : memref<1x8x128xf32, #tpu.memory_space<vmem>>, vector<1x8x128xf32>
    tpu.vector_store %arg13[%c0_30, %c0_31, %c0_32], %51 {strides = array<i32>} : memref<1x8x128xf32, #tpu.memory_space<vmem>>, vector<1x8x128xf32>,
    return
  }
  func.func @transform_0(%arg0: i32, %arg1: i32) -> (i32, i32) {
    %c0_i32 = arith.constant 0 : i32
    %c0_i32_0 = arith.constant 0 : i32
    return %arg1, %c0_i32 : i32, i32
  }
  func.func @transform_1(%arg0: i32, %arg1: i32) -> (i32, i32, i32) {
    %c0_i32 = arith.constant 0 : i32
    %c0_i32_0 = arith.constant 0 : i32
    %c0_i32_1 = arith.constant 0 : i32
    return %arg0, %c0_i32, %c0_i32_0 : i32, i32, i32
  }
  func.func @transform_2(%arg0: i32, %arg1: i32) -> (i32, i32) {
    %c0_i32 = arith.constant 0 : i32
    %c0_i32_0 = arith.constant 0 : i32
    %c0_i32_1 = arith.constant 0 : i32
    return %c0_i32, %c0_i32_0 : i32, i32
  }
  func.func @transform_3(%arg0: i32, %arg1: i32) -> (i32, i32) {
    %c0_i32 = arith.constant 0 : i32
    %c0_i32_0 = arith.constant 0 : i32
    %c0_i32_1 = arith.constant 0 : i32
    return %c0_i32, %c0_i32_0 : i32, i32
  }
  func.func @transform_4(%arg0: i32, %arg1: i32) -> (i32, i32) {
    %c0_i32 = arith.constant 0 : i32
    %c0_i32_0 = arith.constant 0 : i32
    %c0_i32_1 = arith.constant 0 : i32
    return %c0_i32, %c0_i32_0 : i32, i32
  }
  func.func @transform_5(%arg0: i32, %arg1: i32) -> (i32, i32) {
    %c0_i32 = arith.constant 0 : i32
    %c0_i32_0 = arith.constant 0 : i32
    %c0_i32_1 = arith.constant 0 : i32
    return %c0_i32, %c0_i32_0 : i32, i32
  }
  func.func @transform_6(%arg0: i32, %arg1: i32) -> (i32, i32) {
    %c0_i32 = arith.constant 0 : i32
    %c0_i32_0 = arith.constant 0 : i32
    %c0_i32_1 = arith.constant 0 : i32
    return %c0_i32, %c0_i32_0 : i32, i32
  }
  func.func @transform_7(%arg0: i32, %arg1: i32) -> (i32, i32) {
    %c0_i32 = arith.constant 0 : i32
    %c0_i32_0 = arith.constant 0 : i32
    %c0_i32_1 = arith.constant 0 : i32
    return %c0_i32, %c0_i32_0 : i32, i32
  }
  func.func @transform_8(%arg0: i32, %arg1: i32) -> (i32, i32) {
    %c0_i32 = arith.constant 0 : i32
    %c0_i32_0 = arith.constant 0 : i32
    %c0_i32_1 = arith.constant 0 : i32
    return %c0_i32, %c0_i32_0 : i32, i32
  }
  func.func @transform_9(%arg0: i32, %arg1: i32) -> (i32, i32) {
    %c0_i32 = arith.constant 0 : i32
    %c0_i32_0 = arith.constant 0 : i32
    %c0_i32_1 = arith.constant 0 : i32
    return %c0_i32, %c0_i32_0 : i32, i32
  }
  func.func @transform_10(%arg0: i32, %arg1: i32) -> (i32, i32) {
    %c0_i32 = arith.constant 0 : i32
    %c0_i32_0 = arith.constant 0 : i32
    %c0_i32_1 = arith.constant 0 : i32
    return %c0_i32, %c0_i32_0 : i32, i32
  }
  func.func @transform_11(%arg0: i32, %arg1: i32) -> (i32, i32, i32) {
    %c0_i32 = arith.constant 0 : i32
    %c0_i32_0 = arith.constant 0 : i32
    return %arg0, %arg1, %c0_i32 : i32, i32, i32
  }
}

</mosaic_0001>

<llo_original>
// kernel: _lambda_.3
$region0: #{_lambda_.3}
  #allocation0 [shape = 'u32[]', space=smem, size = 0x4, offset = 0x4, fixed_abs, tag = 'smem constant byte address 0x4 - core index']
  #allocation1 [shape = 'u32[144,128]{1,0:T(1,128)}', space=vmem, size = 0x12000, scoped, tag = 'internal scratch']
  #allocation2 [shape = 'f32[4,1]{1,0:T(4,128)}', space=vmem, size = 0x800, scoped, tag = 'scratch operand']
  %s0 = inlined_call_operand.vmem [shape: f32[2,4,1600], index: 0, kind: input, shape index: {}]
  %s1 = inlined_call_operand.vmem [shape: bf16[128,4], index: 1, kind: input, shape index: {}]
  %s2 = inlined_call_operand.vmem [shape: f32[128,1], index: 2, kind: input, shape index: {}]
  %s3 = inlined_call_operand.vmem [shape: f32[2,128,1], index: 3, kind: output, shape index: {}]
  %s4 = sld [smem:[#allocation0]]
  $region53: #{_lambda_.3} parent=0
    _
  %s6 = ssub.s32 1, %s4
  %s7 = scalar_select 0, %s6, %s4
  loop: start=0, step=1, limit=6
  $region2: #{_lambda_.3} parent=0 // loop_pre_header
    _
  $region3: #{_lambda_.3} parent=0 // loop_header
    %s9 = sphi 0, %s13
    %p10 = scmp.ge.s32.totalorder %s9, 6
    %s16 = sphi 0, %s28
    %s17 = sphi 0, %s24
    %s18 = sphi 0, %s16
    %s19 = sphi 0, %s17
    %s20 = sphi 0, %s18
    %s21 = sphi 0, %s19
    %s33 = sphi 0, %s35
    %s36 = sphi 0, %s33
    %s37 = sphi 0, %s36
    %s53 = sphi 0, %s37
    %s57 = sphi 0, %s57
    %s59 = sphi 0, %s57
    %s60 = sphi 0, %s59
    %s74 = sphi 0, %s60
    %s78 = sphi 0, %s78
    %s80 = sphi 0, %s78
    %s81 = sphi 0, %s80
    %s95 = sphi 0, %s81
    %s101 = sphi 0, %s103
    %s104 = sphi 0, %s101
    %s105 = sphi 0, %s104
    %s121 = sphi 0, %s105
  $region4: #{_lambda_.3} parent=0 // loop_header_branch
    %12 = sbr.rel (%p10) target = $region8
  $region5: #{_lambda_.3} parent=0 // loop_body
    %s14 = ssub.s32 %s9, 1
    %s15 = ssub.s32 %s9, 2
    %s22 = sadd.s32 1, %s17
    %p23 = scmp.ge.s32.totalorder %s22, 2
    %s24 = scalar_select %p23, 0, %s22
    %s25 = sadd.s32 1, %s16
    %s26 = scalar_select %p23, %s25, %s16
    %p27 = scmp.ge.s32.totalorder %s26, 2
    %s28 = scalar_select %p27, 0, %s26
    %s29 = ssub.s32 %s16, %s28
    %s30 = ssub.s32 %s17, %s24
    %s31 = sor.u32 %s29, %s30
    %p32 = scmp.eq.s32.totalorder %s31, 0
    %s34 = sadd.s32 %s33, 1
    %s35 = scalar_select %p32, %s33, %s34
    %p38 = pneg %p32
    %p39 = scmp.eq.s32.totalorder %s9, 3
    %p40 = por %p38, %p39
    %p41 = scmp.ne.s32.totalorder %s33, %s36
    %p42 = scmp.eq.s32.totalorder %s9, 0
    %p43 = por %p41, %p42
    %p44 = scmp.ne.s32.totalorder %s33, %s36
    %p45 = scmp.eq.s32.totalorder %s14, 3
    %p46 = por %p44, %p45
    %p47 = scmp.ne.s32.totalorder %s36, %s37
    %p48 = scmp.eq.s32.totalorder %s14, 0
    %p49 = por %p47, %p48
    %p50 = scmp.ne.s32.totalorder %s36, %s37
    %p51 = scmp.eq.s32.totalorder %s15, 3
    %p52 = por %p50, %p51
    %p54 = scmp.ne.s32.totalorder %s37, %s53
    %p55 = scmp.eq.s32.totalorder %s15, 0
    %p56 = por %p54, %p55
    %s58 = sadd.s32 %s57, 1
    %p61 = scmp.eq.s32.totalorder %s9, 3
    %p62 = scmp.ne.s32.totalorder %s57, %s59
    %p63 = scmp.eq.s32.totalorder %s9, 0
    %p64 = por %p62, %p63
    %p65 = scmp.ne.s32.totalorder %s57, %s59
    %p66 = scmp.eq.s32.totalorder %s14, 3
    %p67 = por %p65, %p66
    %p68 = scmp.ne.s32.totalorder %s59, %s60
    %p69 = scmp.eq.s32.totalorder %s14, 0
    %p70 = por %p68, %p69
    %p71 = scmp.ne.s32.totalorder %s59, %s60
    %p72 = scmp.eq.s32.totalorder %s15, 3
    %p73 = por %p71, %p72
    %p75 = scmp.ne.s32.totalorder %s60, %s74
    %p76 = scmp.eq.s32.totalorder %s15, 0
    %p77 = por %p75, %p76
    %s79 = sadd.s32 %s78, 1
    %p82 = scmp.eq.s32.totalorder %s9, 3
    %p83 = scmp.ne.s32.totalorder %s78, %s80
    %p84 = scmp.eq.s32.totalorder %s9, 0
    %p85 = por %p83, %p84
    %p86 = scmp.ne.s32.totalorder %s78, %s80
    %p87 = scmp.eq.s32.totalorder %s14, 3
    %p88 = por %p86, %p87
    %p89 = scmp.ne.s32.totalorder %s80, %s81
    %p90 = scmp.eq.s32.totalorder %s14, 0
    %p91 = por %p89, %p90
    %p92 = scmp.ne.s32.totalorder %s80, %s81
    %p93 = scmp.eq.s32.totalorder %s15, 3
    %p94 = por %p92, %p93
    %p96 = scmp.ne.s32.totalorder %s81, %s95
    %p97 = scmp.eq.s32.totalorder %s15, 0
    %p98 = por %p96, %p97
    %s99 = ssub.s32 %s16, %s28
    %p100 = scmp.eq.s32.totalorder %s99, 0
    %s102 = sadd.s32 %s101, 1
    %s103 = scalar_select %p100, %s101, %s102
    %p106 = pneg %p100
    %p107 = scmp.eq.s32.totalorder %s9, 3
    %p108 = por %p106, %p107
    %p109 = scmp.ne.s32.totalorder %s101, %s104
    %p110 = scmp.eq.s32.totalorder %s9, 0
    %p111 = por %p109, %p110
    %p112 = scmp.ne.s32.totalorder %s101, %s104
    %p113 = scmp.eq.s32.totalorder %s14, 3
    %p114 = por %p112, %p113
    %p115 = scmp.ne.s32.totalorder %s104, %s105
    %p116 = scmp.eq.s32.totalorder %s14, 0
    %p117 = por %p115, %p116
    %p118 = scmp.ne.s32.totalorder %s104, %s105
    %p119 = scmp.eq.s32.totalorder %s15, 3
    %p120 = por %p118, %p119
    %p122 = scmp.ne.s32.totalorder %s105, %s121
    %p123 = scmp.eq.s32.totalorder %s15, 0
    %p124 = por %p122, %p123
    %p125 = scmp.le.s32.totalorder 1, %s9
    %p126 = scmp.lt.s32.totalorder %s9, 5
    %p127 = pnand %p125, %p126
    %p128 = pneg %p127
    // Predicated region
    $region9: #{_lambda_.3} parent=5 // pred_check
      _
    $region10: #{_lambda_.3} parent=5 // pred_check_branch
      %130 = sbr.rel (%p127) target = $region12
    $region11: #{_lambda_.3} parent=5 // pred_region
      %s131 = ssub.s32 %s9, 1
      // Predicated region
      $region13: #{_lambda_.3} parent=11 // pred_check
        %p132 = pneg %p70
      $region14: #{_lambda_.3} parent=11 // pred_check_branch
        %134 = sbr.rel (%p132) target = $region16
      $region15: #{_lambda_.3} parent=11 // pred_region
        _
      $region16: #{_lambda_.3} parent=11 // pred_fallthru
        _
      // Predicated region
      $region17: #{_lambda_.3} parent=11 // pred_check
        %p135 = pneg %p91
      $region18: #{_lambda_.3} parent=11 // pred_check_branch
        %137 = sbr.rel (%p135) target = $region20
      $region19: #{_lambda_.3} parent=11 // pred_region
        _
      $region20: #{_lambda_.3} parent=11 // pred_fallthru
        _
    $region12: #{_lambda_.3} parent=5 // pred_fallthru
      _
    %p138 = scmp.lt.s32.totalorder %s9, 4
    // Predicated region
    $region21: #{_lambda_.3} parent=5 // pred_check
      %p139 = pneg %p138
    $region22: #{_lambda_.3} parent=5 // pred_check_branch
      %141 = sbr.rel (%p139) target = $region24
    $region23: #{_lambda_.3} parent=5 // pred_region
      // Predicated region
      $region25: #{_lambda_.3} parent=23 // pred_check
        %p142 = pneg %p43
      $region26: #{_lambda_.3} parent=23 // pred_check_branch
        %144 = sbr.rel (%p142) target = $region28
      $region27: #{_lambda_.3} parent=23 // pred_region
        %s145 = smul.u32 8, %s17
        %s146 = ssub.s32 13, %s145
        %p147 = scmp.lt.s32.totalorder %s146, 8
        %s148 = scalar_select %p147, %s146, 8
        %s149 = smul.u32 64, %s148
        %p150 = scmp.lt.s32.totalorder %s16, 1
        %s151 = scalar_select %p150, %s16, 1
        %p152 = scmp.lt.s32.totalorder %s145, 12
        %s153 = scalar_select %p152, %s145, 12
        %s154 = smul.addr %s151, 13
        %s155 = sadd.s32 %s153, %s154
        %s156 = smul.addr %s155, 4
        %s157 = scalar_lea.vmem %s0, %s156
        %s158 = smul.u32 8, %s17
        %s159 = ssub.s32 13, %s158
        %p160 = scmp.lt.s32.totalorder %s159, 8
        %s161 = scalar_select %p160, %s159, 8
        %s162 = smul.u32 64, %s161
      $region28: #{_lambda_.3} parent=23 // pred_fallthru
        _
    $region24: #{_lambda_.3} parent=5 // pred_fallthru
      _
    %p163 = scmp.le.s32.totalorder 1, %s9
    %p164 = scmp.lt.s32.totalorder %s9, 5
    %p165 = pnand %p163, %p164
    %p166 = pneg %p165
    // Predicated region
    $region29: #{_lambda_.3} parent=5 // pred_check
      _
    $region30: #{_lambda_.3} parent=5 // pred_check_branch
      %168 = sbr.rel (%p165) target = $region32
    $region31: #{_lambda_.3} parent=5 // pred_region
      %s169 = ssub.s32 %s9, 1
      %s170 = smul.u32 8, %s19
      %s171 = ssub.s32 13, %s170
      %p172 = scmp.lt.s32.totalorder %s171, 8
      %s173 = scalar_select %p172, %s171, 8
      %s174 = smul.u32 64, %s173
      %p175 = scmp.lt.s32.totalorder %s18, 1
      %s176 = scalar_select %p175, %s18, 1
      %p177 = scmp.lt.s32.totalorder %s170, 12
      %s178 = scalar_select %p177, %s170, 12
      %s179 = smul.addr %s176, 13
      %s180 = sadd.s32 %s178, %s179
      %s181 = smul.addr %s180, 4
      %s182 = scalar_lea.vmem %s0, %s181
      %p183 = pneg %p49
      %p184 = pneg %p46
      %p185 = pneg %p70
      %p186 = pneg %p67
      %p187 = pneg %p91
      %p188 = pneg %p88
      %p189 = pneg %p117
      %p190 = pneg %p114
      %p191 = scmp.lt.s32.totalorder %s18, 1
      %s192 = scalar_select %p191, %s18, 1
      %s193 = smul.addr %s192, 16
      %s194 = smul.addr %s193, 8
      %s195 = scalar_lea.vmem %s3, %s194
      %s196 = smul.u32 8, %s19
      %s197 = ssub.s32 13, %s196
      %p198 = scmp.lt.s32.totalorder %s197, 8
      %s199 = scalar_select %p198, %s197, 8
      %s200 = smul.u32 64, %s199
      %p201 = scmp.lt.s32.totalorder %s18, 1
      %s202 = scalar_select %p201, %s18, 1
      %p203 = scmp.lt.s32.totalorder %s196, 12
      %s204 = scalar_select %p203, %s196, 12
      %s205 = smul.addr %s202, 13
      %s206 = sadd.s32 %s204, %s205
      %s207 = smul.addr %s206, 4
      %s208 = scalar_lea.vmem %s0, %s207
      %s209 = smul.u32 8, %s19
      %s210 = ssub.s32 13, %s209
      %p211 = scmp.lt.s32.totalorder %s210, 8
      %s212 = scalar_select %p211, %s210, 8
      %s213 = smul.u32 64, %s212
      %p214 = scmp.lt.s32.totalorder %s18, 1
      %s215 = scalar_select %p214, %s18, 1
      %s216 = smul.addr %s215, 16
      %s217 = smul.addr %s216, 8
      %s218 = scalar_lea.vmem %s3, %s217
      %p220 = scmp.eq.s32.totalorder %s19, 0
      // Predicated region
      $region33: #{_lambda_.3} parent=31 // pred_check
        %p221 = pneg %p220
      $region34: #{_lambda_.3} parent=31 // pred_check_branch
        %223 = sbr.rel (%p221) target = $region36
      $region35: #{_lambda_.3} parent=31 // pred_region
        %vm224 = vcmask 3072
        %225 = vst.msk [vmem:[#allocation2] sm:$0xf] %vm224, 0.0
      $region36: #{_lambda_.3} parent=31 // pred_fallthru
        _
      %v226 = vld [vmem:[%s208] sm:$0xff]
      %v227 = vld [vmem:[%s208 + $0x8] sm:$0xff]
      %v228 = vld [vmem:[%s208 + $0x10] sm:$0xff]
      %v229 = vld [vmem:[%s208 + $0x18] sm:$0xff]
      %v230 = vlaneseq
      %v231 = vand.u32 %v230, 127
      %v232 = vadd.s32 %v231, 128
      %v233 = vadd.s32 %v231, 256
      %v234 = vadd.s32 %v231, 384
      %v235 = vadd.s32 %v231, 512
      %v236 = vadd.s32 %v231, 640
      %v237 = vadd.s32 %v231, 768
      %v238 = vadd.s32 %v231, 896
      %s239 = smul.u32 %s19, 1024
      %s240 = ssub.s32 1600, %s239
      %v241 = vstv %s240
      %vm242 = vcmp.lt.s32.totalorder %v231, %v241
      %vm243 = vcmp.lt.s32.totalorder %v232, %v241
      %vm244 = vcmp.lt.s32.totalorder %v233, %v241
      %vm245 = vcmp.lt.s32.totalorder %v234, %v241
      %vm246 = vcmp.lt.s32.totalorder %v235, %v241
      %vm247 = vcmp.lt.s32.totalorder %v236, %v241
      %vm248 = vcmp.lt.s32.totalorder %v237, %v241
      %vm249 = vcmp.lt.s32.totalorder %v238, %v241
      %v254 = vcombine.high %v226, %v226
      %v255 = vcombine.high %v227, %v227
      %v256 = vcombine.high %v228, %v228
      %v257 = vcombine.high %v229, %v229
      %v262 = vsel %vm242, %v226, 0.0
      %v263 = vsel %vm243, %v254, 0.0
      %v264 = vsel %vm244, %v227, 0.0
      %v265 = vsel %vm245, %v255, 0.0
      %v266 = vsel %vm246, %v228, 0.0
      %v267 = vsel %vm247, %v256, 0.0
      %v268 = vsel %vm248, %v229, 0.0
      %v269 = vsel %vm249, %v257, 0.0
      %v270 = vld [vmem:[#allocation2] sm:$0xf]
      %vm271 = vcmask 1043456
      %v272 = vsel %vm271, %v262, 0.0
      %v273 = vsel %vm271, %v263, 0.0
      %v274 = vadd.f32 %v272, %v273
      %v275 = vsel %vm271, %v264, 0.0
      %v276 = vadd.f32 %v274, %v275
      %v277 = vsel %vm271, %v265, 0.0
      %v278 = vadd.f32 %v276, %v277
      %v279 = vsel %vm271, %v266, 0.0
      %v280 = vadd.f32 %v278, %v279
      %v281 = vsel %vm271, %v267, 0.0
      %v282 = vadd.f32 %v280, %v281
      %v283 = vsel %vm271, %v268, 0.0
      %v284 = vadd.f32 %v282, %v283
      %v285 = vsel %vm271, %v269, 0.0
      %v286 = vadd.f32 %v284, %v285
      %287 = vadd.xlane.f32.xlu0 %v286
      %v288 = vpop.xlane.xlu0 %287
      %v289 = vadd.f32 %v270, %v288
      %vm290 = vcmask 3072
      %291 = vst.msk [vmem:[#allocation2] sm:$0xf] %vm290, %v289
      %p292 = scmp.eq.s32.totalorder %s19, 1
      // Predicated region
      $region37: #{_lambda_.3} parent=31 // pred_check
        %p293 = pneg %p292
      $region38: #{_lambda_.3} parent=31 // pred_check_branch
        %295 = sbr.rel (%p293) target = $region40
      $region39: #{_lambda_.3} parent=31 // pred_region
        %v296 = vld [vmem:[#allocation2] sm:$0xf]
        %v297 = vmul.f32 %v296, 0.000625
        %v298 = vpack.c.bf16 %v297, %v297
        %v299 = vld [vmem:[%s1] sm:$0xf]
        %v300 = vld [vmem:[%s1 + $0x4] sm:$0xf]
        %v301 = vld [vmem:[%s1 + $0x8] sm:$0xf]
        %v302 = vld [vmem:[%s1 + $0xc] sm:$0xf]
        %v303 = vld [vmem:[%s1 + $0x10] sm:$0xf]
        %v304 = vld [vmem:[%s1 + $0x14] sm:$0xf]
        %v305 = vld [vmem:[%s1 + $0x18] sm:$0xf]
        %v306 = vld [vmem:[%s1 + $0x1c] sm:$0xf]
        %v307 = vld [vmem:[%s1 + $0x20] sm:$0xf]
        %v308 = vld [vmem:[%s1 + $0x24] sm:$0xf]
        %v309 = vld [vmem:[%s1 + $0x28] sm:$0xf]
        %v310 = vld [vmem:[%s1 + $0x2c] sm:$0xf]
        %v311 = vld [vmem:[%s1 + $0x30] sm:$0xf]
        %v312 = vld [vmem:[%s1 + $0x34] sm:$0xf]
        %v313 = vld [vmem:[%s1 + $0x38] sm:$0xf]
        %v314 = vld [vmem:[%s1 + $0x3c] sm:$0xf]
        %v315 = vld [vmem:[%s2] sm:$0xff]
        %v316 = vld [vmem:[%s2 + $0x8] sm:$0xff]
        %v317 = vld [vmem:[%s2 + $0x10] sm:$0xff]
        %v318 = vld [vmem:[%s2 + $0x18] sm:$0xff]
        %v319 = vld [vmem:[%s2 + $0x20] sm:$0xff]
        %v320 = vld [vmem:[%s2 + $0x28] sm:$0xff]
        %v321 = vld [vmem:[%s2 + $0x30] sm:$0xff]
        %v322 = vld [vmem:[%s2 + $0x38] sm:$0xff]
        %v323 = vld [vmem:[%s2 + $0x40] sm:$0xff]
        %v324 = vld [vmem:[%s2 + $0x48] sm:$0xff]
        %v325 = vld [vmem:[%s2 + $0x50] sm:$0xff]
        %v326 = vld [vmem:[%s2 + $0x58] sm:$0xff]
        %v327 = vld [vmem:[%s2 + $0x60] sm:$0xff]
        %v328 = vld [vmem:[%s2 + $0x68] sm:$0xff]
        %v329 = vld [vmem:[%s2 + $0x70] sm:$0xff]
        %v330 = vld [vmem:[%s2 + $0x78] sm:$0xff]
        %v347 = vunpack.c.l.b16 %v299
        %v348 = vunpack.c.l.b16 %v300
        %v349 = vunpack.c.l.b16 %v301
        %v350 = vunpack.c.l.b16 %v302
        %v351 = vunpack.c.l.b16 %v303
        %v352 = vunpack.c.l.b16 %v304
        %v353 = vunpack.c.l.b16 %v305
        %v354 = vunpack.c.l.b16 %v306
        %v355 = vunpack.c.l.b16 %v307
        %v356 = vunpack.c.l.b16 %v308
        %v357 = vunpack.c.l.b16 %v309
        %v358 = vunpack.c.l.b16 %v310
        %v359 = vunpack.c.l.b16 %v311
        %v360 = vunpack.c.l.b16 %v312
        %v361 = vunpack.c.l.b16 %v313
        %v362 = vunpack.c.l.b16 %v314
        %v363 = vpack.c.b16 %v348, %v347
        %v364 = vpack.c.b16 %v350, %v349
        %v365 = vpack.c.b16 %v352, %v351
        %v366 = vpack.c.b16 %v354, %v353
        %v367 = vpack.c.b16 %v356, %v355
        %v368 = vpack.c.b16 %v358, %v357
        %v369 = vpack.c.b16 %v360, %v359
        %v370 = vpack.c.b16 %v362, %v361
        %vm371 = vcmask 31744
        %v373 = vsel %vm371, %v363, 0
        %v376 = vsel %vm371, %v364, 0
        %v379 = vsel %vm371, %v365, 0
        %v382 = vsel %vm371, %v366, 0
        %v385 = vsel %vm371, %v367, 0
        %v388 = vsel %vm371, %v368, 0
        %v391 = vsel %vm371, %v369, 0
        %v394 = vsel %vm371, %v370, 0
        %vm396 = vcmask 1041408
        %v398 = vsel %vm396, %v298, 0
        %400 = vmatprep.subr.bf16.mxu0 0
        %401 = vmatpush1.bf16.msra.mxu0 0
        %402 = vmatprep.subr.bf16.mxu0 0
        %403 = vmatpush1.bf16.msra.mxu0 0
        %404 = vmatprep.subr.bf16.mxu0 0
        %405 = vmatpush1.bf16.msra.mxu0 0
        %406 = vmatprep.subr.bf16.mxu0 0
        %407 = vmatpush1.bf16.msra.mxu0 0
        %408 = vmatprep.subr.bf16.mxu0 0
        %409 = vmatpush1.bf16.msra.mxu0 0
        %410 = vmatprep.subr.bf16.mxu0 0
        %411 = vmatpush1.bf16.msra.mxu0 0
        %412 = vmatprep.subr.bf16.mxu0 0
        %413 = vmatpush1.bf16.msra.mxu0 0
        %414 = vmatprep.subr.bf16.mxu0 0
        %415 = vmatpush1.bf16.msra.mxu0 %v398
        %416 = vmatprep.subr.bf16.mxu0 0
        %417 = vmatpush2.bf16.msra.mxu0 0
        %418 = vmatprep.subr.bf16.mxu0 0
        %419 = vmatpush2.bf16.msra.mxu0 0
        %420 = vmatprep.subr.bf16.mxu0 0
        %421 = vmatpush2.bf16.msra.mxu0 0
        %422 = vmatprep.subr.bf16.mxu0 0
        %423 = vmatpush2.bf16.msra.mxu0 0
        %424 = vmatprep.subr.bf16.mxu0 0
        %425 = vmatpush2.bf16.msra.mxu0 0
        %426 = vmatprep.subr.bf16.mxu0 0
        %427 = vmatpush2.bf16.msra.mxu0 0
        %428 = vmatprep.subr.bf16.mxu0 0
        %429 = vmatpush2.bf16.msra.mxu0 0
        %430 = vmatprep.subr.bf16.mxu0 0
        %431 = vmatpush2.bf16.msra.mxu0 0
        %432 = vmatprep.mubr.bf16.mxu0 0
        %433 = vmatmul.mubr.bf16.gmra.mxu0 %v373
        %v434 = vpop.f32.mrf.mxu0
        %v435 = vadd.f32 %v315, %v434
        %v436 = vpop.f32.mrf.mxu0
        %v437 = vpop.f32.mrf.mxu0
        %v438 = vadd.f32 %v316, %v437
        %v439 = vpop.f32.mrf.mxu0
        %440 = vmatprep.mubr.bf16.mxu0 0
        %441 = vmatmul.mubr.bf16.gmra.mxu0 %v376
        %v442 = vpop.f32.mrf.mxu0
        %v443 = vadd.f32 %v317, %v442
        %v444 = vpop.f32.mrf.mxu0
        %v445 = vpop.f32.mrf.mxu0
        %v446 = vadd.f32 %v318, %v445
        %v447 = vpop.f32.mrf.mxu0
        %448 = vmatprep.mubr.bf16.mxu0 0
        %449 = vmatmul.mubr.bf16.gmra.mxu0 %v379
        %v450 = vpop.f32.mrf.mxu0
        %v451 = vadd.f32 %v319, %v450
        %v452 = vpop.f32.mrf.mxu0
        %v453 = vpop.f32.mrf.mxu0
        %v454 = vadd.f32 %v320, %v453
        %v455 = vpop.f32.mrf.mxu0
        %456 = vmatprep.mubr.bf16.mxu0 0
        %457 = vmatmul.mubr.bf16.gmra.mxu0 %v382
        %v458 = vpop.f32.mrf.mxu0
        %v459 = vadd.f32 %v321, %v458
        %v460 = vpop.f32.mrf.mxu0
        %v461 = vpop.f32.mrf.mxu0
        %v462 = vadd.f32 %v322, %v461
        %v463 = vpop.f32.mrf.mxu0
        %464 = vmatprep.mubr.bf16.mxu0 0
        %465 = vmatmul.mubr.bf16.gmra.mxu0 %v385
        %v466 = vpop.f32.mrf.mxu0
        %v467 = vadd.f32 %v323, %v466
        %v468 = vpop.f32.mrf.mxu0
        %v469 = vpop.f32.mrf.mxu0
        %v470 = vadd.f32 %v324, %v469
        %v471 = vpop.f32.mrf.mxu0
        %472 = vmatprep.mubr.bf16.mxu0 0
        %473 = vmatmul.mubr.bf16.gmra.mxu0 %v388
        %v474 = vpop.f32.mrf.mxu0
        %v475 = vadd.f32 %v325, %v474
        %v476 = vpop.f32.mrf.mxu0
        %v477 = vpop.f32.mrf.mxu0
        %v478 = vadd.f32 %v326, %v477
        %v479 = vpop.f32.mrf.mxu0
        %480 = vmatprep.mubr.bf16.mxu0 0
        %481 = vmatmul.mubr.bf16.gmra.mxu0 %v391
        %v482 = vpop.f32.mrf.mxu0
        %v483 = vadd.f32 %v327, %v482
        %v484 = vpop.f32.mrf.mxu0
        %v485 = vpop.f32.mrf.mxu0
        %v486 = vadd.f32 %v328, %v485
        %v487 = vpop.f32.mrf.mxu0
        %488 = vmatprep.mubr.bf16.mxu0 0
        %489 = vmatmul.mubr.bf16.gmra.mxu0 %v394
        %v490 = vpop.f32.mrf.mxu0
        %v491 = vadd.f32 %v329, %v490
        %v492 = vpop.f32.mrf.mxu0
        %v493 = vpop.f32.mrf.mxu0
        %v494 = vadd.f32 %v330, %v493
        %v495 = vpop.f32.mrf.mxu0
        %496 = vdwg.mxu0
        %vm497 = vcmask 7168
        %498 = vst.msk [vmem:[%s218] sm:$0xff] %vm497, %v435
        %499 = vst.msk [vmem:[%s218 + $0x8] sm:$0xff] %vm497, %v438
        %500 = vst.msk [vmem:[%s218 + $0x10] sm:$0xff] %vm497, %v443
        %501 = vst.msk [vmem:[%s218 + $0x18] sm:$0xff] %vm497, %v446
        %502 = vst.msk [vmem:[%s218 + $0x20] sm:$0xff] %vm497, %v451
        %503 = vst.msk [vmem:[%s218 + $0x28] sm:$0xff] %vm497, %v454
        %504 = vst.msk [vmem:[%s218 + $0x30] sm:$0xff] %vm497, %v459
        %505 = vst.msk [vmem:[%s218 + $0x38] sm:$0xff] %vm497, %v462
        %506 = vst.msk [vmem:[%s218 + $0x40] sm:$0xff] %vm497, %v467
        %507 = vst.msk [vmem:[%s218 + $0x48] sm:$0xff] %vm497, %v470
        %508 = vst.msk [vmem:[%s218 + $0x50] sm:$0xff] %vm497, %v475
        %509 = vst.msk [vmem:[%s218 + $0x58] sm:$0xff] %vm497, %v478
        %510 = vst.msk [vmem:[%s218 + $0x60] sm:$0xff] %vm497, %v483
        %511 = vst.msk [vmem:[%s218 + $0x68] sm:$0xff] %vm497, %v486
        %512 = vst.msk [vmem:[%s218 + $0x70] sm:$0xff] %vm497, %v491
        %513 = vst.msk [vmem:[%s218 + $0x78] sm:$0xff] %vm497, %v494
      $region40: #{_lambda_.3} parent=31 // pred_fallthru
        _
      %p514 = scmp.lt.s32.totalorder %s18, 1
      %s515 = scalar_select %p514, %s18, 1
      %s516 = smul.addr %s515, 16
      %s517 = smul.addr %s516, 8
      %s518 = scalar_lea.vmem %s3, %s517
      // Predicated region
      $region41: #{_lambda_.3} parent=31 // pred_check
        %p519 = pneg %p114
      $region42: #{_lambda_.3} parent=31 // pred_check_branch
        %521 = sbr.rel (%p519) target = $region44
      $region43: #{_lambda_.3} parent=31 // pred_region
        _
      $region44: #{_lambda_.3} parent=31 // pred_fallthru
        _
    $region32: #{_lambda_.3} parent=5 // pred_fallthru
      _
    %p522 = scmp.le.s32.totalorder 2, %s9
    // Predicated region
    $region45: #{_lambda_.3} parent=5 // pred_check
      %p523 = pneg %p522
    $region46: #{_lambda_.3} parent=5 // pred_check_branch
      %525 = sbr.rel (%p523) target = $region48
    $region47: #{_lambda_.3} parent=5 // pred_region
      %s526 = ssub.s32 %s9, 2
      // Predicated region
      $region49: #{_lambda_.3} parent=47 // pred_check
        %p527 = pneg %p120
      $region50: #{_lambda_.3} parent=47 // pred_check_branch
        %529 = sbr.rel (%p527) target = $region52
      $region51: #{_lambda_.3} parent=47 // pred_region
        %p530 = scmp.lt.s32.totalorder %s20, 1
        %s531 = scalar_select %p530, %s20, 1
        %s532 = smul.addr %s531, 16
        %s533 = smul.addr %s532, 8
        %s534 = scalar_lea.vmem %s3, %s533
      $region52: #{_lambda_.3} parent=47 // pred_fallthru
        _
    $region48: #{_lambda_.3} parent=5 // pred_fallthru
      _
  $region6: #{_lambda_.3} parent=0 // loop_footer
    %s13 = sadd.s32 1, %s9
  $region7: #{_lambda_.3} parent=0 // loop_footer_branch
    %8 = sbr.rel target = $region3
  $region8: #{_lambda_.3} parent=0 // loop_exit
    _

// kernel: _lambda_.4
$region0: #{_lambda_.4}
  #allocation0 [shape = 'u32[]', space=smem, size = 0x4, offset = 0x4, fixed_abs, tag = 'smem constant byte address 0x4 - core index']
  #allocation1 [shape = 'u32[144,128]{1,0:T(1,128)}', space=vmem, size = 0x12000, scoped, tag = 'internal scratch']
  %s0 = inlined_call_operand.vmem [shape: f32[8,128], index: 0, kind: input, shape index: {}]
  %s1 = inlined_call_operand.vmem [shape: f32[2,1,128], index: 1, kind: input, shape index: {}]
  %s2 = inlined_call_operand.vmem [shape: bf16[128,256], index: 2, kind: input, shape index: {}]
  %s3 = inlined_call_operand.vmem [shape: f32[1,256], index: 3, kind: input, shape index: {}]
  %s4 = inlined_call_operand.vmem [shape: bf16[128,128], index: 4, kind: input, shape index: {}]
  %s5 = inlined_call_operand.vmem [shape: f32[1,128], index: 5, kind: input, shape index: {}]
  %s6 = inlined_call_operand.vmem [shape: bf16[128,128], index: 6, kind: input, shape index: {}]
  %s7 = inlined_call_operand.vmem [shape: f32[1,128], index: 7, kind: input, shape index: {}]
  %s8 = inlined_call_operand.vmem [shape: bf16[384,128], index: 8, kind: input, shape index: {}]
  %s9 = inlined_call_operand.vmem [shape: f32[1,128], index: 9, kind: input, shape index: {}]
  %s10 = inlined_call_operand.vmem [shape: f32[1,128], index: 10, kind: input, shape index: {}]
  %s11 = inlined_call_operand.vmem [shape: f32[2,8,128], index: 11, kind: output, shape index: {}]
  %s12 = sld [smem:[#allocation0]]
  $region77: #{_lambda_.4} parent=0
    _
  %s14 = ssub.s32 1, %s12
  %s15 = scalar_select 0, %s14, %s12
  loop: start=0, step=1, limit=4
  $region2: #{_lambda_.4} parent=0 // loop_pre_header
    _
  $region3: #{_lambda_.4} parent=0 // loop_header
    %s17 = sphi 0, %s21
    %p18 = scmp.ge.s32.totalorder %s17, 4
    %s24 = sphi 0, %s36
    %s25 = sphi 0, %s32
    %s26 = sphi 0, %s24
    %s27 = sphi 0, %s25
    %s28 = sphi 0, %s26
    %s29 = sphi 0, %s27
    %s39 = sphi 0, %s41
    %s42 = sphi 0, %s39
    %s43 = sphi 0, %s42
    %s59 = sphi 0, %s43
    %s65 = sphi 0, %s67
    %s68 = sphi 0, %s65
    %s69 = sphi 0, %s68
    %s85 = sphi 0, %s69
    %s89 = sphi 0, %s89
    %s91 = sphi 0, %s89
    %s92 = sphi 0, %s91
    %s106 = sphi 0, %s92
    %s110 = sphi 0, %s110
    %s112 = sphi 0, %s110
    %s113 = sphi 0, %s112
    %s127 = sphi 0, %s113
    %s131 = sphi 0, %s131
    %s133 = sphi 0, %s131
    %s134 = sphi 0, %s133
    %s148 = sphi 0, %s134
    %s152 = sphi 0, %s152
    %s154 = sphi 0, %s152
    %s155 = sphi 0, %s154
    %s169 = sphi 0, %s155
    %s173 = sphi 0, %s173
    %s175 = sphi 0, %s173
    %s176 = sphi 0, %s175
    %s190 = sphi 0, %s176
    %s194 = sphi 0, %s194
    %s196 = sphi 0, %s194
    %s197 = sphi 0, %s196
    %s211 = sphi 0, %s197
    %s215 = sphi 0, %s215
    %s217 = sphi 0, %s215
    %s218 = sphi 0, %s217
    %s232 = sphi 0, %s218
    %s236 = sphi 0, %s236
    %s238 = sphi 0, %s236
    %s239 = sphi 0, %s238
    %s253 = sphi 0, %s239
    %s257 = sphi 0, %s257
    %s259 = sphi 0, %s257
    %s260 = sphi 0, %s259
    %s274 = sphi 0, %s260
    %s282 = sphi 0, %s284
    %s285 = sphi 0, %s282
    %s286 = sphi 0, %s285
    %s302 = sphi 0, %s286
  $region4: #{_lambda_.4} parent=0 // loop_header_branch
    %20 = sbr.rel (%p18) target = $region8
  $region5: #{_lambda_.4} parent=0 // loop_body
    %s22 = ssub.s32 %s17, 1
    %s23 = ssub.s32 %s17, 2
    %s30 = sadd.s32 1, %s25
    %p31 = scmp.ge.s32.totalorder %s30, 1
    %s32 = scalar_select %p31, 0, %s30
    %s33 = sadd.s32 1, %s24
    %s34 = scalar_select %p31, %s33, %s24
    %p35 = scmp.ge.s32.totalorder %s34, 2
    %s36 = scalar_select %p35, 0, %s34
    %s37 = ssub.s32 %s25, %s32
    %p38 = scmp.eq.s32.totalorder %s37, 0
    %s40 = sadd.s32 %s39, 1
    %s41 = scalar_select %p38, %s39, %s40
    %p44 = pneg %p38
    %p45 = scmp.eq.s32.totalorder %s17, 1
    %p46 = por %p44, %p45
    %p47 = scmp.ne.s32.totalorder %s39, %s42
    %p48 = scmp.eq.s32.totalorder %s17, 0
    %p49 = por %p47, %p48
    %p50 = scmp.ne.s32.totalorder %s39, %s42
    %p51 = scmp.eq.s32.totalorder %s22, 1
    %p52 = por %p50, %p51
    %p53 = scmp.ne.s32.totalorder %s42, %s43
    %p54 = scmp.eq.s32.totalorder %s22, 0
    %p55 = por %p53, %p54
    %p56 = scmp.ne.s32.totalorder %s42, %s43
    %p57 = scmp.eq.s32.totalorder %s23, 1
    %p58 = por %p56, %p57
    %p60 = scmp.ne.s32.totalorder %s43, %s59
    %p61 = scmp.eq.s32.totalorder %s23, 0
    %p62 = por %p60, %p61
    %s63 = ssub.s32 %s24, %s36
    %p64 = scmp.eq.s32.totalorder %s63, 0
    %s66 = sadd.s32 %s65, 1
    %s67 = scalar_select %p64, %s65, %s66
    %p70 = pneg %p64
    %p71 = scmp.eq.s32.totalorder %s17, 1
    %p72 = por %p70, %p71
    %p73 = scmp.ne.s32.totalorder %s65, %s68
    %p74 = scmp.eq.s32.totalorder %s17, 0
    %p75 = por %p73, %p74
    %p76 = scmp.ne.s32.totalorder %s65, %s68
    %p77 = scmp.eq.s32.totalorder %s22, 1
    %p78 = por %p76, %p77
    %p79 = scmp.ne.s32.totalorder %s68, %s69
    %p80 = scmp.eq.s32.totalorder %s22, 0
    %p81 = por %p79, %p80
    %p82 = scmp.ne.s32.totalorder %s68, %s69
    %p83 = scmp.eq.s32.totalorder %s23, 1
    %p84 = por %p82, %p83
    %p86 = scmp.ne.s32.totalorder %s69, %s85
    %p87 = scmp.eq.s32.totalorder %s23, 0
    %p88 = por %p86, %p87
    %s90 = sadd.s32 %s89, 1
    %p93 = scmp.eq.s32.totalorder %s17, 1
    %p94 = scmp.ne.s32.totalorder %s89, %s91
    %p95 = scmp.eq.s32.totalorder %s17, 0
    %p96 = por %p94, %p95
    %p97 = scmp.ne.s32.totalorder %s89, %s91
    %p98 = scmp.eq.s32.totalorder %s22, 1
    %p99 = por %p97, %p98
    %p100 = scmp.ne.s32.totalorder %s91, %s92
    %p101 = scmp.eq.s32.totalorder %s22, 0
    %p102 = por %p100, %p101
    %p103 = scmp.ne.s32.totalorder %s91, %s92
    %p104 = scmp.eq.s32.totalorder %s23, 1
    %p105 = por %p103, %p104
    %p107 = scmp.ne.s32.totalorder %s92, %s106
    %p108 = scmp.eq.s32.totalorder %s23, 0
    %p109 = por %p107, %p108
    %s111 = sadd.s32 %s110, 1
    %p114 = scmp.eq.s32.totalorder %s17, 1
    %p115 = scmp.ne.s32.totalorder %s110, %s112
    %p116 = scmp.eq.s32.totalorder %s17, 0
    %p117 = por %p115, %p116
    %p118 = scmp.ne.s32.totalorder %s110, %s112
    %p119 = scmp.eq.s32.totalorder %s22, 1
    %p120 = por %p118, %p119
    %p121 = scmp.ne.s32.totalorder %s112, %s113
    %p122 = scmp.eq.s32.totalorder %s22, 0
    %p123 = por %p121, %p122
    %p124 = scmp.ne.s32.totalorder %s112, %s113
    %p125 = scmp.eq.s32.totalorder %s23, 1
    %p126 = por %p124, %p125
    %p128 = scmp.ne.s32.totalorder %s113, %s127
    %p129 = scmp.eq.s32.totalorder %s23, 0
    %p130 = por %p128, %p129
    %s132 = sadd.s32 %s131, 1
    %p135 = scmp.eq.s32.totalorder %s17, 1
    %p136 = scmp.ne.s32.totalorder %s131, %s133
    %p137 = scmp.eq.s32.totalorder %s17, 0
    %p138 = por %p136, %p137
    %p139 = scmp.ne.s32.totalorder %s131, %s133
    %p140 = scmp.eq.s32.totalorder %s22, 1
    %p141 = por %p139, %p140
    %p142 = scmp.ne.s32.totalorder %s133, %s134
    %p143 = scmp.eq.s32.totalorder %s22, 0
    %p144 = por %p142, %p143
    %p145 = scmp.ne.s32.totalorder %s133, %s134
    %p146 = scmp.eq.s32.totalorder %s23, 1
    %p147 = por %p145, %p146
    %p149 = scmp.ne.s32.totalorder %s134, %s148
    %p150 = scmp.eq.s32.totalorder %s23, 0
    %p151 = por %p149, %p150
    %s153 = sadd.s32 %s152, 1
    %p156 = scmp.eq.s32.totalorder %s17, 1
    %p157 = scmp.ne.s32.totalorder %s152, %s154
    %p158 = scmp.eq.s32.totalorder %s17, 0
    %p159 = por %p157, %p158
    %p160 = scmp.ne.s32.totalorder %s152, %s154
    %p161 = scmp.eq.s32.totalorder %s22, 1
    %p162 = por %p160, %p161
    %p163 = scmp.ne.s32.totalorder %s154, %s155
    %p164 = scmp.eq.s32.totalorder %s22, 0
    %p165 = por %p163, %p164
    %p166 = scmp.ne.s32.totalorder %s154, %s155
    %p167 = scmp.eq.s32.totalorder %s23, 1
    %p168 = por %p166, %p167
    %p170 = scmp.ne.s32.totalorder %s155, %s169
    %p171 = scmp.eq.s32.totalorder %s23, 0
    %p172 = por %p170, %p171
    %s174 = sadd.s32 %s173, 1
    %p177 = scmp.eq.s32.totalorder %s17, 1
    %p178 = scmp.ne.s32.totalorder %s173, %s175
    %p179 = scmp.eq.s32.totalorder %s17, 0
    %p180 = por %p178, %p179
    %p181 = scmp.ne.s32.totalorder %s173, %s175
    %p182 = scmp.eq.s32.totalorder %s22, 1
    %p183 = por %p181, %p182
    %p184 = scmp.ne.s32.totalorder %s175, %s176
    %p185 = scmp.eq.s32.totalorder %s22, 0
    %p186 = por %p184, %p185
    %p187 = scmp.ne.s32.totalorder %s175, %s176
    %p188 = scmp.eq.s32.totalorder %s23, 1
    %p189 = por %p187, %p188
    %p191 = scmp.ne.s32.totalorder %s176, %s190
    %p192 = scmp.eq.s32.totalorder %s23, 0
    %p193 = por %p191, %p192
    %s195 = sadd.s32 %s194, 1
    %p198 = scmp.eq.s32.totalorder %s17, 1
    %p199 = scmp.ne.s32.totalorder %s194, %s196
    %p200 = scmp.eq.s32.totalorder %s17, 0
    %p201 = por %p199, %p200
    %p202 = scmp.ne.s32.totalorder %s194, %s196
    %p203 = scmp.eq.s32.totalorder %s22, 1
    %p204 = por %p202, %p203
    %p205 = scmp.ne.s32.totalorder %s196, %s197
    %p206 = scmp.eq.s32.totalorder %s22, 0
    %p207 = por %p205, %p206
    %p208 = scmp.ne.s32.totalorder %s196, %s197
    %p209 = scmp.eq.s32.totalorder %s23, 1
    %p210 = por %p208, %p209
    %p212 = scmp.ne.s32.totalorder %s197, %s211
    %p213 = scmp.eq.s32.totalorder %s23, 0
    %p214 = por %p212, %p213
    %s216 = sadd.s32 %s215, 1
    %p219 = scmp.eq.s32.totalorder %s17, 1
    %p220 = scmp.ne.s32.totalorder %s215, %s217
    %p221 = scmp.eq.s32.totalorder %s17, 0
    %p222 = por %p220, %p221
    %p223 = scmp.ne.s32.totalorder %s215, %s217
    %p224 = scmp.eq.s32.totalorder %s22, 1
    %p225 = por %p223, %p224
    %p226 = scmp.ne.s32.totalorder %s217, %s218
    %p227 = scmp.eq.s32.totalorder %s22, 0
    %p228 = por %p226, %p227
    %p229 = scmp.ne.s32.totalorder %s217, %s218
    %p230 = scmp.eq.s32.totalorder %s23, 1
    %p231 = por %p229, %p230
    %p233 = scmp.ne.s32.totalorder %s218, %s232
    %p234 = scmp.eq.s32.totalorder %s23, 0
    %p235 = por %p233, %p234
    %s237 = sadd.s32 %s236, 1
    %p240 = scmp.eq.s32.totalorder %s17, 1
    %p241 = scmp.ne.s32.totalorder %s236, %s238
    %p242 = scmp.eq.s32.totalorder %s17, 0
    %p243 = por %p241, %p242
    %p244 = scmp.ne.s32.totalorder %s236, %s238
    %p245 = scmp.eq.s32.totalorder %s22, 1
    %p246 = por %p244, %p245
    %p247 = scmp.ne.s32.totalorder %s238, %s239
    %p248 = scmp.eq.s32.totalorder %s22, 0
    %p249 = por %p247, %p248
    %p250 = scmp.ne.s32.totalorder %s238, %s239
    %p251 = scmp.eq.s32.totalorder %s23, 1
    %p252 = por %p250, %p251
    %p254 = scmp.ne.s32.totalorder %s239, %s253
    %p255 = scmp.eq.s32.totalorder %s23, 0
    %p256 = por %p254, %p255
    %s258 = sadd.s32 %s257, 1
    %p261 = scmp.eq.s32.totalorder %s17, 1
    %p262 = scmp.ne.s32.totalorder %s257, %s259
    %p263 = scmp.eq.s32.totalorder %s17, 0
    %p264 = por %p262, %p263
    %p265 = scmp.ne.s32.totalorder %s257, %s259
    %p266 = scmp.eq.s32.totalorder %s22, 1
    %p267 = por %p265, %p266
    %p268 = scmp.ne.s32.totalorder %s259, %s260
    %p269 = scmp.eq.s32.totalorder %s22, 0
    %p270 = por %p268, %p269
    %p271 = scmp.ne.s32.totalorder %s259, %s260
    %p272 = scmp.eq.s32.totalorder %s23, 1
    %p273 = por %p271, %p272
    %p275 = scmp.ne.s32.totalorder %s260, %s274
    %p276 = scmp.eq.s32.totalorder %s23, 0
    %p277 = por %p275, %p276
    %s278 = ssub.s32 %s24, %s36
    %s279 = ssub.s32 %s25, %s32
    %s280 = sor.u32 %s278, %s279
    %p281 = scmp.eq.s32.totalorder %s280, 0
    %s283 = sadd.s32 %s282, 1
    %s284 = scalar_select %p281, %s282, %s283
    %p287 = pneg %p281
    %p288 = scmp.eq.s32.totalorder %s17, 1
    %p289 = por %p287, %p288
    %p290 = scmp.ne.s32.totalorder %s282, %s285
    %p291 = scmp.eq.s32.totalorder %s17, 0
    %p292 = por %p290, %p291
    %p293 = scmp.ne.s32.totalorder %s282, %s285
    %p294 = scmp.eq.s32.totalorder %s22, 1
    %p295 = por %p293, %p294
    %p296 = scmp.ne.s32.totalorder %s285, %s286
    %p297 = scmp.eq.s32.totalorder %s22, 0
    %p298 = por %p296, %p297
    %p299 = scmp.ne.s32.totalorder %s285, %s286
    %p300 = scmp.eq.s32.totalorder %s23, 1
    %p301 = por %p299, %p300
    %p303 = scmp.ne.s32.totalorder %s286, %s302
    %p304 = scmp.eq.s32.totalorder %s23, 0
    %p305 = por %p303, %p304
    %p306 = scmp.le.s32.totalorder 1, %s17
    %p307 = scmp.lt.s32.totalorder %s17, 3
    %p308 = pnand %p306, %p307
    %p309 = pneg %p308
    // Predicated region
    $region9: #{_lambda_.4} parent=5 // pred_check
      _
    $region10: #{_lambda_.4} parent=5 // pred_check_branch
      %311 = sbr.rel (%p308) target = $region12
    $region11: #{_lambda_.4} parent=5 // pred_region
      %s312 = ssub.s32 %s17, 1
      // Predicated region
      $region13: #{_lambda_.4} parent=11 // pred_check
        %p313 = pneg %p55
      $region14: #{_lambda_.4} parent=11 // pred_check_branch
        %315 = sbr.rel (%p313) target = $region16
      $region15: #{_lambda_.4} parent=11 // pred_region
        %p316 = scmp.lt.s32.totalorder %s27, 0
        %s317 = scalar_select %p316, %s27, 0
        %s318 = smul.addr %s317, 8
        %s319 = scalar_lea.vmem %s0, %s318
      $region16: #{_lambda_.4} parent=11 // pred_fallthru
        _
      // Predicated region
      $region17: #{_lambda_.4} parent=11 // pred_check
        %p320 = pneg %p102
      $region18: #{_lambda_.4} parent=11 // pred_check_branch
        %322 = sbr.rel (%p320) target = $region20
      $region19: #{_lambda_.4} parent=11 // pred_region
        _
      $region20: #{_lambda_.4} parent=11 // pred_fallthru
        _
      // Predicated region
      $region21: #{_lambda_.4} parent=11 // pred_check
        %p323 = pneg %p123
      $region22: #{_lambda_.4} parent=11 // pred_check_branch
        %325 = sbr.rel (%p323) target = $region24
      $region23: #{_lambda_.4} parent=11 // pred_region
        _
      $region24: #{_lambda_.4} parent=11 // pred_fallthru
        _
      // Predicated region
      $region25: #{_lambda_.4} parent=11 // pred_check
        %p326 = pneg %p144
      $region26: #{_lambda_.4} parent=11 // pred_check_branch
        %328 = sbr.rel (%p326) target = $region28
      $region27: #{_lambda_.4} parent=11 // pred_region
        _
      $region28: #{_lambda_.4} parent=11 // pred_fallthru
        _
      // Predicated region
      $region29: #{_lambda_.4} parent=11 // pred_check
        %p329 = pneg %p165
      $region30: #{_lambda_.4} parent=11 // pred_check_branch
        %331 = sbr.rel (%p329) target = $region32
      $region31: #{_lambda_.4} parent=11 // pred_region
        _
      $region32: #{_lambda_.4} parent=11 // pred_fallthru
        _
      // Predicated region
      $region33: #{_lambda_.4} parent=11 // pred_check
        %p332 = pneg %p186
      $region34: #{_lambda_.4} parent=11 // pred_check_branch
        %334 = sbr.rel (%p332) target = $region36
      $region35: #{_lambda_.4} parent=11 // pred_region
        _
      $region36: #{_lambda_.4} parent=11 // pred_fallthru
        _
      // Predicated region
      $region37: #{_lambda_.4} parent=11 // pred_check
        %p335 = pneg %p207
      $region38: #{_lambda_.4} parent=11 // pred_check_branch
        %337 = sbr.rel (%p335) target = $region40
      $region39: #{_lambda_.4} parent=11 // pred_region
        _
      $region40: #{_lambda_.4} parent=11 // pred_fallthru
        _
      // Predicated region
      $region41: #{_lambda_.4} parent=11 // pred_check
        %p338 = pneg %p228
      $region42: #{_lambda_.4} parent=11 // pred_check_branch
        %340 = sbr.rel (%p338) target = $region44
      $region43: #{_lambda_.4} parent=11 // pred_region
        _
      $region44: #{_lambda_.4} parent=11 // pred_fallthru
        _
      // Predicated region
      $region45: #{_lambda_.4} parent=11 // pred_check
        %p341 = pneg %p249
      $region46: #{_lambda_.4} parent=11 // pred_check_branch
        %343 = sbr.rel (%p341) target = $region48
      $region47: #{_lambda_.4} parent=11 // pred_region
        _
      $region48: #{_lambda_.4} parent=11 // pred_fallthru
        _
      // Predicated region
      $region49: #{_lambda_.4} parent=11 // pred_check
        %p344 = pneg %p270
      $region50: #{_lambda_.4} parent=11 // pred_check_branch
        %346 = sbr.rel (%p344) target = $region52
      $region51: #{_lambda_.4} parent=11 // pred_region
        _
      $region52: #{_lambda_.4} parent=11 // pred_fallthru
        _
    $region12: #{_lambda_.4} parent=5 // pred_fallthru
      _
    %p347 = scmp.lt.s32.totalorder %s17, 2
    // Predicated region
    $region53: #{_lambda_.4} parent=5 // pred_check
      %p348 = pneg %p347
    $region54: #{_lambda_.4} parent=5 // pred_check_branch
      %350 = sbr.rel (%p348) target = $region56
    $region55: #{_lambda_.4} parent=5 // pred_region
      // Predicated region
      $region57: #{_lambda_.4} parent=55 // pred_check
        %p351 = pneg %p75
      $region58: #{_lambda_.4} parent=55 // pred_check_branch
        %353 = sbr.rel (%p351) target = $region60
      $region59: #{_lambda_.4} parent=55 // pred_region
        %p354 = scmp.lt.s32.totalorder %s24, 1
        %s355 = scalar_select %p354, %s24, 1
        %s356 = scalar_lea.vmem %s1, %s355
      $region60: #{_lambda_.4} parent=55 // pred_fallthru
        _
    $region56: #{_lambda_.4} parent=5 // pred_fallthru
      _
    %p357 = scmp.le.s32.totalorder 1, %s17
    %p358 = scmp.lt.s32.totalorder %s17, 3
    %p359 = pnand %p357, %p358
    %p360 = pneg %p359
    // Predicated region
    $region61: #{_lambda_.4} parent=5 // pred_check
      _
    $region62: #{_lambda_.4} parent=5 // pred_check_branch
      %362 = sbr.rel (%p359) target = $region64
    $region63: #{_lambda_.4} parent=5 // pred_region
      %s363 = ssub.s32 %s17, 1
      %p364 = scmp.lt.s32.totalorder %s27, 0
      %s365 = scalar_select %p364, %s27, 0
      %s366 = smul.addr %s365, 8
      %s367 = scalar_lea.vmem %s0, %s366
      %p368 = pneg %p55
      %p369 = pneg %p52
      %p370 = scmp.lt.s32.totalorder %s26, 1
      %s371 = scalar_select %p370, %s26, 1
      %s372 = scalar_lea.vmem %s1, %s371
      %p373 = pneg %p81
      %p374 = pneg %p78
      %p375 = pneg %p102
      %p376 = pneg %p99
      %p377 = pneg %p123
      %p378 = pneg %p120
      %p379 = pneg %p144
      %p380 = pneg %p141
      %p381 = pneg %p165
      %p382 = pneg %p162
      %p383 = pneg %p186
      %p384 = pneg %p183
      %p385 = pneg %p207
      %p386 = pneg %p204
      %p387 = pneg %p228
      %p388 = pneg %p225
      %p389 = pneg %p249
      %p390 = pneg %p246
      %p391 = pneg %p270
      %p392 = pneg %p267
      %p393 = pneg %p298
      %p394 = pneg %p295
      %p395 = scmp.lt.s32.totalorder %s26, 1
      %s396 = scalar_select %p395, %s26, 1
      %p397 = scmp.lt.s32.totalorder %s27, 0
      %s398 = scalar_select %p397, %s27, 0
      %s399 = sadd.s32 %s398, %s396
      %s400 = smul.addr %s399, 8
      %s401 = scalar_lea.vmem %s11, %s400
      %p402 = scmp.lt.s32.totalorder %s27, 0
      %s403 = scalar_select %p402, %s27, 0
      %s404 = smul.addr %s403, 8
      %s405 = scalar_lea.vmem %s0, %s404
      %p406 = scmp.lt.s32.totalorder %s26, 1
      %s407 = scalar_select %p406, %s26, 1
      %s408 = scalar_lea.vmem %s1, %s407
      %p409 = scmp.lt.s32.totalorder %s26, 1
      %s410 = scalar_select %p409, %s26, 1
      %p411 = scmp.lt.s32.totalorder %s27, 0
      %s412 = scalar_select %p411, %s27, 0
      %s413 = sadd.s32 %s412, %s410
      %s414 = smul.addr %s413, 8
      %s415 = scalar_lea.vmem %s11, %s414
      %v417 = vld [vmem:[%s405] sm:$0xff]
      %v418 = vld [vmem:[%s408] sm:$0x1]
      %v420 = vlaneseq
      %v421 = vshrl.u32 %v420, 7
      %v422 = vsub.s32 0, %v421
      %v423 = vrot.slane %v418, %v422
      %v425 = vadd.f32 %v417, %v423
      %v426 = vtanh.pop %v425
      %v427 = vpack.c.bf16 %v426, %v426
      %v428 = vld [vmem:[%s2] sm:$0xff]
      %v429 = vld [vmem:[%s2 + $0x8] sm:$0xff]
      %v430 = vld [vmem:[%s2 + $0x10] sm:$0xff]
      %v431 = vld [vmem:[%s2 + $0x18] sm:$0xff]
      %v432 = vld [vmem:[%s2 + $0x20] sm:$0xff]
      %v433 = vld [vmem:[%s2 + $0x28] sm:$0xff]
      %v434 = vld [vmem:[%s2 + $0x30] sm:$0xff]
      %v435 = vld [vmem:[%s2 + $0x38] sm:$0xff]
      %v436 = vld [vmem:[%s2 + $0x40] sm:$0xff]
      %v437 = vld [vmem:[%s2 + $0x48] sm:$0xff]
      %v438 = vld [vmem:[%s2 + $0x50] sm:$0xff]
      %v439 = vld [vmem:[%s2 + $0x58] sm:$0xff]
      %v440 = vld [vmem:[%s2 + $0x60] sm:$0xff]
      %v441 = vld [vmem:[%s2 + $0x68] sm:$0xff]
      %v442 = vld [vmem:[%s2 + $0x70] sm:$0xff]
      %v443 = vld [vmem:[%s2 + $0x78] sm:$0xff]
      %v444 = vld [vmem:[%s3] sm:$0x3]
      %v446 = vlaneseq
      %v447 = vshrl.u32 %v446, 7
      %v448 = vsub.s32 0, %v447
      %v449 = vrot.slane %v444, %v448
      %v450 = vlaneseq
      %v451 = vshrl.u32 %v450, 7
      %v452 = vsub.s32 1, %v451
      %v453 = vrot.slane %v444, %v452
      %v472 = vunpack.c.l.b16 %v428
      %v473 = vunpack.c.h.b16 %v428
      %v474 = vunpack.c.l.b16 %v429
      %v475 = vunpack.c.h.b16 %v429
      %v476 = vunpack.c.l.b16 %v430
      %v477 = vunpack.c.h.b16 %v430
      %v478 = vunpack.c.l.b16 %v431
      %v479 = vunpack.c.h.b16 %v431
      %v480 = vunpack.c.l.b16 %v432
      %v481 = vunpack.c.h.b16 %v432
      %v482 = vunpack.c.l.b16 %v433
      %v483 = vunpack.c.h.b16 %v433
      %v484 = vunpack.c.l.b16 %v434
      %v485 = vunpack.c.h.b16 %v434
      %v486 = vunpack.c.l.b16 %v435
      %v487 = vunpack.c.h.b16 %v435
      %v488 = vunpack.c.l.b16 %v436
      %v489 = vunpack.c.h.b16 %v436
      %v490 = vunpack.c.l.b16 %v437
      %v491 = vunpack.c.h.b16 %v437
      %v492 = vunpack.c.l.b16 %v438
      %v493 = vunpack.c.h.b16 %v438
      %v494 = vunpack.c.l.b16 %v439
      %v495 = vunpack.c.h.b16 %v439
      %v496 = vunpack.c.l.b16 %v440
      %v497 = vunpack.c.h.b16 %v440
      %v498 = vunpack.c.l.b16 %v441
      %v499 = vunpack.c.h.b16 %v441
      %v500 = vunpack.c.l.b16 %v442
      %v501 = vunpack.c.h.b16 %v442
      %v502 = vunpack.c.l.b16 %v443
      %v503 = vunpack.c.h.b16 %v443
      %v504 = vpack.c.b16 %v474, %v472
      %v505 = vpack.c.b16 %v475, %v473
      %v506 = vpack.c.b16 %v478, %v476
      %v507 = vpack.c.b16 %v479, %v477
      %v508 = vpack.c.b16 %v482, %v480
      %v509 = vpack.c.b16 %v483, %v481
      %v510 = vpack.c.b16 %v486, %v484
      %v511 = vpack.c.b16 %v487, %v485
      %v512 = vpack.c.b16 %v490, %v488
      %v513 = vpack.c.b16 %v491, %v489
      %v514 = vpack.c.b16 %v494, %v492
      %v515 = vpack.c.b16 %v495, %v493
      %v516 = vpack.c.b16 %v498, %v496
      %v517 = vpack.c.b16 %v499, %v497
      %v518 = vpack.c.b16 %v502, %v500
      %v519 = vpack.c.b16 %v503, %v501
      %536 = vmatprep.subr.bf16.mxu0 %v519
      %537 = vmatpush1.bf16.msra.mxu0 %v518
      %538 = vmatprep.subr.bf16.mxu0 %v517
      %539 = vmatpush1.bf16.msra.mxu0 %v516
      %540 = vmatprep.subr.bf16.mxu0 %v515
      %541 = vmatpush1.bf16.msra.mxu0 %v514
      %542 = vmatprep.subr.bf16.mxu0 %v513
      %543 = vmatpush1.bf16.msra.mxu0 %v512
      %544 = vmatprep.subr.bf16.mxu0 %v511
      %545 = vmatpush1.bf16.msra.mxu0 %v510
      %546 = vmatprep.subr.bf16.mxu0 %v509
      %547 = vmatpush1.bf16.msra.mxu0 %v508
      %548 = vmatprep.subr.bf16.mxu0 %v507
      %549 = vmatpush1.bf16.msra.mxu0 %v506
      %550 = vmatprep.subr.bf16.mxu0 %v505
      %551 = vmatpush1.bf16.msra.mxu0 %v504
      %552 = vmatprep.subr.bf16.mxu0 0
      %553 = vmatpush2.bf16.msra.mxu0 0
      %554 = vmatprep.subr.bf16.mxu0 0
      %555 = vmatpush2.bf16.msra.mxu0 0
      %556 = vmatprep.subr.bf16.mxu0 0
      %557 = vmatpush2.bf16.msra.mxu0 0
      %558 = vmatprep.subr.bf16.mxu0 0
      %559 = vmatpush2.bf16.msra.mxu0 0
      %560 = vmatprep.subr.bf16.mxu0 0
      %561 = vmatpush2.bf16.msra.mxu0 0
      %562 = vmatprep.subr.bf16.mxu0 0
      %563 = vmatpush2.bf16.msra.mxu0 0
      %564 = vmatprep.subr.bf16.mxu0 0
      %565 = vmatpush2.bf16.msra.mxu0 0
      %566 = vmatprep.subr.bf16.mxu0 0
      %567 = vmatpush2.bf16.msra.mxu0 0
      %568 = vmatprep.mubr.bf16.mxu0 0
      %569 = vmatmul.mubr.bf16.gmra.mxu0 %v427
      %v570 = vpop.f32.mrf.mxu0
      %v571 = vadd.f32 %v449, %v570
      %v572 = vpop.f32.mrf.mxu0
      %v573 = vadd.f32 %v453, %v572
      %v574 = vpop.f32.mrf.mxu0
      %v575 = vpop.f32.mrf.mxu0
      %576 = vdwg.mxu0
      %v577 = vmax.f32 %v571, 0.0
      %v578 = vmax.f32 %v573, 0.0
      %v579 = vpack.c.bf16 %v577, %v577
      %v580 = vld [vmem:[%s4] sm:$0xf]
      %v581 = vld [vmem:[%s4 + $0x4] sm:$0xf]
      %v582 = vld [vmem:[%s4 + $0x8] sm:$0xf]
      %v583 = vld [vmem:[%s4 + $0xc] sm:$0xf]
      %v584 = vld [vmem:[%s4 + $0x10] sm:$0xf]
      %v585 = vld [vmem:[%s4 + $0x14] sm:$0xf]
      %v586 = vld [vmem:[%s4 + $0x18] sm:$0xf]
      %v587 = vld [vmem:[%s4 + $0x1c] sm:$0xf]
      %v588 = vld [vmem:[%s4 + $0x20] sm:$0xf]
      %v589 = vld [vmem:[%s4 + $0x24] sm:$0xf]
      %v590 = vld [vmem:[%s4 + $0x28] sm:$0xf]
      %v591 = vld [vmem:[%s4 + $0x2c] sm:$0xf]
      %v592 = vld [vmem:[%s4 + $0x30] sm:$0xf]
      %v593 = vld [vmem:[%s4 + $0x34] sm:$0xf]
      %v594 = vld [vmem:[%s4 + $0x38] sm:$0xf]
      %v595 = vld [vmem:[%s4 + $0x3c] sm:$0xf]
      %v596 = vld [vmem:[%s5] sm:$0x1]
      %v598 = vlaneseq
      %v599 = vshrl.u32 %v598, 7
      %v600 = vsub.s32 0, %v599
      %v601 = vrot.slane %v596, %v600
      %v619 = vunpack.c.l.b16 %v580
      %v620 = vunpack.c.l.b16 %v581
      %v621 = vunpack.c.l.b16 %v582
      %v622 = vunpack.c.l.b16 %v583
      %v623 = vunpack.c.l.b16 %v584
      %v624 = vunpack.c.l.b16 %v585
      %v625 = vunpack.c.l.b16 %v586
      %v626 = vunpack.c.l.b16 %v587
      %v627 = vunpack.c.l.b16 %v588
      %v628 = vunpack.c.l.b16 %v589
      %v629 = vunpack.c.l.b16 %v590
      %v630 = vunpack.c.l.b16 %v591
      %v631 = vunpack.c.l.b16 %v592
      %v632 = vunpack.c.l.b16 %v593
      %v633 = vunpack.c.l.b16 %v594
      %v634 = vunpack.c.l.b16 %v595
      %v635 = vpack.c.b16 %v620, %v619
      %v636 = vpack.c.b16 %v622, %v621
      %v637 = vpack.c.b16 %v624, %v623
      %v638 = vpack.c.b16 %v626, %v625
      %v639 = vpack.c.b16 %v628, %v627
      %v640 = vpack.c.b16 %v630, %v629
      %v641 = vpack.c.b16 %v632, %v631
      %v642 = vpack.c.b16 %v634, %v633
      %651 = vmatprep.subr.bf16.mxu0 0
      %652 = vmatpush1.bf16.msra.mxu0 %v642
      %653 = vmatprep.subr.bf16.mxu0 0
      %654 = vmatpush1.bf16.msra.mxu0 %v641
      %655 = vmatprep.subr.bf16.mxu0 0
      %656 = vmatpush1.bf16.msra.mxu0 %v640
      %657 = vmatprep.subr.bf16.mxu0 0
      %658 = vmatpush1.bf16.msra.mxu0 %v639
      %659 = vmatprep.subr.bf16.mxu0 0
      %660 = vmatpush1.bf16.msra.mxu0 %v638
      %661 = vmatprep.subr.bf16.mxu0 0
      %662 = vmatpush1.bf16.msra.mxu0 %v637
      %663 = vmatprep.subr.bf16.mxu0 0
      %664 = vmatpush1.bf16.msra.mxu0 %v636
      %665 = vmatprep.subr.bf16.mxu0 0
      %666 = vmatpush1.bf16.msra.mxu0 %v635
      %667 = vmatprep.subr.bf16.mxu0 0
      %668 = vmatpush2.bf16.msra.mxu0 0
      %669 = vmatprep.subr.bf16.mxu0 0
      %670 = vmatpush2.bf16.msra.mxu0 0
      %671 = vmatprep.subr.bf16.mxu0 0
      %672 = vmatpush2.bf16.msra.mxu0 0
      %673 = vmatprep.subr.bf16.mxu0 0
      %674 = vmatpush2.bf16.msra.mxu0 0
      %675 = vmatprep.subr.bf16.mxu0 0
      %676 = vmatpush2.bf16.msra.mxu0 0
      %677 = vmatprep.subr.bf16.mxu0 0
      %678 = vmatpush2.bf16.msra.mxu0 0
      %679 = vmatprep.subr.bf16.mxu0 0
      %680 = vmatpush2.bf16.msra.mxu0 0
      %681 = vmatprep.subr.bf16.mxu0 0
      %682 = vmatpush2.bf16.msra.mxu0 0
      %683 = vmatprep.mubr.bf16.mxu0 0
      %684 = vmatmul.mubr.bf16.gmra.mxu0 %v579
      %v685 = vpop.f32.mrf.mxu0
      %v686 = vadd.f32 %v601, %v685
      %v687 = vpop.f32.mrf.mxu0
      %v688 = vpop.f32.mrf.mxu0
      %v689 = vpop.f32.mrf.mxu0
      %690 = vdwg.mxu0
      %v691 = vmax.f32 %v686, 0.0
      %v692 = vpack.c.bf16 %v691, %v691
      %v693 = vpack.c.bf16 %v578, %v578
      %v694 = vld [vmem:[%s6] sm:$0xf]
      %v695 = vld [vmem:[%s6 + $0x4] sm:$0xf]
      %v696 = vld [vmem:[%s6 + $0x8] sm:$0xf]
      %v697 = vld [vmem:[%s6 + $0xc] sm:$0xf]
      %v698 = vld [vmem:[%s6 + $0x10] sm:$0xf]
      %v699 = vld [vmem:[%s6 + $0x14] sm:$0xf]
      %v700 = vld [vmem:[%s6 + $0x18] sm:$0xf]
      %v701 = vld [vmem:[%s6 + $0x1c] sm:$0xf]
      %v702 = vld [vmem:[%s6 + $0x20] sm:$0xf]
      %v703 = vld [vmem:[%s6 + $0x24] sm:$0xf]
      %v704 = vld [vmem:[%s6 + $0x28] sm:$0xf]
      %v705 = vld [vmem:[%s6 + $0x2c] sm:$0xf]
      %v706 = vld [vmem:[%s6 + $0x30] sm:$0xf]
      %v707 = vld [vmem:[%s6 + $0x34] sm:$0xf]
      %v708 = vld [vmem:[%s6 + $0x38] sm:$0xf]
      %v709 = vld [vmem:[%s6 + $0x3c] sm:$0xf]
      %v710 = vld [vmem:[%s7] sm:$0x1]
      %v712 = vlaneseq
      %v713 = vshrl.u32 %v712, 7
      %v714 = vsub.s32 0, %v713
      %v715 = vrot.slane %v710, %v714
      %v733 = vunpack.c.l.b16 %v694
      %v734 = vunpack.c.l.b16 %v695
      %v735 = vunpack.c.l.b16 %v696
      %v736 = vunpack.c.l.b16 %v697
      %v737 = vunpack.c.l.b16 %v698
      %v738 = vunpack.c.l.b16 %v699
      %v739 = vunpack.c.l.b16 %v700
      %v740 = vunpack.c.l.b16 %v701
      %v741 = vunpack.c.l.b16 %v702
      %v742 = vunpack.c.l.b16 %v703
      %v743 = vunpack.c.l.b16 %v704
      %v744 = vunpack.c.l.b16 %v705
      %v745 = vunpack.c.l.b16 %v706
      %v746 = vunpack.c.l.b16 %v707
      %v747 = vunpack.c.l.b16 %v708
      %v748 = vunpack.c.l.b16 %v709
      %v749 = vpack.c.b16 %v734, %v733
      %v750 = vpack.c.b16 %v736, %v735
      %v751 = vpack.c.b16 %v738, %v737
      %v752 = vpack.c.b16 %v740, %v739
      %v753 = vpack.c.b16 %v742, %v741
      %v754 = vpack.c.b16 %v744, %v743
      %v755 = vpack.c.b16 %v746, %v745
      %v756 = vpack.c.b16 %v748, %v747
      %765 = vmatprep.subr.bf16.mxu0 0
      %766 = vmatpush1.bf16.msra.mxu0 %v756
      %767 = vmatprep.subr.bf16.mxu0 0
      %768 = vmatpush1.bf16.msra.mxu0 %v755
      %769 = vmatprep.subr.bf16.mxu0 0
      %770 = vmatpush1.bf16.msra.mxu0 %v754
      %771 = vmatprep.subr.bf16.mxu0 0
      %772 = vmatpush1.bf16.msra.mxu0 %v753
      %773 = vmatprep.subr.bf16.mxu0 0
      %774 = vmatpush1.bf16.msra.mxu0 %v752
      %775 = vmatprep.subr.bf16.mxu0 0
      %776 = vmatpush1.bf16.msra.mxu0 %v751
      %777 = vmatprep.subr.bf16.mxu0 0
      %778 = vmatpush1.bf16.msra.mxu0 %v750
      %779 = vmatprep.subr.bf16.mxu0 0
      %780 = vmatpush1.bf16.msra.mxu0 %v749
      %781 = vmatprep.subr.bf16.mxu0 0
      %782 = vmatpush2.bf16.msra.mxu0 0
      %783 = vmatprep.subr.bf16.mxu0 0
      %784 = vmatpush2.bf16.msra.mxu0 0
      %785 = vmatprep.subr.bf16.mxu0 0
      %786 = vmatpush2.bf16.msra.mxu0 0
      %787 = vmatprep.subr.bf16.mxu0 0
      %788 = vmatpush2.bf16.msra.mxu0 0
      %789 = vmatprep.subr.bf16.mxu0 0
      %790 = vmatpush2.bf16.msra.mxu0 0
      %791 = vmatprep.subr.bf16.mxu0 0
      %792 = vmatpush2.bf16.msra.mxu0 0
      %793 = vmatprep.subr.bf16.mxu0 0
      %794 = vmatpush2.bf16.msra.mxu0 0
      %795 = vmatprep.subr.bf16.mxu0 0
      %796 = vmatpush2.bf16.msra.mxu0 0
      %797 = vmatprep.mubr.bf16.mxu0 0
      %798 = vmatmul.mubr.bf16.gmra.mxu0 %v693
      %v799 = vpop.f32.mrf.mxu0
      %v800 = vadd.f32 %v715, %v799
      %v801 = vpop.f32.mrf.mxu0
      %v802 = vpop.f32.mrf.mxu0
      %v803 = vpop.f32.mrf.mxu0
      %804 = vdwg.mxu0
      %v805 = vmax.f32 %v800, 0.0
      %v806 = vpack.c.bf16 %v805, %v805
      %v807 = vld [vmem:[%s8] sm:$0xf]
      %v808 = vld [vmem:[%s8 + $0x4] sm:$0xf]
      %v809 = vld [vmem:[%s8 + $0x8] sm:$0xf]
      %v810 = vld [vmem:[%s8 + $0xc] sm:$0xf]
      %v811 = vld [vmem:[%s8 + $0x10] sm:$0xf]
      %v812 = vld [vmem:[%s8 + $0x14] sm:$0xf]
      %v813 = vld [vmem:[%s8 + $0x18] sm:$0xf]
      %v814 = vld [vmem:[%s8 + $0x1c] sm:$0xf]
      %v815 = vld [vmem:[%s8 + $0x20] sm:$0xf]
      %v816 = vld [vmem:[%s8 + $0x24] sm:$0xf]
      %v817 = vld [vmem:[%s8 + $0x28] sm:$0xf]
      %v818 = vld [vmem:[%s8 + $0x2c] sm:$0xf]
      %v819 = vld [vmem:[%s8 + $0x30] sm:$0xf]
      %v820 = vld [vmem:[%s8 + $0x34] sm:$0xf]
      %v821 = vld [vmem:[%s8 + $0x38] sm:$0xf]
      %v822 = vld [vmem:[%s8 + $0x3c] sm:$0xf]
      %v823 = vld [vmem:[%s8 + $0x40] sm:$0xf]
      %v824 = vld [vmem:[%s8 + $0x44] sm:$0xf]
      %v825 = vld [vmem:[%s8 + $0x48] sm:$0xf]
      %v826 = vld [vmem:[%s8 + $0x4c] sm:$0xf]
      %v827 = vld [vmem:[%s8 + $0x50] sm:$0xf]
      %v828 = vld [vmem:[%s8 + $0x54] sm:$0xf]
      %v829 = vld [vmem:[%s8 + $0x58] sm:$0xf]
      %v830 = vld [vmem:[%s8 + $0x5c] sm:$0xf]
      %v831 = vld [vmem:[%s8 + $0x60] sm:$0xf]
      %v832 = vld [vmem:[%s8 + $0x64] sm:$0xf]
      %v833 = vld [vmem:[%s8 + $0x68] sm:$0xf]
      %v834 = vld [vmem:[%s8 + $0x6c] sm:$0xf]
      %v835 = vld [vmem:[%s8 + $0x70] sm:$0xf]
      %v836 = vld [vmem:[%s8 + $0x74] sm:$0xf]
      %v837 = vld [vmem:[%s8 + $0x78] sm:$0xf]
      %v838 = vld [vmem:[%s8 + $0x7c] sm:$0xf]
      %v839 = vld [vmem:[%s8 + $0x80] sm:$0xf]
      %v840 = vld [vmem:[%s8 + $0x84] sm:$0xf]
      %v841 = vld [vmem:[%s8 + $0x88] sm:$0xf]
      %v842 = vld [vmem:[%s8 + $0x8c] sm:$0xf]
      %v843 = vld [vmem:[%s8 + $0x90] sm:$0xf]
      %v844 = vld [vmem:[%s8 + $0x94] sm:$0xf]
      %v845 = vld [vmem:[%s8 + $0x98] sm:$0xf]
      %v846 = vld [vmem:[%s8 + $0x9c] sm:$0xf]
      %v847 = vld [vmem:[%s8 + $0xa0] sm:$0xf]
      %v848 = vld [vmem:[%s8 + $0xa4] sm:$0xf]
      %v849 = vld [vmem:[%s8 + $0xa8] sm:$0xf]
      %v850 = vld [vmem:[%s8 + $0xac] sm:$0xf]
      %v851 = vld [vmem:[%s8 + $0xb0] sm:$0xf]
      %v852 = vld [vmem:[%s8 + $0xb4] sm:$0xf]
      %v853 = vld [vmem:[%s8 + $0xb8] sm:$0xf]
      %v854 = vld [vmem:[%s8 + $0xbc] sm:$0xf]
      %v855 = vld [vmem:[%s9] sm:$0x1]
      %v857 = vlaneseq
      %v858 = vshrl.u32 %v857, 7
      %v859 = vsub.s32 0, %v858
      %v860 = vrot.slane %v855, %v859
      %v910 = vunpack.c.l.b16 %v807
      %v911 = vunpack.c.l.b16 %v808
      %v912 = vunpack.c.l.b16 %v809
      %v913 = vunpack.c.l.b16 %v810
      %v914 = vunpack.c.l.b16 %v811
      %v915 = vunpack.c.l.b16 %v812
      %v916 = vunpack.c.l.b16 %v813
      %v917 = vunpack.c.l.b16 %v814
      %v918 = vunpack.c.l.b16 %v815
      %v919 = vunpack.c.l.b16 %v816
      %v920 = vunpack.c.l.b16 %v817
      %v921 = vunpack.c.l.b16 %v818
      %v922 = vunpack.c.l.b16 %v819
      %v923 = vunpack.c.l.b16 %v820
      %v924 = vunpack.c.l.b16 %v821
      %v925 = vunpack.c.l.b16 %v822
      %v926 = vunpack.c.l.b16 %v823
      %v927 = vunpack.c.l.b16 %v824
      %v928 = vunpack.c.l.b16 %v825
      %v929 = vunpack.c.l.b16 %v826
      %v930 = vunpack.c.l.b16 %v827
      %v931 = vunpack.c.l.b16 %v828
      %v932 = vunpack.c.l.b16 %v829
      %v933 = vunpack.c.l.b16 %v830
      %v934 = vunpack.c.l.b16 %v831
      %v935 = vunpack.c.l.b16 %v832
      %v936 = vunpack.c.l.b16 %v833
      %v937 = vunpack.c.l.b16 %v834
      %v938 = vunpack.c.l.b16 %v835
      %v939 = vunpack.c.l.b16 %v836
      %v940 = vunpack.c.l.b16 %v837
      %v941 = vunpack.c.l.b16 %v838
      %v942 = vunpack.c.l.b16 %v839
      %v943 = vunpack.c.l.b16 %v840
      %v944 = vunpack.c.l.b16 %v841
      %v945 = vunpack.c.l.b16 %v842
      %v946 = vunpack.c.l.b16 %v843
      %v947 = vunpack.c.l.b16 %v844
      %v948 = vunpack.c.l.b16 %v845
      %v949 = vunpack.c.l.b16 %v846
      %v950 = vunpack.c.l.b16 %v847
      %v951 = vunpack.c.l.b16 %v848
      %v952 = vunpack.c.l.b16 %v849
      %v953 = vunpack.c.l.b16 %v850
      %v954 = vunpack.c.l.b16 %v851
      %v955 = vunpack.c.l.b16 %v852
      %v956 = vunpack.c.l.b16 %v853
      %v957 = vunpack.c.l.b16 %v854
      %v958 = vpack.c.b16 %v911, %v910
      %v959 = vpack.c.b16 %v913, %v912
      %v960 = vpack.c.b16 %v915, %v914
      %v961 = vpack.c.b16 %v917, %v916
      %v962 = vpack.c.b16 %v919, %v918
      %v963 = vpack.c.b16 %v921, %v920
      %v964 = vpack.c.b16 %v923, %v922
      %v965 = vpack.c.b16 %v925, %v924
      %v966 = vpack.c.b16 %v927, %v926
      %v967 = vpack.c.b16 %v929, %v928
      %v968 = vpack.c.b16 %v931, %v930
      %v969 = vpack.c.b16 %v933, %v932
      %v970 = vpack.c.b16 %v935, %v934
      %v971 = vpack.c.b16 %v937, %v936
      %v972 = vpack.c.b16 %v939, %v938
      %v973 = vpack.c.b16 %v941, %v940
      %v974 = vpack.c.b16 %v943, %v942
      %v975 = vpack.c.b16 %v945, %v944
      %v976 = vpack.c.b16 %v947, %v946
      %v977 = vpack.c.b16 %v949, %v948
      %v978 = vpack.c.b16 %v951, %v950
      %v979 = vpack.c.b16 %v953, %v952
      %v980 = vpack.c.b16 %v955, %v954
      %v981 = vpack.c.b16 %v957, %v956
      %1006 = vmatprep.subr.bf16.mxu0 0
      %1007 = vmatpush1.bf16.msra.mxu0 %v965
      %1008 = vmatprep.subr.bf16.mxu0 0
      %1009 = vmatpush1.bf16.msra.mxu0 %v964
      %1010 = vmatprep.subr.bf16.mxu0 0
      %1011 = vmatpush1.bf16.msra.mxu0 %v963
      %1012 = vmatprep.subr.bf16.mxu0 0
      %1013 = vmatpush1.bf16.msra.mxu0 %v962
      %1014 = vmatprep.subr.bf16.mxu0 0
      %1015 = vmatpush1.bf16.msra.mxu0 %v961
      %1016 = vmatprep.subr.bf16.mxu0 0
      %1017 = vmatpush1.bf16.msra.mxu0 %v960
      %1018 = vmatprep.subr.bf16.mxu0 0
      %1019 = vmatpush1.bf16.msra.mxu0 %v959
      %1020 = vmatprep.subr.bf16.mxu0 0
      %1021 = vmatpush1.bf16.msra.mxu0 %v958
      %1022 = vmatprep.subr.bf16.mxu0 0
      %1023 = vmatpush2.bf16.msra.mxu0 %v973
      %1024 = vmatprep.subr.bf16.mxu0 0
      %1025 = vmatpush2.bf16.msra.mxu0 %v972
      %1026 = vmatprep.subr.bf16.mxu0 0
      %1027 = vmatpush2.bf16.msra.mxu0 %v971
      %1028 = vmatprep.subr.bf16.mxu0 0
      %1029 = vmatpush2.bf16.msra.mxu0 %v970
      %1030 = vmatprep.subr.bf16.mxu0 0
      %1031 = vmatpush2.bf16.msra.mxu0 %v969
      %1032 = vmatprep.subr.bf16.mxu0 0
      %1033 = vmatpush2.bf16.msra.mxu0 %v968
      %1034 = vmatprep.subr.bf16.mxu0 0
      %1035 = vmatpush2.bf16.msra.mxu0 %v967
      %1036 = vmatprep.subr.bf16.mxu0 0
      %1037 = vmatpush2.bf16.msra.mxu0 %v966
      %1038 = vmatprep.mubr.bf16.mxu0 %v692
      %1039 = vmatmul.mubr.bf16.gmra.mxu0 %v427
      %v1040 = vpop.f32.mrf.mxu0
      %v1041 = vadd.f32 %v860, %v1040
      %v1042 = vpop.f32.mrf.mxu0
      %v1043 = vpop.f32.mrf.mxu0
      %v1044 = vpop.f32.mrf.mxu0
      %1045 = vdwg.mxu0
      %1046 = vmatprep.subr.bf16.mxu0 0
      %1047 = vmatpush1.bf16.msra.mxu0 %v981
      %1048 = vmatprep.subr.bf16.mxu0 0
      %1049 = vmatpush1.bf16.msra.mxu0 %v980
      %1050 = vmatprep.subr.bf16.mxu0 0
      %1051 = vmatpush1.bf16.msra.mxu0 %v979
      %1052 = vmatprep.subr.bf16.mxu0 0
      %1053 = vmatpush1.bf16.msra.mxu0 %v978
      %1054 = vmatprep.subr.bf16.mxu0 0
      %1055 = vmatpush1.bf16.msra.mxu0 %v977
      %1056 = vmatprep.subr.bf16.mxu0 0
      %1057 = vmatpush1.bf16.msra.mxu0 %v976
      %1058 = vmatprep.subr.bf16.mxu0 0
      %1059 = vmatpush1.bf16.msra.mxu0 %v975
      %1060 = vmatprep.subr.bf16.mxu0 0
      %1061 = vmatpush1.bf16.msra.mxu0 %v974
      %1062 = vmatprep.subr.bf16.mxu0 0
      %1063 = vmatpush2.bf16.msra.mxu0 0
      %1064 = vmatprep.subr.bf16.mxu0 0
      %1065 = vmatpush2.bf16.msra.mxu0 0
      %1066 = vmatprep.subr.bf16.mxu0 0
      %1067 = vmatpush2.bf16.msra.mxu0 0
      %1068 = vmatprep.subr.bf16.mxu0 0
      %1069 = vmatpush2.bf16.msra.mxu0 0
      %1070 = vmatprep.subr.bf16.mxu0 0
      %1071 = vmatpush2.bf16.msra.mxu0 0
      %1072 = vmatprep.subr.bf16.mxu0 0
      %1073 = vmatpush2.bf16.msra.mxu0 0
      %1074 = vmatprep.subr.bf16.mxu0 0
      %1075 = vmatpush2.bf16.msra.mxu0 0
      %1076 = vmatprep.subr.bf16.mxu0 0
      %1077 = vmatpush2.bf16.msra.mxu0 0
      %1078 = vmatprep.mubr.bf16.mxu0 0
      %1079 = vmatmul.mubr.bf16.gmra.mxu0 %v806
      %v1080 = vpop.f32.mrf.mxu0
      %v1081 = vadd.f32 %v1041, %v1080
      %v1082 = vpop.f32.mrf.mxu0
      %v1083 = vpop.f32.mrf.mxu0
      %v1084 = vpop.f32.mrf.mxu0
      %1085 = vdwg.mxu0
      %v1086 = vld [vmem:[%s10] sm:$0x1]
      %vm1087 = vcmp.gt.f32.partialorder %v1086, 0.0
      %v1088 = vxor.u32 %v1081, 2147483648
      %v1089 = vmul.f32 %v1088, 1.442695
      %v1090 = vpow.pop %v1089
      %v1091 = vadd.f32 %v1090, 1.0
      %v1092 = vrcp.pop %v1091
      %v1093 = vmul.f32 1.0, %v1092
      %v1094 = vsel %vm1087, 1, 0
      %v1095 = vlaneseq
      %v1096 = vshrl.u32 %v1095, 7
      %v1097 = vsub.s32 0, %v1096
      %v1098 = vrot.slane %v1094, %v1097
      %vm1099 = vcmp.eq.s32.totalorder %v1098, 1
      %v1100 = vsel %vm1099, %v1093, %v1081
      %1101 = vst [vmem:[%s415] sm:$0xff] %v1100
      %p1102 = scmp.lt.s32.totalorder %s26, 1
      %s1103 = scalar_select %p1102, %s26, 1
      %p1104 = scmp.lt.s32.totalorder %s27, 0
      %s1105 = scalar_select %p1104, %s27, 0
      %s1106 = sadd.s32 %s1105, %s1103
      %s1107 = smul.addr %s1106, 8
      %s1108 = scalar_lea.vmem %s11, %s1107
      // Predicated region
      $region65: #{_lambda_.4} parent=63 // pred_check
        %p1109 = pneg %p295
      $region66: #{_lambda_.4} parent=63 // pred_check_branch
        %1111 = sbr.rel (%p1109) target = $region68
      $region67: #{_lambda_.4} parent=63 // pred_region
        _
      $region68: #{_lambda_.4} parent=63 // pred_fallthru
        _
    $region64: #{_lambda_.4} parent=5 // pred_fallthru
      _
    %p1112 = scmp.le.s32.totalorder 2, %s17
    // Predicated region
    $region69: #{_lambda_.4} parent=5 // pred_check
      %p1113 = pneg %p1112
    $region70: #{_lambda_.4} parent=5 // pred_check_branch
      %1115 = sbr.rel (%p1113) target = $region72
    $region71: #{_lambda_.4} parent=5 // pred_region
      %s1116 = ssub.s32 %s17, 2
      // Predicated region
      $region73: #{_lambda_.4} parent=71 // pred_check
        %p1117 = pneg %p301
      $region74: #{_lambda_.4} parent=71 // pred_check_branch
        %1119 = sbr.rel (%p1117) target = $region76
      $region75: #{_lambda_.4} parent=71 // pred_region
        %p1120 = scmp.lt.s32.totalorder %s28, 1
        %s1121 = scalar_select %p1120, %s28, 1
        %p1122 = scmp.lt.s32.totalorder %s29, 0
        %s1123 = scalar_select %p1122, %s29, 0
        %s1124 = sadd.s32 %s1123, %s1121
        %s1125 = smul.addr %s1124, 8
        %s1126 = scalar_lea.vmem %s11, %s1125
      $region76: #{_lambda_.4} parent=71 // pred_fallthru
        _
    $region72: #{_lambda_.4} parent=5 // pred_fallthru
      _
  $region6: #{_lambda_.4} parent=0 // loop_footer
    %s21 = sadd.s32 1, %s17
  $region7: #{_lambda_.4} parent=0 // loop_footer_branch
    %16 = sbr.rel target = $region3
  $region8: #{_lambda_.4} parent=0 // loop_exit
    _

// kernel: _lambda_.5
$region0: #{_lambda_.5}
  #allocation0 [shape = 'u32[]', space=smem, size = 0x4, offset = 0x4, fixed_abs, tag = 'smem constant byte address 0x4 - core index']
  #allocation1 [shape = 'u32[144,128]{1,0:T(1,128)}', space=vmem, size = 0x12000, scoped, tag = 'internal scratch']
  %s0 = inlined_call_operand.vmem [shape: f32[4,128], index: 0, kind: input, shape index: {}]
  %s1 = inlined_call_operand.vmem [shape: f32[2,1,128], index: 1, kind: input, shape index: {}]
  %s2 = inlined_call_operand.vmem [shape: bf16[128,384], index: 2, kind: input, shape index: {}]
  %s3 = inlined_call_operand.vmem [shape: f32[1,384], index: 3, kind: input, shape index: {}]
  %s4 = inlined_call_operand.vmem [shape: bf16[128,128], index: 4, kind: input, shape index: {}]
  %s5 = inlined_call_operand.vmem [shape: f32[1,128], index: 5, kind: input, shape index: {}]
  %s6 = inlined_call_operand.vmem [shape: bf16[128,128], index: 6, kind: input, shape index: {}]
  %s7 = inlined_call_operand.vmem [shape: f32[1,128], index: 7, kind: input, shape index: {}]
  %s8 = inlined_call_operand.vmem [shape: bf16[128,128], index: 8, kind: input, shape index: {}]
  %s9 = inlined_call_operand.vmem [shape: f32[1,128], index: 9, kind: input, shape index: {}]
  %s10 = inlined_call_operand.vmem [shape: bf16[512,128], index: 10, kind: input, shape index: {}]
  %s11 = inlined_call_operand.vmem [shape: f32[1,128], index: 11, kind: input, shape index: {}]
  %s12 = inlined_call_operand.vmem [shape: f32[1,128], index: 12, kind: input, shape index: {}]
  %s13 = inlined_call_operand.vmem [shape: f32[2,4,128], index: 13, kind: output, shape index: {}]
  %s14 = sld [smem:[#allocation0]]
  $region85: #{_lambda_.5} parent=0
    _
  %s16 = ssub.s32 1, %s14
  %s17 = scalar_select 0, %s16, %s14
  loop: start=0, step=1, limit=4
  $region2: #{_lambda_.5} parent=0 // loop_pre_header
    _
  $region3: #{_lambda_.5} parent=0 // loop_header
    %s19 = sphi 0, %s23
    %p20 = scmp.ge.s32.totalorder %s19, 4
    %s26 = sphi 0, %s38
    %s27 = sphi 0, %s34
    %s28 = sphi 0, %s26
    %s29 = sphi 0, %s27
    %s30 = sphi 0, %s28
    %s31 = sphi 0, %s29
    %s41 = sphi 0, %s43
    %s44 = sphi 0, %s41
    %s45 = sphi 0, %s44
    %s61 = sphi 0, %s45
    %s67 = sphi 0, %s69
    %s70 = sphi 0, %s67
    %s71 = sphi 0, %s70
    %s87 = sphi 0, %s71
    %s91 = sphi 0, %s91
    %s93 = sphi 0, %s91
    %s94 = sphi 0, %s93
    %s108 = sphi 0, %s94
    %s112 = sphi 0, %s112
    %s114 = sphi 0, %s112
    %s115 = sphi 0, %s114
    %s129 = sphi 0, %s115
    %s133 = sphi 0, %s133
    %s135 = sphi 0, %s133
    %s136 = sphi 0, %s135
    %s150 = sphi 0, %s136
    %s154 = sphi 0, %s154
    %s156 = sphi 0, %s154
    %s157 = sphi 0, %s156
    %s171 = sphi 0, %s157
    %s175 = sphi 0, %s175
    %s177 = sphi 0, %s175
    %s178 = sphi 0, %s177
    %s192 = sphi 0, %s178
    %s196 = sphi 0, %s196
    %s198 = sphi 0, %s196
    %s199 = sphi 0, %s198
    %s213 = sphi 0, %s199
    %s217 = sphi 0, %s217
    %s219 = sphi 0, %s217
    %s220 = sphi 0, %s219
    %s234 = sphi 0, %s220
    %s238 = sphi 0, %s238
    %s240 = sphi 0, %s238
    %s241 = sphi 0, %s240
    %s255 = sphi 0, %s241
    %s259 = sphi 0, %s259
    %s261 = sphi 0, %s259
    %s262 = sphi 0, %s261
    %s276 = sphi 0, %s262
    %s280 = sphi 0, %s280
    %s282 = sphi 0, %s280
    %s283 = sphi 0, %s282
    %s297 = sphi 0, %s283
    %s301 = sphi 0, %s301
    %s303 = sphi 0, %s301
    %s304 = sphi 0, %s303
    %s318 = sphi 0, %s304
    %s326 = sphi 0, %s328
    %s329 = sphi 0, %s326
    %s330 = sphi 0, %s329
    %s346 = sphi 0, %s330
  $region4: #{_lambda_.5} parent=0 // loop_header_branch
    %22 = sbr.rel (%p20) target = $region8
  $region5: #{_lambda_.5} parent=0 // loop_body
    %s24 = ssub.s32 %s19, 1
    %s25 = ssub.s32 %s19, 2
    %s32 = sadd.s32 1, %s27
    %p33 = scmp.ge.s32.totalorder %s32, 1
    %s34 = scalar_select %p33, 0, %s32
    %s35 = sadd.s32 1, %s26
    %s36 = scalar_select %p33, %s35, %s26
    %p37 = scmp.ge.s32.totalorder %s36, 2
    %s38 = scalar_select %p37, 0, %s36
    %s39 = ssub.s32 %s27, %s34
    %p40 = scmp.eq.s32.totalorder %s39, 0
    %s42 = sadd.s32 %s41, 1
    %s43 = scalar_select %p40, %s41, %s42
    %p46 = pneg %p40
    %p47 = scmp.eq.s32.totalorder %s19, 1
    %p48 = por %p46, %p47
    %p49 = scmp.ne.s32.totalorder %s41, %s44
    %p50 = scmp.eq.s32.totalorder %s19, 0
    %p51 = por %p49, %p50
    %p52 = scmp.ne.s32.totalorder %s41, %s44
    %p53 = scmp.eq.s32.totalorder %s24, 1
    %p54 = por %p52, %p53
    %p55 = scmp.ne.s32.totalorder %s44, %s45
    %p56 = scmp.eq.s32.totalorder %s24, 0
    %p57 = por %p55, %p56
    %p58 = scmp.ne.s32.totalorder %s44, %s45
    %p59 = scmp.eq.s32.totalorder %s25, 1
    %p60 = por %p58, %p59
    %p62 = scmp.ne.s32.totalorder %s45, %s61
    %p63 = scmp.eq.s32.totalorder %s25, 0
    %p64 = por %p62, %p63
    %s65 = ssub.s32 %s26, %s38
    %p66 = scmp.eq.s32.totalorder %s65, 0
    %s68 = sadd.s32 %s67, 1
    %s69 = scalar_select %p66, %s67, %s68
    %p72 = pneg %p66
    %p73 = scmp.eq.s32.totalorder %s19, 1
    %p74 = por %p72, %p73
    %p75 = scmp.ne.s32.totalorder %s67, %s70
    %p76 = scmp.eq.s32.totalorder %s19, 0
    %p77 = por %p75, %p76
    %p78 = scmp.ne.s32.totalorder %s67, %s70
    %p79 = scmp.eq.s32.totalorder %s24, 1
    %p80 = por %p78, %p79
    %p81 = scmp.ne.s32.totalorder %s70, %s71
    %p82 = scmp.eq.s32.totalorder %s24, 0
    %p83 = por %p81, %p82
    %p84 = scmp.ne.s32.totalorder %s70, %s71
    %p85 = scmp.eq.s32.totalorder %s25, 1
    %p86 = por %p84, %p85
    %p88 = scmp.ne.s32.totalorder %s71, %s87
    %p89 = scmp.eq.s32.totalorder %s25, 0
    %p90 = por %p88, %p89
    %s92 = sadd.s32 %s91, 1
    %p95 = scmp.eq.s32.totalorder %s19, 1
    %p96 = scmp.ne.s32.totalorder %s91, %s93
    %p97 = scmp.eq.s32.totalorder %s19, 0
    %p98 = por %p96, %p97
    %p99 = scmp.ne.s32.totalorder %s91, %s93
    %p100 = scmp.eq.s32.totalorder %s24, 1
    %p101 = por %p99, %p100
    %p102 = scmp.ne.s32.totalorder %s93, %s94
    %p103 = scmp.eq.s32.totalorder %s24, 0
    %p104 = por %p102, %p103
    %p105 = scmp.ne.s32.totalorder %s93, %s94
    %p106 = scmp.eq.s32.totalorder %s25, 1
    %p107 = por %p105, %p106
    %p109 = scmp.ne.s32.totalorder %s94, %s108
    %p110 = scmp.eq.s32.totalorder %s25, 0
    %p111 = por %p109, %p110
    %s113 = sadd.s32 %s112, 1
    %p116 = scmp.eq.s32.totalorder %s19, 1
    %p117 = scmp.ne.s32.totalorder %s112, %s114
    %p118 = scmp.eq.s32.totalorder %s19, 0
    %p119 = por %p117, %p118
    %p120 = scmp.ne.s32.totalorder %s112, %s114
    %p121 = scmp.eq.s32.totalorder %s24, 1
    %p122 = por %p120, %p121
    %p123 = scmp.ne.s32.totalorder %s114, %s115
    %p124 = scmp.eq.s32.totalorder %s24, 0
    %p125 = por %p123, %p124
    %p126 = scmp.ne.s32.totalorder %s114, %s115
    %p127 = scmp.eq.s32.totalorder %s25, 1
    %p128 = por %p126, %p127
    %p130 = scmp.ne.s32.totalorder %s115, %s129
    %p131 = scmp.eq.s32.totalorder %s25, 0
    %p132 = por %p130, %p131
    %s134 = sadd.s32 %s133, 1
    %p137 = scmp.eq.s32.totalorder %s19, 1
    %p138 = scmp.ne.s32.totalorder %s133, %s135
    %p139 = scmp.eq.s32.totalorder %s19, 0
    %p140 = por %p138, %p139
    %p141 = scmp.ne.s32.totalorder %s133, %s135
    %p142 = scmp.eq.s32.totalorder %s24, 1
    %p143 = por %p141, %p142
    %p144 = scmp.ne.s32.totalorder %s135, %s136
    %p145 = scmp.eq.s32.totalorder %s24, 0
    %p146 = por %p144, %p145
    %p147 = scmp.ne.s32.totalorder %s135, %s136
    %p148 = scmp.eq.s32.totalorder %s25, 1
    %p149 = por %p147, %p148
    %p151 = scmp.ne.s32.totalorder %s136, %s150
    %p152 = scmp.eq.s32.totalorder %s25, 0
    %p153 = por %p151, %p152
    %s155 = sadd.s32 %s154, 1
    %p158 = scmp.eq.s32.totalorder %s19, 1
    %p159 = scmp.ne.s32.totalorder %s154, %s156
    %p160 = scmp.eq.s32.totalorder %s19, 0
    %p161 = por %p159, %p160
    %p162 = scmp.ne.s32.totalorder %s154, %s156
    %p163 = scmp.eq.s32.totalorder %s24, 1
    %p164 = por %p162, %p163
    %p165 = scmp.ne.s32.totalorder %s156, %s157
    %p166 = scmp.eq.s32.totalorder %s24, 0
    %p167 = por %p165, %p166
    %p168 = scmp.ne.s32.totalorder %s156, %s157
    %p169 = scmp.eq.s32.totalorder %s25, 1
    %p170 = por %p168, %p169
    %p172 = scmp.ne.s32.totalorder %s157, %s171
    %p173 = scmp.eq.s32.totalorder %s25, 0
    %p174 = por %p172, %p173
    %s176 = sadd.s32 %s175, 1
    %p179 = scmp.eq.s32.totalorder %s19, 1
    %p180 = scmp.ne.s32.totalorder %s175, %s177
    %p181 = scmp.eq.s32.totalorder %s19, 0
    %p182 = por %p180, %p181
    %p183 = scmp.ne.s32.totalorder %s175, %s177
    %p184 = scmp.eq.s32.totalorder %s24, 1
    %p185 = por %p183, %p184
    %p186 = scmp.ne.s32.totalorder %s177, %s178
    %p187 = scmp.eq.s32.totalorder %s24, 0
    %p188 = por %p186, %p187
    %p189 = scmp.ne.s32.totalorder %s177, %s178
    %p190 = scmp.eq.s32.totalorder %s25, 1
    %p191 = por %p189, %p190
    %p193 = scmp.ne.s32.totalorder %s178, %s192
    %p194 = scmp.eq.s32.totalorder %s25, 0
    %p195 = por %p193, %p194
    %s197 = sadd.s32 %s196, 1
    %p200 = scmp.eq.s32.totalorder %s19, 1
    %p201 = scmp.ne.s32.totalorder %s196, %s198
    %p202 = scmp.eq.s32.totalorder %s19, 0
    %p203 = por %p201, %p202
    %p204 = scmp.ne.s32.totalorder %s196, %s198
    %p205 = scmp.eq.s32.totalorder %s24, 1
    %p206 = por %p204, %p205
    %p207 = scmp.ne.s32.totalorder %s198, %s199
    %p208 = scmp.eq.s32.totalorder %s24, 0
    %p209 = por %p207, %p208
    %p210 = scmp.ne.s32.totalorder %s198, %s199
    %p211 = scmp.eq.s32.totalorder %s25, 1
    %p212 = por %p210, %p211
    %p214 = scmp.ne.s32.totalorder %s199, %s213
    %p215 = scmp.eq.s32.totalorder %s25, 0
    %p216 = por %p214, %p215
    %s218 = sadd.s32 %s217, 1
    %p221 = scmp.eq.s32.totalorder %s19, 1
    %p222 = scmp.ne.s32.totalorder %s217, %s219
    %p223 = scmp.eq.s32.totalorder %s19, 0
    %p224 = por %p222, %p223
    %p225 = scmp.ne.s32.totalorder %s217, %s219
    %p226 = scmp.eq.s32.totalorder %s24, 1
    %p227 = por %p225, %p226
    %p228 = scmp.ne.s32.totalorder %s219, %s220
    %p229 = scmp.eq.s32.totalorder %s24, 0
    %p230 = por %p228, %p229
    %p231 = scmp.ne.s32.totalorder %s219, %s220
    %p232 = scmp.eq.s32.totalorder %s25, 1
    %p233 = por %p231, %p232
    %p235 = scmp.ne.s32.totalorder %s220, %s234
    %p236 = scmp.eq.s32.totalorder %s25, 0
    %p237 = por %p235, %p236
    %s239 = sadd.s32 %s238, 1
    %p242 = scmp.eq.s32.totalorder %s19, 1
    %p243 = scmp.ne.s32.totalorder %s238, %s240
    %p244 = scmp.eq.s32.totalorder %s19, 0
    %p245 = por %p243, %p244
    %p246 = scmp.ne.s32.totalorder %s238, %s240
    %p247 = scmp.eq.s32.totalorder %s24, 1
    %p248 = por %p246, %p247
    %p249 = scmp.ne.s32.totalorder %s240, %s241
    %p250 = scmp.eq.s32.totalorder %s24, 0
    %p251 = por %p249, %p250
    %p252 = scmp.ne.s32.totalorder %s240, %s241
    %p253 = scmp.eq.s32.totalorder %s25, 1
    %p254 = por %p252, %p253
    %p256 = scmp.ne.s32.totalorder %s241, %s255
    %p257 = scmp.eq.s32.totalorder %s25, 0
    %p258 = por %p256, %p257
    %s260 = sadd.s32 %s259, 1
    %p263 = scmp.eq.s32.totalorder %s19, 1
    %p264 = scmp.ne.s32.totalorder %s259, %s261
    %p265 = scmp.eq.s32.totalorder %s19, 0
    %p266 = por %p264, %p265
    %p267 = scmp.ne.s32.totalorder %s259, %s261
    %p268 = scmp.eq.s32.totalorder %s24, 1
    %p269 = por %p267, %p268
    %p270 = scmp.ne.s32.totalorder %s261, %s262
    %p271 = scmp.eq.s32.totalorder %s24, 0
    %p272 = por %p270, %p271
    %p273 = scmp.ne.s32.totalorder %s261, %s262
    %p274 = scmp.eq.s32.totalorder %s25, 1
    %p275 = por %p273, %p274
    %p277 = scmp.ne.s32.totalorder %s262, %s276
    %p278 = scmp.eq.s32.totalorder %s25, 0
    %p279 = por %p277, %p278
    %s281 = sadd.s32 %s280, 1
    %p284 = scmp.eq.s32.totalorder %s19, 1
    %p285 = scmp.ne.s32.totalorder %s280, %s282
    %p286 = scmp.eq.s32.totalorder %s19, 0
    %p287 = por %p285, %p286
    %p288 = scmp.ne.s32.totalorder %s280, %s282
    %p289 = scmp.eq.s32.totalorder %s24, 1
    %p290 = por %p288, %p289
    %p291 = scmp.ne.s32.totalorder %s282, %s283
    %p292 = scmp.eq.s32.totalorder %s24, 0
    %p293 = por %p291, %p292
    %p294 = scmp.ne.s32.totalorder %s282, %s283
    %p295 = scmp.eq.s32.totalorder %s25, 1
    %p296 = por %p294, %p295
    %p298 = scmp.ne.s32.totalorder %s283, %s297
    %p299 = scmp.eq.s32.totalorder %s25, 0
    %p300 = por %p298, %p299
    %s302 = sadd.s32 %s301, 1
    %p305 = scmp.eq.s32.totalorder %s19, 1
    %p306 = scmp.ne.s32.totalorder %s301, %s303
    %p307 = scmp.eq.s32.totalorder %s19, 0
    %p308 = por %p306, %p307
    %p309 = scmp.ne.s32.totalorder %s301, %s303
    %p310 = scmp.eq.s32.totalorder %s24, 1
    %p311 = por %p309, %p310
    %p312 = scmp.ne.s32.totalorder %s303, %s304
    %p313 = scmp.eq.s32.totalorder %s24, 0
    %p314 = por %p312, %p313
    %p315 = scmp.ne.s32.totalorder %s303, %s304
    %p316 = scmp.eq.s32.totalorder %s25, 1
    %p317 = por %p315, %p316
    %p319 = scmp.ne.s32.totalorder %s304, %s318
    %p320 = scmp.eq.s32.totalorder %s25, 0
    %p321 = por %p319, %p320
    %s322 = ssub.s32 %s26, %s38
    %s323 = ssub.s32 %s27, %s34
    %s324 = sor.u32 %s322, %s323
    %p325 = scmp.eq.s32.totalorder %s324, 0
    %s327 = sadd.s32 %s326, 1
    %s328 = scalar_select %p325, %s326, %s327
    %p331 = pneg %p325
    %p332 = scmp.eq.s32.totalorder %s19, 1
    %p333 = por %p331, %p332
    %p334 = scmp.ne.s32.totalorder %s326, %s329
    %p335 = scmp.eq.s32.totalorder %s19, 0
    %p336 = por %p334, %p335
    %p337 = scmp.ne.s32.totalorder %s326, %s329
    %p338 = scmp.eq.s32.totalorder %s24, 1
    %p339 = por %p337, %p338
    %p340 = scmp.ne.s32.totalorder %s329, %s330
    %p341 = scmp.eq.s32.totalorder %s24, 0
    %p342 = por %p340, %p341
    %p343 = scmp.ne.s32.totalorder %s329, %s330
    %p344 = scmp.eq.s32.totalorder %s25, 1
    %p345 = por %p343, %p344
    %p347 = scmp.ne.s32.totalorder %s330, %s346
    %p348 = scmp.eq.s32.totalorder %s25, 0
    %p349 = por %p347, %p348
    %p350 = scmp.le.s32.totalorder 1, %s19
    %p351 = scmp.lt.s32.totalorder %s19, 3
    %p352 = pnand %p350, %p351
    %p353 = pneg %p352
    // Predicated region
    $region9: #{_lambda_.5} parent=5 // pred_check
      _
    $region10: #{_lambda_.5} parent=5 // pred_check_branch
      %355 = sbr.rel (%p352) target = $region12
    $region11: #{_lambda_.5} parent=5 // pred_region
      %s356 = ssub.s32 %s19, 1
      // Predicated region
      $region13: #{_lambda_.5} parent=11 // pred_check
        %p357 = pneg %p57
      $region14: #{_lambda_.5} parent=11 // pred_check_branch
        %359 = sbr.rel (%p357) target = $region16
      $region15: #{_lambda_.5} parent=11 // pred_region
        %p360 = scmp.lt.s32.totalorder %s29, 0
        %s361 = scalar_select %p360, %s29, 0
        %s362 = smul.addr %s361, 4
        %s363 = scalar_lea.vmem %s0, %s362
      $region16: #{_lambda_.5} parent=11 // pred_fallthru
        _
      // Predicated region
      $region17: #{_lambda_.5} parent=11 // pred_check
        %p364 = pneg %p104
      $region18: #{_lambda_.5} parent=11 // pred_check_branch
        %366 = sbr.rel (%p364) target = $region20
      $region19: #{_lambda_.5} parent=11 // pred_region
        _
      $region20: #{_lambda_.5} parent=11 // pred_fallthru
        _
      // Predicated region
      $region21: #{_lambda_.5} parent=11 // pred_check
        %p367 = pneg %p125
      $region22: #{_lambda_.5} parent=11 // pred_check_branch
        %369 = sbr.rel (%p367) target = $region24
      $region23: #{_lambda_.5} parent=11 // pred_region
        _
      $region24: #{_lambda_.5} parent=11 // pred_fallthru
        _
      // Predicated region
      $region25: #{_lambda_.5} parent=11 // pred_check
        %p370 = pneg %p146
      $region26: #{_lambda_.5} parent=11 // pred_check_branch
        %372 = sbr.rel (%p370) target = $region28
      $region27: #{_lambda_.5} parent=11 // pred_region
        _
      $region28: #{_lambda_.5} parent=11 // pred_fallthru
        _
      // Predicated region
      $region29: #{_lambda_.5} parent=11 // pred_check
        %p373 = pneg %p167
      $region30: #{_lambda_.5} parent=11 // pred_check_branch
        %375 = sbr.rel (%p373) target = $region32
      $region31: #{_lambda_.5} parent=11 // pred_region
        _
      $region32: #{_lambda_.5} parent=11 // pred_fallthru
        _
      // Predicated region
      $region33: #{_lambda_.5} parent=11 // pred_check
        %p376 = pneg %p188
      $region34: #{_lambda_.5} parent=11 // pred_check_branch
        %378 = sbr.rel (%p376) target = $region36
      $region35: #{_lambda_.5} parent=11 // pred_region
        _
      $region36: #{_lambda_.5} parent=11 // pred_fallthru
        _
      // Predicated region
      $region37: #{_lambda_.5} parent=11 // pred_check
        %p379 = pneg %p209
      $region38: #{_lambda_.5} parent=11 // pred_check_branch
        %381 = sbr.rel (%p379) target = $region40
      $region39: #{_lambda_.5} parent=11 // pred_region
        _
      $region40: #{_lambda_.5} parent=11 // pred_fallthru
        _
      // Predicated region
      $region41: #{_lambda_.5} parent=11 // pred_check
        %p382 = pneg %p230
      $region42: #{_lambda_.5} parent=11 // pred_check_branch
        %384 = sbr.rel (%p382) target = $region44
      $region43: #{_lambda_.5} parent=11 // pred_region
        _
      $region44: #{_lambda_.5} parent=11 // pred_fallthru
        _
      // Predicated region
      $region45: #{_lambda_.5} parent=11 // pred_check
        %p385 = pneg %p251
      $region46: #{_lambda_.5} parent=11 // pred_check_branch
        %387 = sbr.rel (%p385) target = $region48
      $region47: #{_lambda_.5} parent=11 // pred_region
        _
      $region48: #{_lambda_.5} parent=11 // pred_fallthru
        _
      // Predicated region
      $region49: #{_lambda_.5} parent=11 // pred_check
        %p388 = pneg %p272
      $region50: #{_lambda_.5} parent=11 // pred_check_branch
        %390 = sbr.rel (%p388) target = $region52
      $region51: #{_lambda_.5} parent=11 // pred_region
        _
      $region52: #{_lambda_.5} parent=11 // pred_fallthru
        _
      // Predicated region
      $region53: #{_lambda_.5} parent=11 // pred_check
        %p391 = pneg %p293
      $region54: #{_lambda_.5} parent=11 // pred_check_branch
        %393 = sbr.rel (%p391) target = $region56
      $region55: #{_lambda_.5} parent=11 // pred_region
        _
      $region56: #{_lambda_.5} parent=11 // pred_fallthru
        _
      // Predicated region
      $region57: #{_lambda_.5} parent=11 // pred_check
        %p394 = pneg %p314
      $region58: #{_lambda_.5} parent=11 // pred_check_branch
        %396 = sbr.rel (%p394) target = $region60
      $region59: #{_lambda_.5} parent=11 // pred_region
        _
      $region60: #{_lambda_.5} parent=11 // pred_fallthru
        _
    $region12: #{_lambda_.5} parent=5 // pred_fallthru
      _
    %p397 = scmp.lt.s32.totalorder %s19, 2
    // Predicated region
    $region61: #{_lambda_.5} parent=5 // pred_check
      %p398 = pneg %p397
    $region62: #{_lambda_.5} parent=5 // pred_check_branch
      %400 = sbr.rel (%p398) target = $region64
    $region63: #{_lambda_.5} parent=5 // pred_region
      // Predicated region
      $region65: #{_lambda_.5} parent=63 // pred_check
        %p401 = pneg %p77
      $region66: #{_lambda_.5} parent=63 // pred_check_branch
        %403 = sbr.rel (%p401) target = $region68
      $region67: #{_lambda_.5} parent=63 // pred_region
        %p404 = scmp.lt.s32.totalorder %s26, 1
        %s405 = scalar_select %p404, %s26, 1
        %s406 = scalar_lea.vmem %s1, %s405
      $region68: #{_lambda_.5} parent=63 // pred_fallthru
        _
    $region64: #{_lambda_.5} parent=5 // pred_fallthru
      _
    %p407 = scmp.le.s32.totalorder 1, %s19
    %p408 = scmp.lt.s32.totalorder %s19, 3
    %p409 = pnand %p407, %p408
    %p410 = pneg %p409
    // Predicated region
    $region69: #{_lambda_.5} parent=5 // pred_check
      _
    $region70: #{_lambda_.5} parent=5 // pred_check_branch
      %412 = sbr.rel (%p409) target = $region72
    $region71: #{_lambda_.5} parent=5 // pred_region
      %s413 = ssub.s32 %s19, 1
      %p414 = scmp.lt.s32.totalorder %s29, 0
      %s415 = scalar_select %p414, %s29, 0
      %s416 = smul.addr %s415, 4
      %s417 = scalar_lea.vmem %s0, %s416
      %p418 = pneg %p57
      %p419 = pneg %p54
      %p420 = scmp.lt.s32.totalorder %s28, 1
      %s421 = scalar_select %p420, %s28, 1
      %s422 = scalar_lea.vmem %s1, %s421
      %p423 = pneg %p83
      %p424 = pneg %p80
      %p425 = pneg %p104
      %p426 = pneg %p101
      %p427 = pneg %p125
      %p428 = pneg %p122
      %p429 = pneg %p146
      %p430 = pneg %p143
      %p431 = pneg %p167
      %p432 = pneg %p164
      %p433 = pneg %p188
      %p434 = pneg %p185
      %p435 = pneg %p209
      %p436 = pneg %p206
      %p437 = pneg %p230
      %p438 = pneg %p227
      %p439 = pneg %p251
      %p440 = pneg %p248
      %p441 = pneg %p272
      %p442 = pneg %p269
      %p443 = pneg %p293
      %p444 = pneg %p290
      %p445 = pneg %p314
      %p446 = pneg %p311
      %p447 = pneg %p342
      %p448 = pneg %p339
      %p449 = scmp.lt.s32.totalorder %s28, 1
      %s450 = scalar_select %p449, %s28, 1
      %p451 = scmp.lt.s32.totalorder %s29, 0
      %s452 = scalar_select %p451, %s29, 0
      %s453 = sadd.s32 %s452, %s450
      %s454 = smul.addr %s453, 4
      %s455 = scalar_lea.vmem %s13, %s454
      %p456 = scmp.lt.s32.totalorder %s29, 0
      %s457 = scalar_select %p456, %s29, 0
      %s458 = smul.addr %s457, 4
      %s459 = scalar_lea.vmem %s0, %s458
      %p460 = scmp.lt.s32.totalorder %s28, 1
      %s461 = scalar_select %p460, %s28, 1
      %s462 = scalar_lea.vmem %s1, %s461
      %p463 = scmp.lt.s32.totalorder %s28, 1
      %s464 = scalar_select %p463, %s28, 1
      %p465 = scmp.lt.s32.totalorder %s29, 0
      %s466 = scalar_select %p465, %s29, 0
      %s467 = sadd.s32 %s466, %s464
      %s468 = smul.addr %s467, 4
      %s469 = scalar_lea.vmem %s13, %s468
      %v471 = vld [vmem:[%s459] sm:$0xf]
      %v472 = vld [vmem:[%s462] sm:$0x1]
      %v474 = vlaneseq
      %v475 = vshrl.u32 %v474, 7
      %v476 = vsub.s32 0, %v475
      %v477 = vrot.slane %v472, %v476
      %v479 = vadd.f32 %v471, %v477
      %v480 = vtanh.pop %v479
      %v481 = vpack.c.bf16 %v480, %v480
      %v482 = vld [vmem:[%s2] sm:$0xff]
      %v483 = vld [vmem:[%s2 + $0x8] sm:$0xf]
      %v484 = vld [vmem:[%s2 + $0xc] sm:$0xff]
      %v485 = vld [vmem:[%s2 + $0x14] sm:$0xf]
      %v486 = vld [vmem:[%s2 + $0x18] sm:$0xff]
      %v487 = vld [vmem:[%s2 + $0x20] sm:$0xf]
      %v488 = vld [vmem:[%s2 + $0x24] sm:$0xff]
      %v489 = vld [vmem:[%s2 + $0x2c] sm:$0xf]
      %v490 = vld [vmem:[%s2 + $0x30] sm:$0xff]
      %v491 = vld [vmem:[%s2 + $0x38] sm:$0xf]
      %v492 = vld [vmem:[%s2 + $0x3c] sm:$0xff]
      %v493 = vld [vmem:[%s2 + $0x44] sm:$0xf]
      %v494 = vld [vmem:[%s2 + $0x48] sm:$0xff]
      %v495 = vld [vmem:[%s2 + $0x50] sm:$0xf]
      %v496 = vld [vmem:[%s2 + $0x54] sm:$0xff]
      %v497 = vld [vmem:[%s2 + $0x5c] sm:$0xf]
      %v498 = vld [vmem:[%s2 + $0x60] sm:$0xff]
      %v499 = vld [vmem:[%s2 + $0x68] sm:$0xf]
      %v500 = vld [vmem:[%s2 + $0x6c] sm:$0xff]
      %v501 = vld [vmem:[%s2 + $0x74] sm:$0xf]
      %v502 = vld [vmem:[%s2 + $0x78] sm:$0xff]
      %v503 = vld [vmem:[%s2 + $0x80] sm:$0xf]
      %v504 = vld [vmem:[%s2 + $0x84] sm:$0xff]
      %v505 = vld [vmem:[%s2 + $0x8c] sm:$0xf]
      %v506 = vld [vmem:[%s2 + $0x90] sm:$0xff]
      %v507 = vld [vmem:[%s2 + $0x98] sm:$0xf]
      %v508 = vld [vmem:[%s2 + $0x9c] sm:$0xff]
      %v509 = vld [vmem:[%s2 + $0xa4] sm:$0xf]
      %v510 = vld [vmem:[%s2 + $0xa8] sm:$0xff]
      %v511 = vld [vmem:[%s2 + $0xb0] sm:$0xf]
      %v512 = vld [vmem:[%s2 + $0xb4] sm:$0xff]
      %v513 = vld [vmem:[%s2 + $0xbc] sm:$0xf]
      %v514 = vld [vmem:[%s3] sm:$0x7]
      %v516 = vlaneseq
      %v517 = vshrl.u32 %v516, 7
      %v518 = vsub.s32 0, %v517
      %v519 = vrot.slane %v514, %v518
      %v520 = vlaneseq
      %v521 = vshrl.u32 %v520, 7
      %v522 = vsub.s32 1, %v521
      %v523 = vrot.slane %v514, %v522
      %v524 = vlaneseq
      %v525 = vshrl.u32 %v524, 7
      %v526 = vsub.s32 2, %v525
      %v527 = vrot.slane %v514, %v526
      %v563 = vunpack.c.l.b16 %v482
      %v564 = vunpack.c.h.b16 %v482
      %v565 = vunpack.c.l.b16 %v483
      %v566 = vunpack.c.l.b16 %v484
      %v567 = vunpack.c.h.b16 %v484
      %v568 = vunpack.c.l.b16 %v485
      %v569 = vunpack.c.l.b16 %v486
      %v570 = vunpack.c.h.b16 %v486
      %v571 = vunpack.c.l.b16 %v487
      %v572 = vunpack.c.l.b16 %v488
      %v573 = vunpack.c.h.b16 %v488
      %v574 = vunpack.c.l.b16 %v489
      %v575 = vunpack.c.l.b16 %v490
      %v576 = vunpack.c.h.b16 %v490
      %v577 = vunpack.c.l.b16 %v491
      %v578 = vunpack.c.l.b16 %v492
      %v579 = vunpack.c.h.b16 %v492
      %v580 = vunpack.c.l.b16 %v493
      %v581 = vunpack.c.l.b16 %v494
      %v582 = vunpack.c.h.b16 %v494
      %v583 = vunpack.c.l.b16 %v495
      %v584 = vunpack.c.l.b16 %v496
      %v585 = vunpack.c.h.b16 %v496
      %v586 = vunpack.c.l.b16 %v497
      %v587 = vunpack.c.l.b16 %v498
      %v588 = vunpack.c.h.b16 %v498
      %v589 = vunpack.c.l.b16 %v499
      %v590 = vunpack.c.l.b16 %v500
      %v591 = vunpack.c.h.b16 %v500
      %v592 = vunpack.c.l.b16 %v501
      %v593 = vunpack.c.l.b16 %v502
      %v594 = vunpack.c.h.b16 %v502
      %v595 = vunpack.c.l.b16 %v503
      %v596 = vunpack.c.l.b16 %v504
      %v597 = vunpack.c.h.b16 %v504
      %v598 = vunpack.c.l.b16 %v505
      %v599 = vunpack.c.l.b16 %v506
      %v600 = vunpack.c.h.b16 %v506
      %v601 = vunpack.c.l.b16 %v507
      %v602 = vunpack.c.l.b16 %v508
      %v603 = vunpack.c.h.b16 %v508
      %v604 = vunpack.c.l.b16 %v509
      %v605 = vunpack.c.l.b16 %v510
      %v606 = vunpack.c.h.b16 %v510
      %v607 = vunpack.c.l.b16 %v511
      %v608 = vunpack.c.l.b16 %v512
      %v609 = vunpack.c.h.b16 %v512
      %v610 = vunpack.c.l.b16 %v513
      %v611 = vpack.c.b16 %v566, %v563
      %v612 = vpack.c.b16 %v567, %v564
      %v613 = vpack.c.b16 %v568, %v565
      %v614 = vpack.c.b16 %v572, %v569
      %v615 = vpack.c.b16 %v573, %v570
      %v616 = vpack.c.b16 %v574, %v571
      %v617 = vpack.c.b16 %v578, %v575
      %v618 = vpack.c.b16 %v579, %v576
      %v619 = vpack.c.b16 %v580, %v577
      %v620 = vpack.c.b16 %v584, %v581
      %v621 = vpack.c.b16 %v585, %v582
      %v622 = vpack.c.b16 %v586, %v583
      %v623 = vpack.c.b16 %v590, %v587
      %v624 = vpack.c.b16 %v591, %v588
      %v625 = vpack.c.b16 %v592, %v589
      %v626 = vpack.c.b16 %v596, %v593
      %v627 = vpack.c.b16 %v597, %v594
      %v628 = vpack.c.b16 %v598, %v595
      %v629 = vpack.c.b16 %v602, %v599
      %v630 = vpack.c.b16 %v603, %v600
      %v631 = vpack.c.b16 %v604, %v601
      %v632 = vpack.c.b16 %v608, %v605
      %v633 = vpack.c.b16 %v609, %v606
      %v634 = vpack.c.b16 %v610, %v607
      %659 = vmatprep.subr.bf16.mxu0 %v633
      %660 = vmatpush1.bf16.msra.mxu0 %v632
      %661 = vmatprep.subr.bf16.mxu0 %v630
      %662 = vmatpush1.bf16.msra.mxu0 %v629
      %663 = vmatprep.subr.bf16.mxu0 %v627
      %664 = vmatpush1.bf16.msra.mxu0 %v626
      %665 = vmatprep.subr.bf16.mxu0 %v624
      %666 = vmatpush1.bf16.msra.mxu0 %v623
      %667 = vmatprep.subr.bf16.mxu0 %v621
      %668 = vmatpush1.bf16.msra.mxu0 %v620
      %669 = vmatprep.subr.bf16.mxu0 %v618
      %670 = vmatpush1.bf16.msra.mxu0 %v617
      %671 = vmatprep.subr.bf16.mxu0 %v615
      %672 = vmatpush1.bf16.msra.mxu0 %v614
      %673 = vmatprep.subr.bf16.mxu0 %v612
      %674 = vmatpush1.bf16.msra.mxu0 %v611
      %675 = vmatprep.subr.bf16.mxu0 0
      %676 = vmatpush2.bf16.msra.mxu0 0
      %677 = vmatprep.subr.bf16.mxu0 0
      %678 = vmatpush2.bf16.msra.mxu0 0
      %679 = vmatprep.subr.bf16.mxu0 0
      %680 = vmatpush2.bf16.msra.mxu0 0
      %681 = vmatprep.subr.bf16.mxu0 0
      %682 = vmatpush2.bf16.msra.mxu0 0
      %683 = vmatprep.subr.bf16.mxu0 0
      %684 = vmatpush2.bf16.msra.mxu0 0
      %685 = vmatprep.subr.bf16.mxu0 0
      %686 = vmatpush2.bf16.msra.mxu0 0
      %687 = vmatprep.subr.bf16.mxu0 0
      %688 = vmatpush2.bf16.msra.mxu0 0
      %689 = vmatprep.subr.bf16.mxu0 0
      %690 = vmatpush2.bf16.msra.mxu0 0
      %691 = vmatprep.mubr.bf16.mxu0 0
      %692 = vmatmul.mubr.bf16.gmra.mxu0 %v481
      %v693 = vpop.f32.mrf.mxu0
      %v694 = vadd.f32 %v519, %v693
      %v695 = vpop.f32.mrf.mxu0
      %v696 = vadd.f32 %v523, %v695
      %v697 = vpop.f32.mrf.mxu0
      %v698 = vpop.f32.mrf.mxu0
      %699 = vdwg.mxu0
      %700 = vmatprep.subr.bf16.mxu0 0
      %701 = vmatpush1.bf16.msra.mxu0 %v634
      %702 = vmatprep.subr.bf16.mxu0 0
      %703 = vmatpush1.bf16.msra.mxu0 %v631
      %704 = vmatprep.subr.bf16.mxu0 0
      %705 = vmatpush1.bf16.msra.mxu0 %v628
      %706 = vmatprep.subr.bf16.mxu0 0
      %707 = vmatpush1.bf16.msra.mxu0 %v625
      %708 = vmatprep.subr.bf16.mxu0 0
      %709 = vmatpush1.bf16.msra.mxu0 %v622
      %710 = vmatprep.subr.bf16.mxu0 0
      %711 = vmatpush1.bf16.msra.mxu0 %v619
      %712 = vmatprep.subr.bf16.mxu0 0
      %713 = vmatpush1.bf16.msra.mxu0 %v616
      %714 = vmatprep.subr.bf16.mxu0 0
      %715 = vmatpush1.bf16.msra.mxu0 %v613
      %716 = vmatprep.subr.bf16.mxu0 0
      %717 = vmatpush2.bf16.msra.mxu0 0
      %718 = vmatprep.subr.bf16.mxu0 0
      %719 = vmatpush2.bf16.msra.mxu0 0
      %720 = vmatprep.subr.bf16.mxu0 0
      %721 = vmatpush2.bf16.msra.mxu0 0
      %722 = vmatprep.subr.bf16.mxu0 0
      %723 = vmatpush2.bf16.msra.mxu0 0
      %724 = vmatprep.subr.bf16.mxu0 0
      %725 = vmatpush2.bf16.msra.mxu0 0
      %726 = vmatprep.subr.bf16.mxu0 0
      %727 = vmatpush2.bf16.msra.mxu0 0
      %728 = vmatprep.subr.bf16.mxu0 0
      %729 = vmatpush2.bf16.msra.mxu0 0
      %730 = vmatprep.subr.bf16.mxu0 0
      %731 = vmatpush2.bf16.msra.mxu0 0
      %732 = vmatprep.mubr.bf16.mxu0 0
      %733 = vmatmul.mubr.bf16.gmra.mxu0 %v481
      %v734 = vpop.f32.mrf.mxu0
      %v735 = vadd.f32 %v527, %v734
      %v736 = vpop.f32.mrf.mxu0
      %v737 = vpop.f32.mrf.mxu0
      %v738 = vpop.f32.mrf.mxu0
      %739 = vdwg.mxu0
      %v740 = vmax.f32 %v694, 0.0
      %v741 = vmax.f32 %v696, 0.0
      %v742 = vmax.f32 %v735, 0.0
      %v743 = vpack.c.bf16 %v740, %v740
      %v744 = vld [vmem:[%s4] sm:$0xf]
      %v745 = vld [vmem:[%s4 + $0x4] sm:$0xf]
      %v746 = vld [vmem:[%s4 + $0x8] sm:$0xf]
      %v747 = vld [vmem:[%s4 + $0xc] sm:$0xf]
      %v748 = vld [vmem:[%s4 + $0x10] sm:$0xf]
      %v749 = vld [vmem:[%s4 + $0x14] sm:$0xf]
      %v750 = vld [vmem:[%s4 + $0x18] sm:$0xf]
      %v751 = vld [vmem:[%s4 + $0x1c] sm:$0xf]
      %v752 = vld [vmem:[%s4 + $0x20] sm:$0xf]
      %v753 = vld [vmem:[%s4 + $0x24] sm:$0xf]
      %v754 = vld [vmem:[%s4 + $0x28] sm:$0xf]
      %v755 = vld [vmem:[%s4 + $0x2c] sm:$0xf]
      %v756 = vld [vmem:[%s4 + $0x30] sm:$0xf]
      %v757 = vld [vmem:[%s4 + $0x34] sm:$0xf]
      %v758 = vld [vmem:[%s4 + $0x38] sm:$0xf]
      %v759 = vld [vmem:[%s4 + $0x3c] sm:$0xf]
      %v760 = vld [vmem:[%s5] sm:$0x1]
      %v762 = vlaneseq
      %v763 = vshrl.u32 %v762, 7
      %v764 = vsub.s32 0, %v763
      %v765 = vrot.slane %v760, %v764
      %v783 = vunpack.c.l.b16 %v744
      %v784 = vunpack.c.l.b16 %v745
      %v785 = vunpack.c.l.b16 %v746
      %v786 = vunpack.c.l.b16 %v747
      %v787 = vunpack.c.l.b16 %v748
      %v788 = vunpack.c.l.b16 %v749
      %v789 = vunpack.c.l.b16 %v750
      %v790 = vunpack.c.l.b16 %v751
      %v791 = vunpack.c.l.b16 %v752
      %v792 = vunpack.c.l.b16 %v753
      %v793 = vunpack.c.l.b16 %v754
      %v794 = vunpack.c.l.b16 %v755
      %v795 = vunpack.c.l.b16 %v756
      %v796 = vunpack.c.l.b16 %v757
      %v797 = vunpack.c.l.b16 %v758
      %v798 = vunpack.c.l.b16 %v759
      %v799 = vpack.c.b16 %v784, %v783
      %v800 = vpack.c.b16 %v786, %v785
      %v801 = vpack.c.b16 %v788, %v787
      %v802 = vpack.c.b16 %v790, %v789
      %v803 = vpack.c.b16 %v792, %v791
      %v804 = vpack.c.b16 %v794, %v793
      %v805 = vpack.c.b16 %v796, %v795
      %v806 = vpack.c.b16 %v798, %v797
      %815 = vmatprep.subr.bf16.mxu0 0
      %816 = vmatpush1.bf16.msra.mxu0 %v806
      %817 = vmatprep.subr.bf16.mxu0 0
      %818 = vmatpush1.bf16.msra.mxu0 %v805
      %819 = vmatprep.subr.bf16.mxu0 0
      %820 = vmatpush1.bf16.msra.mxu0 %v804
      %821 = vmatprep.subr.bf16.mxu0 0
      %822 = vmatpush1.bf16.msra.mxu0 %v803
      %823 = vmatprep.subr.bf16.mxu0 0
      %824 = vmatpush1.bf16.msra.mxu0 %v802
      %825 = vmatprep.subr.bf16.mxu0 0
      %826 = vmatpush1.bf16.msra.mxu0 %v801
      %827 = vmatprep.subr.bf16.mxu0 0
      %828 = vmatpush1.bf16.msra.mxu0 %v800
      %829 = vmatprep.subr.bf16.mxu0 0
      %830 = vmatpush1.bf16.msra.mxu0 %v799
      %831 = vmatprep.subr.bf16.mxu0 0
      %832 = vmatpush2.bf16.msra.mxu0 0
      %833 = vmatprep.subr.bf16.mxu0 0
      %834 = vmatpush2.bf16.msra.mxu0 0
      %835 = vmatprep.subr.bf16.mxu0 0
      %836 = vmatpush2.bf16.msra.mxu0 0
      %837 = vmatprep.subr.bf16.mxu0 0
      %838 = vmatpush2.bf16.msra.mxu0 0
      %839 = vmatprep.subr.bf16.mxu0 0
      %840 = vmatpush2.bf16.msra.mxu0 0
      %841 = vmatprep.subr.bf16.mxu0 0
      %842 = vmatpush2.bf16.msra.mxu0 0
      %843 = vmatprep.subr.bf16.mxu0 0
      %844 = vmatpush2.bf16.msra.mxu0 0
      %845 = vmatprep.subr.bf16.mxu0 0
      %846 = vmatpush2.bf16.msra.mxu0 0
      %847 = vmatprep.mubr.bf16.mxu0 0
      %848 = vmatmul.mubr.bf16.gmra.mxu0 %v743
      %v849 = vpop.f32.mrf.mxu0
      %v850 = vadd.f32 %v765, %v849
      %v851 = vpop.f32.mrf.mxu0
      %v852 = vpop.f32.mrf.mxu0
      %v853 = vpop.f32.mrf.mxu0
      %854 = vdwg.mxu0
      %v855 = vmax.f32 %v850, 0.0
      %v856 = vpack.c.bf16 %v855, %v855
      %v857 = vpack.c.bf16 %v741, %v741
      %v858 = vld [vmem:[%s6] sm:$0xf]
      %v859 = vld [vmem:[%s6 + $0x4] sm:$0xf]
      %v860 = vld [vmem:[%s6 + $0x8] sm:$0xf]
      %v861 = vld [vmem:[%s6 + $0xc] sm:$0xf]
      %v862 = vld [vmem:[%s6 + $0x10] sm:$0xf]
      %v863 = vld [vmem:[%s6 + $0x14] sm:$0xf]
      %v864 = vld [vmem:[%s6 + $0x18] sm:$0xf]
      %v865 = vld [vmem:[%s6 + $0x1c] sm:$0xf]
      %v866 = vld [vmem:[%s6 + $0x20] sm:$0xf]
      %v867 = vld [vmem:[%s6 + $0x24] sm:$0xf]
      %v868 = vld [vmem:[%s6 + $0x28] sm:$0xf]
      %v869 = vld [vmem:[%s6 + $0x2c] sm:$0xf]
      %v870 = vld [vmem:[%s6 + $0x30] sm:$0xf]
      %v871 = vld [vmem:[%s6 + $0x34] sm:$0xf]
      %v872 = vld [vmem:[%s6 + $0x38] sm:$0xf]
      %v873 = vld [vmem:[%s6 + $0x3c] sm:$0xf]
      %v874 = vld [vmem:[%s7] sm:$0x1]
      %v876 = vlaneseq
      %v877 = vshrl.u32 %v876, 7
      %v878 = vsub.s32 0, %v877
      %v879 = vrot.slane %v874, %v878
      %v897 = vunpack.c.l.b16 %v858
      %v898 = vunpack.c.l.b16 %v859
      %v899 = vunpack.c.l.b16 %v860
      %v900 = vunpack.c.l.b16 %v861
      %v901 = vunpack.c.l.b16 %v862
      %v902 = vunpack.c.l.b16 %v863
      %v903 = vunpack.c.l.b16 %v864
      %v904 = vunpack.c.l.b16 %v865
      %v905 = vunpack.c.l.b16 %v866
      %v906 = vunpack.c.l.b16 %v867
      %v907 = vunpack.c.l.b16 %v868
      %v908 = vunpack.c.l.b16 %v869
      %v909 = vunpack.c.l.b16 %v870
      %v910 = vunpack.c.l.b16 %v871
      %v911 = vunpack.c.l.b16 %v872
      %v912 = vunpack.c.l.b16 %v873
      %v913 = vpack.c.b16 %v898, %v897
      %v914 = vpack.c.b16 %v900, %v899
      %v915 = vpack.c.b16 %v902, %v901
      %v916 = vpack.c.b16 %v904, %v903
      %v917 = vpack.c.b16 %v906, %v905
      %v918 = vpack.c.b16 %v908, %v907
      %v919 = vpack.c.b16 %v910, %v909
      %v920 = vpack.c.b16 %v912, %v911
      %929 = vmatprep.subr.bf16.mxu0 0
      %930 = vmatpush1.bf16.msra.mxu0 %v920
      %931 = vmatprep.subr.bf16.mxu0 0
      %932 = vmatpush1.bf16.msra.mxu0 %v919
      %933 = vmatprep.subr.bf16.mxu0 0
      %934 = vmatpush1.bf16.msra.mxu0 %v918
      %935 = vmatprep.subr.bf16.mxu0 0
      %936 = vmatpush1.bf16.msra.mxu0 %v917
      %937 = vmatprep.subr.bf16.mxu0 0
      %938 = vmatpush1.bf16.msra.mxu0 %v916
      %939 = vmatprep.subr.bf16.mxu0 0
      %940 = vmatpush1.bf16.msra.mxu0 %v915
      %941 = vmatprep.subr.bf16.mxu0 0
      %942 = vmatpush1.bf16.msra.mxu0 %v914
      %943 = vmatprep.subr.bf16.mxu0 0
      %944 = vmatpush1.bf16.msra.mxu0 %v913
      %945 = vmatprep.subr.bf16.mxu0 0
      %946 = vmatpush2.bf16.msra.mxu0 0
      %947 = vmatprep.subr.bf16.mxu0 0
      %948 = vmatpush2.bf16.msra.mxu0 0
      %949 = vmatprep.subr.bf16.mxu0 0
      %950 = vmatpush2.bf16.msra.mxu0 0
      %951 = vmatprep.subr.bf16.mxu0 0
      %952 = vmatpush2.bf16.msra.mxu0 0
      %953 = vmatprep.subr.bf16.mxu0 0
      %954 = vmatpush2.bf16.msra.mxu0 0
      %955 = vmatprep.subr.bf16.mxu0 0
      %956 = vmatpush2.bf16.msra.mxu0 0
      %957 = vmatprep.subr.bf16.mxu0 0
      %958 = vmatpush2.bf16.msra.mxu0 0
      %959 = vmatprep.subr.bf16.mxu0 0
      %960 = vmatpush2.bf16.msra.mxu0 0
      %961 = vmatprep.mubr.bf16.mxu0 0
      %962 = vmatmul.mubr.bf16.gmra.mxu0 %v857
      %v963 = vpop.f32.mrf.mxu0
      %v964 = vadd.f32 %v879, %v963
      %v965 = vpop.f32.mrf.mxu0
      %v966 = vpop.f32.mrf.mxu0
      %v967 = vpop.f32.mrf.mxu0
      %968 = vdwg.mxu0
      %v969 = vmax.f32 %v964, 0.0
      %v970 = vpack.c.bf16 %v969, %v969
      %v971 = vpack.c.bf16 %v742, %v742
      %v972 = vld [vmem:[%s8] sm:$0xf]
      %v973 = vld [vmem:[%s8 + $0x4] sm:$0xf]
      %v974 = vld [vmem:[%s8 + $0x8] sm:$0xf]
      %v975 = vld [vmem:[%s8 + $0xc] sm:$0xf]
      %v976 = vld [vmem:[%s8 + $0x10] sm:$0xf]
      %v977 = vld [vmem:[%s8 + $0x14] sm:$0xf]
      %v978 = vld [vmem:[%s8 + $0x18] sm:$0xf]
      %v979 = vld [vmem:[%s8 + $0x1c] sm:$0xf]
      %v980 = vld [vmem:[%s8 + $0x20] sm:$0xf]
      %v981 = vld [vmem:[%s8 + $0x24] sm:$0xf]
      %v982 = vld [vmem:[%s8 + $0x28] sm:$0xf]
      %v983 = vld [vmem:[%s8 + $0x2c] sm:$0xf]
      %v984 = vld [vmem:[%s8 + $0x30] sm:$0xf]
      %v985 = vld [vmem:[%s8 + $0x34] sm:$0xf]
      %v986 = vld [vmem:[%s8 + $0x38] sm:$0xf]
      %v987 = vld [vmem:[%s8 + $0x3c] sm:$0xf]
      %v988 = vld [vmem:[%s9] sm:$0x1]
      %v990 = vlaneseq
      %v991 = vshrl.u32 %v990, 7
      %v992 = vsub.s32 0, %v991
      %v993 = vrot.slane %v988, %v992
      %v1011 = vunpack.c.l.b16 %v972
      %v1012 = vunpack.c.l.b16 %v973
      %v1013 = vunpack.c.l.b16 %v974
      %v1014 = vunpack.c.l.b16 %v975
      %v1015 = vunpack.c.l.b16 %v976
      %v1016 = vunpack.c.l.b16 %v977
      %v1017 = vunpack.c.l.b16 %v978
      %v1018 = vunpack.c.l.b16 %v979
      %v1019 = vunpack.c.l.b16 %v980
      %v1020 = vunpack.c.l.b16 %v981
      %v1021 = vunpack.c.l.b16 %v982
      %v1022 = vunpack.c.l.b16 %v983
      %v1023 = vunpack.c.l.b16 %v984
      %v1024 = vunpack.c.l.b16 %v985
      %v1025 = vunpack.c.l.b16 %v986
      %v1026 = vunpack.c.l.b16 %v987
      %v1027 = vpack.c.b16 %v1012, %v1011
      %v1028 = vpack.c.b16 %v1014, %v1013
      %v1029 = vpack.c.b16 %v1016, %v1015
      %v1030 = vpack.c.b16 %v1018, %v1017
      %v1031 = vpack.c.b16 %v1020, %v1019
      %v1032 = vpack.c.b16 %v1022, %v1021
      %v1033 = vpack.c.b16 %v1024, %v1023
      %v1034 = vpack.c.b16 %v1026, %v1025
      %1043 = vmatprep.subr.bf16.mxu0 0
      %1044 = vmatpush1.bf16.msra.mxu0 %v1034
      %1045 = vmatprep.subr.bf16.mxu0 0
      %1046 = vmatpush1.bf16.msra.mxu0 %v1033
      %1047 = vmatprep.subr.bf16.mxu0 0
      %1048 = vmatpush1.bf16.msra.mxu0 %v1032
      %1049 = vmatprep.subr.bf16.mxu0 0
      %1050 = vmatpush1.bf16.msra.mxu0 %v1031
      %1051 = vmatprep.subr.bf16.mxu0 0
      %1052 = vmatpush1.bf16.msra.mxu0 %v1030
      %1053 = vmatprep.subr.bf16.mxu0 0
      %1054 = vmatpush1.bf16.msra.mxu0 %v1029
      %1055 = vmatprep.subr.bf16.mxu0 0
      %1056 = vmatpush1.bf16.msra.mxu0 %v1028
      %1057 = vmatprep.subr.bf16.mxu0 0
      %1058 = vmatpush1.bf16.msra.mxu0 %v1027
      %1059 = vmatprep.subr.bf16.mxu0 0
      %1060 = vmatpush2.bf16.msra.mxu0 0
      %1061 = vmatprep.subr.bf16.mxu0 0
      %1062 = vmatpush2.bf16.msra.mxu0 0
      %1063 = vmatprep.subr.bf16.mxu0 0
      %1064 = vmatpush2.bf16.msra.mxu0 0
      %1065 = vmatprep.subr.bf16.mxu0 0
      %1066 = vmatpush2.bf16.msra.mxu0 0
      %1067 = vmatprep.subr.bf16.mxu0 0
      %1068 = vmatpush2.bf16.msra.mxu0 0
      %1069 = vmatprep.subr.bf16.mxu0 0
      %1070 = vmatpush2.bf16.msra.mxu0 0
      %1071 = vmatprep.subr.bf16.mxu0 0
      %1072 = vmatpush2.bf16.msra.mxu0 0
      %1073 = vmatprep.subr.bf16.mxu0 0
      %1074 = vmatpush2.bf16.msra.mxu0 0
      %1075 = vmatprep.mubr.bf16.mxu0 0
      %1076 = vmatmul.mubr.bf16.gmra.mxu0 %v971
      %v1077 = vpop.f32.mrf.mxu0
      %v1078 = vadd.f32 %v993, %v1077
      %v1079 = vpop.f32.mrf.mxu0
      %v1080 = vpop.f32.mrf.mxu0
      %v1081 = vpop.f32.mrf.mxu0
      %1082 = vdwg.mxu0
      %v1083 = vmax.f32 %v1078, 0.0
      %v1084 = vpack.c.bf16 %v1083, %v1083
      %v1085 = vld [vmem:[%s10] sm:$0xf]
      %v1086 = vld [vmem:[%s10 + $0x4] sm:$0xf]
      %v1087 = vld [vmem:[%s10 + $0x8] sm:$0xf]
      %v1088 = vld [vmem:[%s10 + $0xc] sm:$0xf]
      %v1089 = vld [vmem:[%s10 + $0x10] sm:$0xf]
      %v1090 = vld [vmem:[%s10 + $0x14] sm:$0xf]
      %v1091 = vld [vmem:[%s10 + $0x18] sm:$0xf]
      %v1092 = vld [vmem:[%s10 + $0x1c] sm:$0xf]
      %v1093 = vld [vmem:[%s10 + $0x20] sm:$0xf]
      %v1094 = vld [vmem:[%s10 + $0x24] sm:$0xf]
      %v1095 = vld [vmem:[%s10 + $0x28] sm:$0xf]
      %v1096 = vld [vmem:[%s10 + $0x2c] sm:$0xf]
      %v1097 = vld [vmem:[%s10 + $0x30] sm:$0xf]
      %v1098 = vld [vmem:[%s10 + $0x34] sm:$0xf]
      %v1099 = vld [vmem:[%s10 + $0x38] sm:$0xf]
      %v1100 = vld [vmem:[%s10 + $0x3c] sm:$0xf]
      %v1101 = vld [vmem:[%s10 + $0x40] sm:$0xf]
      %v1102 = vld [vmem:[%s10 + $0x44] sm:$0xf]
      %v1103 = vld [vmem:[%s10 + $0x48] sm:$0xf]
      %v1104 = vld [vmem:[%s10 + $0x4c] sm:$0xf]
      %v1105 = vld [vmem:[%s10 + $0x50] sm:$0xf]
      %v1106 = vld [vmem:[%s10 + $0x54] sm:$0xf]
      %v1107 = vld [vmem:[%s10 + $0x58] sm:$0xf]
      %v1108 = vld [vmem:[%s10 + $0x5c] sm:$0xf]
      %v1109 = vld [vmem:[%s10 + $0x60] sm:$0xf]
      %v1110 = vld [vmem:[%s10 + $0x64] sm:$0xf]
      %v1111 = vld [vmem:[%s10 + $0x68] sm:$0xf]
      %v1112 = vld [vmem:[%s10 + $0x6c] sm:$0xf]
      %v1113 = vld [vmem:[%s10 + $0x70] sm:$0xf]
      %v1114 = vld [vmem:[%s10 + $0x74] sm:$0xf]
      %v1115 = vld [vmem:[%s10 + $0x78] sm:$0xf]
      %v1116 = vld [vmem:[%s10 + $0x7c] sm:$0xf]
      %v1117 = vld [vmem:[%s10 + $0x80] sm:$0xf]
      %v1118 = vld [vmem:[%s10 + $0x84] sm:$0xf]
      %v1119 = vld [vmem:[%s10 + $0x88] sm:$0xf]
      %v1120 = vld [vmem:[%s10 + $0x8c] sm:$0xf]
      %v1121 = vld [vmem:[%s10 + $0x90] sm:$0xf]
      %v1122 = vld [vmem:[%s10 + $0x94] sm:$0xf]
      %v1123 = vld [vmem:[%s10 + $0x98] sm:$0xf]
      %v1124 = vld [vmem:[%s10 + $0x9c] sm:$0xf]
      %v1125 = vld [vmem:[%s10 + $0xa0] sm:$0xf]
      %v1126 = vld [vmem:[%s10 + $0xa4] sm:$0xf]
      %v1127 = vld [vmem:[%s10 + $0xa8] sm:$0xf]
      %v1128 = vld [vmem:[%s10 + $0xac] sm:$0xf]
      %v1129 = vld [vmem:[%s10 + $0xb0] sm:$0xf]
      %v1130 = vld [vmem:[%s10 + $0xb4] sm:$0xf]
      %v1131 = vld [vmem:[%s10 + $0xb8] sm:$0xf]
      %v1132 = vld [vmem:[%s10 + $0xbc] sm:$0xf]
      %v1133 = vld [vmem:[%s10 + $0xc0] sm:$0xf]
      %v1134 = vld [vmem:[%s10 + $0xc4] sm:$0xf]
      %v1135 = vld [vmem:[%s10 + $0xc8] sm:$0xf]
      %v1136 = vld [vmem:[%s10 + $0xcc] sm:$0xf]
      %v1137 = vld [vmem:[%s10 + $0xd0] sm:$0xf]
      %v1138 = vld [vmem:[%s10 + $0xd4] sm:$0xf]
      %v1139 = vld [vmem:[%s10 + $0xd8] sm:$0xf]
      %v1140 = vld [vmem:[%s10 + $0xdc] sm:$0xf]
      %v1141 = vld [vmem:[%s10 + $0xe0] sm:$0xf]
      %v1142 = vld [vmem:[%s10 + $0xe4] sm:$0xf]
      %v1143 = vld [vmem:[%s10 + $0xe8] sm:$0xf]
      %v1144 = vld [vmem:[%s10 + $0xec] sm:$0xf]
      %v1145 = vld [vmem:[%s10 + $0xf0] sm:$0xf]
      %v1146 = vld [vmem:[%s10 + $0xf4] sm:$0xf]
      %v1147 = vld [vmem:[%s10 + $0xf8] sm:$0xf]
      %v1148 = vld [vmem:[%s10 + $0xfc] sm:$0xf]
      %v1149 = vld [vmem:[%s11] sm:$0x1]
      %v1151 = vlaneseq
      %v1152 = vshrl.u32 %v1151, 7
      %v1153 = vsub.s32 0, %v1152
      %v1154 = vrot.slane %v1149, %v1153
      %v1220 = vunpack.c.l.b16 %v1085
      %v1221 = vunpack.c.l.b16 %v1086
      %v1222 = vunpack.c.l.b16 %v1087
      %v1223 = vunpack.c.l.b16 %v1088
      %v1224 = vunpack.c.l.b16 %v1089
      %v1225 = vunpack.c.l.b16 %v1090
      %v1226 = vunpack.c.l.b16 %v1091
      %v1227 = vunpack.c.l.b16 %v1092
      %v1228 = vunpack.c.l.b16 %v1093
      %v1229 = vunpack.c.l.b16 %v1094
      %v1230 = vunpack.c.l.b16 %v1095
      %v1231 = vunpack.c.l.b16 %v1096
      %v1232 = vunpack.c.l.b16 %v1097
      %v1233 = vunpack.c.l.b16 %v1098
      %v1234 = vunpack.c.l.b16 %v1099
      %v1235 = vunpack.c.l.b16 %v1100
      %v1236 = vunpack.c.l.b16 %v1101
      %v1237 = vunpack.c.l.b16 %v1102
      %v1238 = vunpack.c.l.b16 %v1103
      %v1239 = vunpack.c.l.b16 %v1104
      %v1240 = vunpack.c.l.b16 %v1105
      %v1241 = vunpack.c.l.b16 %v1106
      %v1242 = vunpack.c.l.b16 %v1107
      %v1243 = vunpack.c.l.b16 %v1108
      %v1244 = vunpack.c.l.b16 %v1109
      %v1245 = vunpack.c.l.b16 %v1110
      %v1246 = vunpack.c.l.b16 %v1111
      %v1247 = vunpack.c.l.b16 %v1112
      %v1248 = vunpack.c.l.b16 %v1113
      %v1249 = vunpack.c.l.b16 %v1114
      %v1250 = vunpack.c.l.b16 %v1115
      %v1251 = vunpack.c.l.b16 %v1116
      %v1252 = vunpack.c.l.b16 %v1117
      %v1253 = vunpack.c.l.b16 %v1118
      %v1254 = vunpack.c.l.b16 %v1119
      %v1255 = vunpack.c.l.b16 %v1120
      %v1256 = vunpack.c.l.b16 %v1121
      %v1257 = vunpack.c.l.b16 %v1122
      %v1258 = vunpack.c.l.b16 %v1123
      %v1259 = vunpack.c.l.b16 %v1124
      %v1260 = vunpack.c.l.b16 %v1125
      %v1261 = vunpack.c.l.b16 %v1126
      %v1262 = vunpack.c.l.b16 %v1127
      %v1263 = vunpack.c.l.b16 %v1128
      %v1264 = vunpack.c.l.b16 %v1129
      %v1265 = vunpack.c.l.b16 %v1130
      %v1266 = vunpack.c.l.b16 %v1131
      %v1267 = vunpack.c.l.b16 %v1132
      %v1268 = vunpack.c.l.b16 %v1133
      %v1269 = vunpack.c.l.b16 %v1134
      %v1270 = vunpack.c.l.b16 %v1135
      %v1271 = vunpack.c.l.b16 %v1136
      %v1272 = vunpack.c.l.b16 %v1137
      %v1273 = vunpack.c.l.b16 %v1138
      %v1274 = vunpack.c.l.b16 %v1139
      %v1275 = vunpack.c.l.b16 %v1140
      %v1276 = vunpack.c.l.b16 %v1141
      %v1277 = vunpack.c.l.b16 %v1142
      %v1278 = vunpack.c.l.b16 %v1143
      %v1279 = vunpack.c.l.b16 %v1144
      %v1280 = vunpack.c.l.b16 %v1145
      %v1281 = vunpack.c.l.b16 %v1146
      %v1282 = vunpack.c.l.b16 %v1147
      %v1283 = vunpack.c.l.b16 %v1148
      %v1284 = vpack.c.b16 %v1221, %v1220
      %v1285 = vpack.c.b16 %v1223, %v1222
      %v1286 = vpack.c.b16 %v1225, %v1224
      %v1287 = vpack.c.b16 %v1227, %v1226
      %v1288 = vpack.c.b16 %v1229, %v1228
      %v1289 = vpack.c.b16 %v1231, %v1230
      %v1290 = vpack.c.b16 %v1233, %v1232
      %v1291 = vpack.c.b16 %v1235, %v1234
      %v1292 = vpack.c.b16 %v1237, %v1236
      %v1293 = vpack.c.b16 %v1239, %v1238
      %v1294 = vpack.c.b16 %v1241, %v1240
      %v1295 = vpack.c.b16 %v1243, %v1242
      %v1296 = vpack.c.b16 %v1245, %v1244
      %v1297 = vpack.c.b16 %v1247, %v1246
      %v1298 = vpack.c.b16 %v1249, %v1248
      %v1299 = vpack.c.b16 %v1251, %v1250
      %v1300 = vpack.c.b16 %v1253, %v1252
      %v1301 = vpack.c.b16 %v1255, %v1254
      %v1302 = vpack.c.b16 %v1257, %v1256
      %v1303 = vpack.c.b16 %v1259, %v1258
      %v1304 = vpack.c.b16 %v1261, %v1260
      %v1305 = vpack.c.b16 %v1263, %v1262
      %v1306 = vpack.c.b16 %v1265, %v1264
      %v1307 = vpack.c.b16 %v1267, %v1266
      %v1308 = vpack.c.b16 %v1269, %v1268
      %v1309 = vpack.c.b16 %v1271, %v1270
      %v1310 = vpack.c.b16 %v1273, %v1272
      %v1311 = vpack.c.b16 %v1275, %v1274
      %v1312 = vpack.c.b16 %v1277, %v1276
      %v1313 = vpack.c.b16 %v1279, %v1278
      %v1314 = vpack.c.b16 %v1281, %v1280
      %v1315 = vpack.c.b16 %v1283, %v1282
      %1348 = vmatprep.subr.bf16.mxu0 0
      %1349 = vmatpush1.bf16.msra.mxu0 %v1291
      %1350 = vmatprep.subr.bf16.mxu0 0
      %1351 = vmatpush1.bf16.msra.mxu0 %v1290
      %1352 = vmatprep.subr.bf16.mxu0 0
      %1353 = vmatpush1.bf16.msra.mxu0 %v1289
      %1354 = vmatprep.subr.bf16.mxu0 0
      %1355 = vmatpush1.bf16.msra.mxu0 %v1288
      %1356 = vmatprep.subr.bf16.mxu0 0
      %1357 = vmatpush1.bf16.msra.mxu0 %v1287
      %1358 = vmatprep.subr.bf16.mxu0 0
      %1359 = vmatpush1.bf16.msra.mxu0 %v1286
      %1360 = vmatprep.subr.bf16.mxu0 0
      %1361 = vmatpush1.bf16.msra.mxu0 %v1285
      %1362 = vmatprep.subr.bf16.mxu0 0
      %1363 = vmatpush1.bf16.msra.mxu0 %v1284
      %1364 = vmatprep.subr.bf16.mxu0 0
      %1365 = vmatpush2.bf16.msra.mxu0 %v1299
      %1366 = vmatprep.subr.bf16.mxu0 0
      %1367 = vmatpush2.bf16.msra.mxu0 %v1298
      %1368 = vmatprep.subr.bf16.mxu0 0
      %1369 = vmatpush2.bf16.msra.mxu0 %v1297
      %1370 = vmatprep.subr.bf16.mxu0 0
      %1371 = vmatpush2.bf16.msra.mxu0 %v1296
      %1372 = vmatprep.subr.bf16.mxu0 0
      %1373 = vmatpush2.bf16.msra.mxu0 %v1295
      %1374 = vmatprep.subr.bf16.mxu0 0
      %1375 = vmatpush2.bf16.msra.mxu0 %v1294
      %1376 = vmatprep.subr.bf16.mxu0 0
      %1377 = vmatpush2.bf16.msra.mxu0 %v1293
      %1378 = vmatprep.subr.bf16.mxu0 0
      %1379 = vmatpush2.bf16.msra.mxu0 %v1292
      %1380 = vmatprep.mubr.bf16.mxu0 %v856
      %1381 = vmatmul.mubr.bf16.gmra.mxu0 %v481
      %v1382 = vpop.f32.mrf.mxu0
      %v1383 = vadd.f32 %v1154, %v1382
      %v1384 = vpop.f32.mrf.mxu0
      %v1385 = vpop.f32.mrf.mxu0
      %v1386 = vpop.f32.mrf.mxu0
      %1387 = vdwg.mxu0
      %1388 = vmatprep.subr.bf16.mxu0 0
      %1389 = vmatpush1.bf16.msra.mxu0 %v1307
      %1390 = vmatprep.subr.bf16.mxu0 0
      %1391 = vmatpush1.bf16.msra.mxu0 %v1306
      %1392 = vmatprep.subr.bf16.mxu0 0
      %1393 = vmatpush1.bf16.msra.mxu0 %v1305
      %1394 = vmatprep.subr.bf16.mxu0 0
      %1395 = vmatpush1.bf16.msra.mxu0 %v1304
      %1396 = vmatprep.subr.bf16.mxu0 0
      %1397 = vmatpush1.bf16.msra.mxu0 %v1303
      %1398 = vmatprep.subr.bf16.mxu0 0
      %1399 = vmatpush1.bf16.msra.mxu0 %v1302
      %1400 = vmatprep.subr.bf16.mxu0 0
      %1401 = vmatpush1.bf16.msra.mxu0 %v1301
      %1402 = vmatprep.subr.bf16.mxu0 0
      %1403 = vmatpush1.bf16.msra.mxu0 %v1300
      %1404 = vmatprep.subr.bf16.mxu0 0
      %1405 = vmatpush2.bf16.msra.mxu0 %v1315
      %1406 = vmatprep.subr.bf16.mxu0 0
      %1407 = vmatpush2.bf16.msra.mxu0 %v1314
      %1408 = vmatprep.subr.bf16.mxu0 0
      %1409 = vmatpush2.bf16.msra.mxu0 %v1313
      %1410 = vmatprep.subr.bf16.mxu0 0
      %1411 = vmatpush2.bf16.msra.mxu0 %v1312
      %1412 = vmatprep.subr.bf16.mxu0 0
      %1413 = vmatpush2.bf16.msra.mxu0 %v1311
      %1414 = vmatprep.subr.bf16.mxu0 0
      %1415 = vmatpush2.bf16.msra.mxu0 %v1310
      %1416 = vmatprep.subr.bf16.mxu0 0
      %1417 = vmatpush2.bf16.msra.mxu0 %v1309
      %1418 = vmatprep.subr.bf16.mxu0 0
      %1419 = vmatpush2.bf16.msra.mxu0 %v1308
      %1420 = vmatprep.mubr.bf16.mxu0 %v1084
      %1421 = vmatmul.mubr.bf16.gmra.mxu0 %v970
      %v1422 = vpop.f32.mrf.mxu0
      %v1423 = vadd.f32 %v1383, %v1422
      %v1424 = vpop.f32.mrf.mxu0
      %v1425 = vpop.f32.mrf.mxu0
      %v1426 = vpop.f32.mrf.mxu0
      %1427 = vdwg.mxu0
      %v1428 = vld [vmem:[%s12] sm:$0x1]
      %vm1429 = vcmp.gt.f32.partialorder %v1428, 0.0
      %v1430 = vxor.u32 %v1423, 2147483648
      %v1431 = vmul.f32 %v1430, 1.442695
      %v1432 = vpow.pop %v1431
      %v1433 = vadd.f32 %v1432, 1.0
      %v1434 = vrcp.pop %v1433
      %v1435 = vmul.f32 1.0, %v1434
      %v1436 = vsel %vm1429, 1, 0
      %v1437 = vlaneseq
      %v1438 = vshrl.u32 %v1437, 7
      %v1439 = vsub.s32 0, %v1438
      %v1440 = vrot.slane %v1436, %v1439
      %vm1441 = vcmp.eq.s32.totalorder %v1440, 1
      %v1442 = vsel %vm1441, %v1435, %v1423
      %1443 = vst [vmem:[%s469] sm:$0xf] %v1442
      %p1444 = scmp.lt.s32.totalorder %s28, 1
      %s1445 = scalar_select %p1444, %s28, 1
      %p1446 = scmp.lt.s32.totalorder %s29, 0
      %s1447 = scalar_select %p1446, %s29, 0
      %s1448 = sadd.s32 %s1447, %s1445
      %s1449 = smul.addr %s1448, 4
      %s1450 = scalar_lea.vmem %s13, %s1449
      // Predicated region
      $region73: #{_lambda_.5} parent=71 // pred_check
        %p1451 = pneg %p339
      $region74: #{_lambda_.5} parent=71 // pred_check_branch
        %1453 = sbr.rel (%p1451) target = $region76
      $region75: #{_lambda_.5} parent=71 // pred_region
        _
      $region76: #{_lambda_.5} parent=71 // pred_fallthru
        _
    $region72: #{_lambda_.5} parent=5 // pred_fallthru
      _
    %p1454 = scmp.le.s32.totalorder 2, %s19
    // Predicated region
    $region77: #{_lambda_.5} parent=5 // pred_check
      %p1455 = pneg %p1454
    $region78: #{_lambda_.5} parent=5 // pred_check_branch
      %1457 = sbr.rel (%p1455) target = $region80
    $region79: #{_lambda_.5} parent=5 // pred_region
      %s1458 = ssub.s32 %s19, 2
      // Predicated region
      $region81: #{_lambda_.5} parent=79 // pred_check
        %p1459 = pneg %p345
      $region82: #{_lambda_.5} parent=79 // pred_check_branch
        %1461 = sbr.rel (%p1459) target = $region84
      $region83: #{_lambda_.5} parent=79 // pred_region
        %p1462 = scmp.lt.s32.totalorder %s30, 1
        %s1463 = scalar_select %p1462, %s30, 1
        %p1464 = scmp.lt.s32.totalorder %s31, 0
        %s1465 = scalar_select %p1464, %s31, 0
        %s1466 = sadd.s32 %s1465, %s1463
        %s1467 = smul.addr %s1466, 4
        %s1468 = scalar_lea.vmem %s13, %s1467
      $region84: #{_lambda_.5} parent=79 // pred_fallthru
        _
    $region80: #{_lambda_.5} parent=5 // pred_fallthru
      _
  $region6: #{_lambda_.5} parent=0 // loop_footer
    %s23 = sadd.s32 1, %s19
  $region7: #{_lambda_.5} parent=0 // loop_footer_branch
    %18 = sbr.rel target = $region3
  $region8: #{_lambda_.5} parent=0 // loop_exit
    _

</llo_original>
